<compile_context>
chip_gen: v6e
topology: v6e:2x2x1
jax: 0.10.0
libtpu: 0.0.40
codegen_flags: <defaults>
</compile_context>

<pallas_src>
import functools

import numpy as np

import jax
import jax.numpy as jnp
from jax.experimental import pallas as pl
from jax.experimental.pallas import tpu as pltpu


_VMEM_LIMIT = 64 * 1024 * 1024       # explicit scoped-VMEM cap (v5e default 16 MiB)
_ACC_BUDGET = 4 * 1024 * 1024        # f32 accumulator bytes per grid step
_X_BUDGET = 4 * 1024 * 1024          # bytes per bf16 activation-tile copy
_POOL_BUDGET = 8 * 1024 * 1024       # maxpool input block bytes


# ----------------------------------------------------------------------------
# Pallas kernels
# ----------------------------------------------------------------------------
def _conv1x1_bn_leaky_kernel(x_ref, w_ref, s_ref, b_ref, o_ref):
    # x_ref: (1, rows, C) bf16 ; w_ref: (1, C, tn) bf16
    # s_ref/b_ref: (1, tn) f32 fused eval-mode BN scale / bias ; o_ref: (1, rows, tn)
    acc = jnp.dot(x_ref[0], w_ref[0], preferred_element_type=jnp.float32)
    y = acc * s_ref[...] + b_ref[...]
    y = jnp.maximum(y, 0.1 * y)                    # LeakyReLU(0.1)
    o_ref[0] = y.astype(o_ref.dtype)


def _conv3x3_bn_leaky_kernel(x_ref, w_ref, m_ref, s_ref, b_ref, o_ref, *, W, rows):
    # x_ref: (1, Lt, C) bf16  flattened H-padded rows of this tile (+ dx slack)
    # w_ref: (9, C, tn) bf16  per-tap weight slices
    # m_ref: (2, Lt, 1) bf16  column-validity masks for the dx=0 / dx=2 taps
    # s_ref/b_ref: (1, tn) f32 ; o_ref: (1, rows, tn) bf16
    tn = w_ref.shape[2]
    x0 = x_ref[0]                                  # (Lt, C)
    xl = x0 * m_ref[0]                             # zero wrapped left-border reads
    xr = x0 * m_ref[1]                             # zero wrapped right-border reads
    srcs = (xl, x0, xr)
    acc = jnp.zeros((rows, tn), jnp.float32)
    for dy in range(3):
        for dx in range(3):
            off = dy * W + dx                      # static contiguous row offset
            acc = acc + jnp.dot(srcs[dx][off:off + rows, :],
                                w_ref[dy * 3 + dx],
                                preferred_element_type=jnp.float32)
    y = acc * s_ref[...] + b_ref[...]              # fused BN (eval mode)
    y = jnp.maximum(y, 0.1 * y)                    # LeakyReLU(0.1)
    o_ref[0] = y.astype(o_ref.dtype)


def _maxpool2x2_kernel(x_ref, o_ref):
    # x_ref: (tr, 2, Wo, 2C) ; o_ref: (tr, Wo, C)
    C = o_ref.shape[-1]
    a = x_ref[:, 0, :, :C]
    b = x_ref[:, 0, :, C:]
    c = x_ref[:, 1, :, :C]
    d = x_ref[:, 1, :, C:]
    o_ref[...] = jnp.maximum(jnp.maximum(a, b), jnp.maximum(c, d))


# ----------------------------------------------------------------------------
# Wrappers
# ----------------------------------------------------------------------------
def _largest_divisor_leq(n, cap):
    cap = max(1, min(n, cap))
    for d in range(cap, 0, -1):
        if n % d == 0:
            return d
    return 1


def _pick_th(H, W, cap):
    """Largest divisor of H <= cap, preferring th*W % 8 == 0 (sublane aligned)."""
    cap = max(1, min(H, cap))
    best = None
    for d in range(cap, 0, -1):
        if H % d:
            continue
        if best is None:
            best = d
        if (d * W) % 8 == 0:
            return d
    return best if best is not None else 1


def conv_bn_leaky(x, w_taps, scale, bias, k):
    """x: (N, H, W, C); w_taps: (k*k, C, O) bf16; scale/bias: (1, O) f32."""
    assert k in (1, 3)
    N, H, W, C = x.shape
    O = w_taps.shape[-1]
    p = k // 2
    x = x.astype(jnp.bfloat16)

    tn = O if O <= 256 else 256
    assert O % tn == 0
    n_o = O // tn

    # Row tiling: th output image-rows (rows = th*W flattened positions) / block.
    rows_cap = max(1, min(_ACC_BUDGET // (tn * 4), _X_BUDGET // (C * 2)))
    th = _pick_th(H, W, max(1, rows_cap // max(W, 1)))
    n_h = H // th
    T = N * n_h
    rows = th * W
    Lt = (th + 2 * p) * W + 2 * p          # tile rows incl. H halo + dx slack

    if p == 0:
        xt = x.reshape(T, Lt, C)
    else:
        # ONE fused zero-pad per layer: p image rows (p*W) of H halo plus p
        # elements of dx slack on each end of the per-image flattened stream.
        xf = jnp.pad(x.reshape(N, H * W, C),
                     ((0, 0), (p * W + p, p * W + p), (0, 0)))
        if n_h == 1:
            xt = xf.reshape(N, Lt, C)      # pure view: no gather, no duplication
        else:
            # Fallback for very large images: overlapping row windows (+halo).
            win = (jnp.arange(n_h) * rows)[:, None] + jnp.arange(Lt)[None, :]
            xt = xf[:, win].reshape(T, Lt, C)

    grid = (T, n_o)                        # big axis leading (megacore sharding)
    common_specs = [
        pl.BlockSpec((1, tn), lambda i, j: (0, j)),
        pl.BlockSpec((1, tn), lambda i, j: (0, j)),
    ]
    out_spec = pl.BlockSpec((1, rows, tn), lambda i, j: (i, 0, j))
    cparams = pltpu.CompilerParams(
        dimension_semantics=("parallel", "parallel"),
        vmem_limit_bytes=_VMEM_LIMIT)

    if k == 1:
        out = pl.pallas_call(
            _conv1x1_bn_leaky_kernel,
            out_shape=jax.ShapeDtypeStruct((T, rows, O), jnp.bfloat16),
            grid=grid,
            in_specs=[pl.BlockSpec((1, Lt, C), lambda i, j: (i, 0, 0)),
                      pl.BlockSpec((1, C, tn), lambda i, j: (0, 0, j))]
                     + common_specs,
            out_specs=out_spec,
            compiler_params=cparams,
        )(xt, w_taps, scale, bias)
    else:
        # Column-validity masks as a function of the tile index (identical for
        # every tile): only the two shifted taps (dx=0, dx=2) need them.
        j_idx = np.arange(Lt)
        mask_np = np.zeros((2, Lt, 1), np.float32)
        for mi, dx in enumerate((0, 2)):
            colj = (j_idx - dx) % W
            mask_np[mi, :, 0] = ((colj >= (p - dx)) & (colj < (W + p - dx)))
        mask = jnp.asarray(mask_np, dtype=jnp.bfloat16)
        kern = functools.partial(_conv3x3_bn_leaky_kernel, W=W, rows=rows)
        out = pl.pallas_call(
            kern,
            out_shape=jax.ShapeDtypeStruct((T, rows, O), jnp.bfloat16),
            grid=grid,
            in_specs=[pl.BlockSpec((1, Lt, C), lambda i, j: (i, 0, 0)),
                      pl.BlockSpec((k * k, C, tn), lambda i, j: (0, 0, j)),
                      pl.BlockSpec((2, Lt, 1), lambda i, j: (0, 0, 0))]
                     + common_specs,
            out_specs=out_spec,
            compiler_params=cparams,
        )(xt, w_taps, mask, scale, bias)
    return out.reshape(N, H, W, O)


def maxpool2x2(x):
    """x: (N, H, W, C) with even H, W -> (N, H//2, W//2, C)."""
    N, H, W, C = x.shape
    assert H % 2 == 0 and W % 2 == 0
    Ho, Wo = H // 2, W // 2
    R = N * Ho
    xv = x.reshape(R, 2, Wo, 2 * C)        # free, contiguous view
    bytes_per_row = 2 * Wo * 2 * C * x.dtype.itemsize
    cap = max(1, _POOL_BUDGET // max(bytes_per_row, 1))
    tr = _largest_divisor_leq(R, cap)
    out = pl.pallas_call(
        _maxpool2x2_kernel,
        out_shape=jax.ShapeDtypeStruct((R, Wo, C), x.dtype),
        grid=(R // tr,),
        in_specs=[pl.BlockSpec((tr, 2, Wo, 2 * C), lambda i: (i, 0, 0, 0))],
        out_specs=pl.BlockSpec((tr, Wo, C), lambda i: (i, 0, 0)),
        compiler_params=pltpu.CompilerParams(
            dimension_semantics=("parallel",),
            vmem_limit_bytes=_VMEM_LIMIT),
    )(xv)
    return out.reshape(N, Ho, Wo, C)


def _extract_patches_3x3(x):
    """(N, H, W, C) -> (N, H, W, 9*C) zero-padded 3x3 patches, tap-major."""
    N, H, W, C = x.shape
    xp = jnp.pad(x, ((0, 0), (1, 1), (1, 1), (0, 0)))
    cols = [xp[:, dy:dy + H, dx:dx + W, :] for dy in range(3) for dx in range(3)]
    return jnp.concatenate(cols, axis=-1)


def _apply_conv(x, w_taps, scale, bias, cin, cout, k):
    if k == 3 and cin == 3:
        # Stem special case: fold all nine taps into the contraction (K = 27)
        # via patch extraction; the conv becomes a single lane-denser matmul.
        x = _extract_patches_3x3(x)
        return conv_bn_leaky(x, w_taps.reshape(1, k * k * cin, cout),
                             scale, bias, 1)
    return conv_bn_leaky(x, w_taps, scale, bias, k)


# ----------------------------------------------------------------------------
# DarkNet19 structure (matching the PyTorch module)
# ----------------------------------------------------------------------------
def _make_layer_cfg(inp, oup, blocks):
    cfg = [("pool",), ("conv", inp, oup, 3)]
    for _ in range(blocks):
        cfg += [("conv", oup, inp, 1), ("conv", inp, oup, 3)]
    return cfg


STAGES = [
    [("conv", 3, 32, 3), ("pool",), ("conv", 32, 64, 3)],   # Conv1
    _make_layer_cfg(64, 128, 1),                            # Conv2
    _make_layer_cfg(128, 256, 1),                           # Conv3
    _make_layer_cfg(256, 512, 2),                           # Conv4
    _make_layer_cfg(512, 1024, 2),                          # Conv5
]


def init_params(key):
    """Synthetic params: per Conv2dBatchLeaky -> (w_taps bf16, scale f32, bias f32)."""
    params = []
    eps = 1e-5
    for stage in STAGES:
        stage_params = []
        for op in stage:
            if op[0] != "conv":
                continue
            _, cin, cout, k = op
            key, kw, kg, kb, km, kv = jax.random.split(key, 6)
            fan_in = cin * k * k
            w = jax.random.normal(kw, (cout, cin, k, k), jnp.float32) / jnp.sqrt(
                jnp.float32(fan_in))
            gamma = 0.5 + jax.random.uniform(kg, (cout,), jnp.float32)
            beta = 0.1 * jax.random.normal(kb, (cout,), jnp.float32)
            r_mean = 0.1 * jax.random.normal(km, (cout,), jnp.float32)
            r_var = 0.5 + jax.random.uniform(kv, (cout,), jnp.float32)
            scale = gamma / jnp.sqrt(r_var + eps)   # fused eval-mode BN
            bias = beta - r_mean * scale
            w_taps = jnp.transpose(w, (2, 3, 1, 0)).reshape(k * k, cin, cout)
            stage_params.append((w_taps.astype(jnp.bfloat16),
                                 scale.reshape(1, cout),
                                 bias.reshape(1, cout)))
        params.append(stage_params)
    return params


@jax.jit
def darknet19_forward(x_nchw, params):
    """Returns (stage5, stage4, stage3) in NCHW, matching the PyTorch module."""
    x = jnp.transpose(x_nchw, (0, 2, 3, 1)).astype(jnp.bfloat16)  # NCHW -> NHWC
    stage_outs = []
    for stage_cfg, stage_params in zip(STAGES, params):
        conv_idx = 0
        for op in stage_cfg:
            if op[0] == "pool":
                x = maxpool2x2(x)
            else:
                _, cin, cout, k = op
                w_taps, scale, bias = stage_params[conv_idx]
                conv_idx += 1
                x = _apply_conv(x, w_taps, scale, bias, cin, cout, k)
        stage_outs.append(x)
    to_nchw = lambda t: jnp.transpose(t, (0, 3, 1, 2)).astype(jnp.float32)
    return (to_nchw(stage_outs[4]), to_nchw(stage_outs[3]), to_nchw(stage_outs[2]))


# ----------------------------------------------------------------------------
# Pure-JAX reference (for lightweight self-checks)
# ----------------------------------------------------------------------------
def _conv_bn_leaky_ref(x, w_taps, scale, bias, k):
    N, H, W, C = x.shape
    O = w_taps.shape[-1]
    p = k // 2
    w4 = w_taps.astype(jnp.float32).reshape(k, k, C, O)    # HWIO
    y = jax.lax.conv_general_dilated(
        x.astype(jnp.float32), w4, window_strides=(1, 1),
        padding=[(p, p), (p, p)],
        dimension_numbers=("NHWC", "HWIO", "NHWC"))
    y = y * scale.reshape(1, 1, 1, O) + bias.reshape(1, 1, 1, O)
    return jnp.where(y >= 0.0, y, 0.1 * y)


if __name__ == "__main__":
    key = jax.random.PRNGKey(0)
    key, kx = jax.random.split(key)
    # DarkNet19 has 5 stride-2 pools, so spatial must be divisible by 32;
    # input channels fixed at 3 by the first conv.
    x = jax.random.normal(kx, (2, 3, 32, 32), jnp.float32)  # NCHW like PyTorch
    params = init_params(key)

    # --- Self-check 1: fused 3x3 conv block vs pure-JAX reference. ----------
    kc = jax.random.PRNGKey(1)
    k1, k2, k3, k4 = jax.random.split(kc, 4)
    x_chk = jax.random.normal(k1, (2, 16, 16, 32), jnp.float32).astype(jnp.bfloat16)
    w_chk = (jax.random.normal(k2, (9, 32, 64), jnp.float32) / 17.0).astype(jnp.bfloat16)
    s_chk = 0.5 + jax.random.uniform(k3, (1, 64), jnp.float32)
    b_chk = 0.1 * jax.random.normal(k4, (1, 64), jnp.float32)
    got = conv_bn_leaky(x_chk, w_chk, s_chk, b_chk, 3).astype(jnp.float32)
    ref = _conv_bn_leaky_ref(x_chk, w_chk, s_chk, b_chk, 3)
    rel_err = float(jnp.max(jnp.abs(got - ref)) / (jnp.max(jnp.abs(ref)) + 1e-6))
    assert rel_err < 2e-2, f"conv3x3 mismatch: rel_err={rel_err}"

    # --- Self-check 2: stem (Cin=3) patch-folded path vs reference. ---------
    ks1, ks2, ks3, ks4 = jax.random.split(jax.random.PRNGKey(2), 4)
    x_stem = jax.random.normal(ks1, (2, 16, 16, 3), jnp.float32).astype(jnp.bfloat16)
    w_stem = (jax.random.normal(ks2, (9, 3, 32), jnp.float32) / 5.0).astype(jnp.bfloat16)
    s_stem = 0.5 + jax.random.uniform(ks3, (1, 32), jnp.float32)
    b_stem = 0.1 * jax.random.normal(ks4, (1, 32), jnp.float32)
    got_s = _apply_conv(x_stem, w_stem, s_stem, b_stem, 3, 32, 3).astype(jnp.float32)
    ref_s = _conv_bn_leaky_ref(x_stem, w_stem, s_stem, b_stem, 3)
    rel_err_s = float(jnp.max(jnp.abs(got_s - ref_s)) / (jnp.max(jnp.abs(ref_s)) + 1e-6))
    assert rel_err_s < 2e-2, f"stem conv mismatch: rel_err={rel_err_s}"

    # --- Self-check 3: maxpool. ---------------------------------------------
    pool_got = maxpool2x2(x_chk)
    pool_ref = x_chk.reshape(2, 8, 2, 8, 2, 32).max(axis=(2, 4))
    assert bool(jnp.all(pool_got == pool_ref)), "maxpool mismatch"

    # --- Full forward. -------------------------------------------------------
    stage5, stage4, stage3 = darknet19_forward(x, params)
    jax.block_until_ready((stage5, stage4, stage3))

    assert stage5.shape == (2, 1024, 1, 1), stage5.shape
    assert stage4.shape == (2, 512, 2, 2), stage4.shape
    assert stage3.shape == (2, 256, 4, 4), stage3.shape
    print("KERNEL_OK")
</pallas_src>

<mosaic_0001>
module attributes {stable_mosaic.version = 11 : i64} {
  func.func @_conv3x3_bn_leaky_kernel(%arg0: i32, %arg1: i32, %arg2: memref<1x290x32xbf16, #tpu.memory_space<vmem>>, %arg3: memref<9x32x64xbf16, #tpu.memory_space<vmem>>, %arg4: memref<2x290x1xbf16, #tpu.memory_space<vmem>>, %arg5: memref<1x64xf32, #tpu.memory_space<vmem>>, %arg6: memref<1x64xf32, #tpu.memory_space<vmem>>, %arg7: memref<1x256x64xbf16, #tpu.memory_space<vmem>>) attributes {dimension_semantics = [#tpu.dimension_semantics<parallel>, #tpu.dimension_semantics<parallel>], iteration_bounds = array<i64: 2, 1>, scalar_prefetch = 0 : i64, scratch_operands = 0 : i64, tpu.core_type = #tpu.core_type<tc>, window_params = [{transform_indices = @transform_0, window_bounds = array<i64: 1, 290, 32>}, {transform_indices = @transform_1, window_bounds = array<i64: 9, 32, 64>}, {pipeline_mode = #tpu.pipeline_mode<synchronous>, transform_indices = @transform_2, window_bounds = array<i64: 2, 290, 1>}, {transform_indices = @transform_3, window_bounds = array<i64: 1, 64>}, {transform_indices = @transform_4, window_bounds = array<i64: 1, 64>}, {transform_indices = @transform_5, window_bounds = array<i64: 1, 256, 64>}]} {
    %c0 = arith.constant 0 : index
    %c0_0 = arith.constant 0 : index
    %c0_1 = arith.constant 0 : index
    %0 = vector.load %arg2[%c0, %c0_0, %c0_1] : memref<1x290x32xbf16, #tpu.memory_space<vmem>>, vector<1x290x32xbf16>
    %1 = vector.shape_cast %0 : vector<1x290x32xbf16> to vector<290x32xbf16>
    %c0_2 = arith.constant 0 : index
    %c0_3 = arith.constant 0 : index
    %c0_4 = arith.constant 0 : index
    %2 = vector.load %arg4[%c0_2, %c0_3, %c0_4] : memref<2x290x1xbf16, #tpu.memory_space<vmem>>, vector<1x290x1xbf16>
    %3 = vector.shape_cast %2 : vector<1x290x1xbf16> to vector<290x1xbf16>
    %4 = vector.broadcast %3 : vector<290x1xbf16> to vector<290x32xbf16>
    %5 = arith.mulf %1, %4 : vector<290x32xbf16>
    %c1 = arith.constant 1 : index
    %c0_5 = arith.constant 0 : index
    %c0_6 = arith.constant 0 : index
    %6 = vector.load %arg4[%c1, %c0_5, %c0_6] : memref<2x290x1xbf16, #tpu.memory_space<vmem>>, vector<1x290x1xbf16>
    %7 = vector.shape_cast %6 : vector<1x290x1xbf16> to vector<290x1xbf16>
    %8 = vector.broadcast %7 : vector<290x1xbf16> to vector<290x32xbf16>
    %9 = arith.mulf %1, %8 : vector<290x32xbf16>
    %cst = arith.constant 0.000000e+00 : f32
    %10 = vector.broadcast %cst : f32 to vector<256x64xf32>
    %11 = vector.extract_strided_slice %5 {offsets = [0, 0], sizes = [256, 32], strides = [1, 1]} : vector<290x32xbf16> to vector<256x32xbf16>
    %c0_7 = arith.constant 0 : index
    %c0_8 = arith.constant 0 : index
    %c0_9 = arith.constant 0 : index
    %12 = vector.load %arg3[%c0_7, %c0_8, %c0_9] : memref<9x32x64xbf16, #tpu.memory_space<vmem>>, vector<1x32x64xbf16>
    %13 = vector.shape_cast %12 : vector<1x32x64xbf16> to vector<32x64xbf16>
    %cst_10 = arith.constant dense<0.000000e+00> : vector<256x64xf32>
    %14 = tpu.matmul %11, %13, %cst_10 {dimension_numbers = #tpu.dot_dimension_numbers<[1], [0], [0], [1], [0, 0, 1, 1], [], []>} : vector<256x32xbf16>, vector<32x64xbf16>, vector<256x64xf32> -> vector<256x64xf32>
    %15 = arith.addf %10, %14 : vector<256x64xf32>
    %16 = vector.extract_strided_slice %1 {offsets = [1, 0], sizes = [256, 32], strides = [1, 1]} : vector<290x32xbf16> to vector<256x32xbf16>
    %c1_11 = arith.constant 1 : index
    %c0_12 = arith.constant 0 : index
    %c0_13 = arith.constant 0 : index
    %17 = vector.load %arg3[%c1_11, %c0_12, %c0_13] : memref<9x32x64xbf16, #tpu.memory_space<vmem>>, vector<1x32x64xbf16>
    %18 = vector.shape_cast %17 : vector<1x32x64xbf16> to vector<32x64xbf16>
    %cst_14 = arith.constant dense<0.000000e+00> : vector<256x64xf32>
    %19 = tpu.matmul %16, %18, %cst_14 {dimension_numbers = #tpu.dot_dimension_numbers<[1], [0], [0], [1], [0, 0, 1, 1], [], []>} : vector<256x32xbf16>, vector<32x64xbf16>, vector<256x64xf32> -> vector<256x64xf32>
    %20 = arith.addf %15, %19 : vector<256x64xf32>
    %21 = vector.extract_strided_slice %9 {offsets = [2, 0], sizes = [256, 32], strides = [1, 1]} : vector<290x32xbf16> to vector<256x32xbf16>
    %c2 = arith.constant 2 : index
    %c0_15 = arith.constant 0 : index
    %c0_16 = arith.constant 0 : index
    %22 = vector.load %arg3[%c2, %c0_15, %c0_16] : memref<9x32x64xbf16, #tpu.memory_space<vmem>>, vector<1x32x64xbf16>
    %23 = vector.shape_cast %22 : vector<1x32x64xbf16> to vector<32x64xbf16>
    %cst_17 = arith.constant dense<0.000000e+00> : vector<256x64xf32>
    %24 = tpu.matmul %21, %23, %cst_17 {dimension_numbers = #tpu.dot_dimension_numbers<[1], [0], [0], [1], [0, 0, 1, 1], [], []>} : vector<256x32xbf16>, vector<32x64xbf16>, vector<256x64xf32> -> vector<256x64xf32>
    %25 = arith.addf %20, %24 : vector<256x64xf32>
    %26 = vector.extract_strided_slice %5 {offsets = [16, 0], sizes = [256, 32], strides = [1, 1]} : vector<290x32xbf16> to vector<256x32xbf16>
    %c3 = arith.constant 3 : index
    %c0_18 = arith.constant 0 : index
    %c0_19 = arith.constant 0 : index
    %27 = vector.load %arg3[%c3, %c0_18, %c0_19] : memref<9x32x64xbf16, #tpu.memory_space<vmem>>, vector<1x32x64xbf16>
    %28 = vector.shape_cast %27 : vector<1x32x64xbf16> to vector<32x64xbf16>
    %cst_20 = arith.constant dense<0.000000e+00> : vector<256x64xf32>
    %29 = tpu.matmul %26, %28, %cst_20 {dimension_numbers = #tpu.dot_dimension_numbers<[1], [0], [0], [1], [0, 0, 1, 1], [], []>} : vector<256x32xbf16>, vector<32x64xbf16>, vector<256x64xf32> -> vector<256x64xf32>
    %30 = arith.addf %25, %29 : vector<256x64xf32>
    %31 = vector.extract_strided_slice %1 {offsets = [17, 0], sizes = [256, 32], strides = [1, 1]} : vector<290x32xbf16> to vector<256x32xbf16>
    %c4 = arith.constant 4 : index
    %c0_21 = arith.constant 0 : index
    %c0_22 = arith.constant 0 : index
    %32 = vector.load %arg3[%c4, %c0_21, %c0_22] : memref<9x32x64xbf16, #tpu.memory_space<vmem>>, vector<1x32x64xbf16>
    %33 = vector.shape_cast %32 : vector<1x32x64xbf16> to vector<32x64xbf16>
    %cst_23 = arith.constant dense<0.000000e+00> : vector<256x64xf32>
    %34 = tpu.matmul %31, %33, %cst_23 {dimension_numbers = #tpu.dot_dimension_numbers<[1], [0], [0], [1], [0, 0, 1, 1], [], []>} : vector<256x32xbf16>, vector<32x64xbf16>, vector<256x64xf32> -> vector<256x64xf32>
    %35 = arith.addf %30, %34 : vector<256x64xf32>
    %36 = vector.extract_strided_slice %9 {offsets = [18, 0], sizes = [256, 32], strides = [1, 1]} : vector<290x32xbf16> to vector<256x32xbf16>
    %c5 = arith.constant 5 : index
    %c0_24 = arith.constant 0 : index
    %c0_25 = arith.constant 0 : index
    %37 = vector.load %arg3[%c5, %c0_24, %c0_25] : memref<9x32x64xbf16, #tpu.memory_space<vmem>>, vector<1x32x64xbf16>
    %38 = vector.shape_cast %37 : vector<1x32x64xbf16> to vector<32x64xbf16>
    %cst_26 = arith.constant dense<0.000000e+00> : vector<256x64xf32>
    %39 = tpu.matmul %36, %38, %cst_26 {dimension_numbers = #tpu.dot_dimension_numbers<[1], [0], [0], [1], [0, 0, 1, 1], [], []>} : vector<256x32xbf16>, vector<32x64xbf16>, vector<256x64xf32> -> vector<256x64xf32>
    %40 = arith.addf %35, %39 : vector<256x64xf32>
    %41 = vector.extract_strided_slice %5 {offsets = [32, 0], sizes = [256, 32], strides = [1, 1]} : vector<290x32xbf16> to vector<256x32xbf16>
    %c6 = arith.constant 6 : index
    %c0_27 = arith.constant 0 : index
    %c0_28 = arith.constant 0 : index
    %42 = vector.load %arg3[%c6, %c0_27, %c0_28] : memref<9x32x64xbf16, #tpu.memory_space<vmem>>, vector<1x32x64xbf16>
    %43 = vector.shape_cast %42 : vector<1x32x64xbf16> to vector<32x64xbf16>
    %cst_29 = arith.constant dense<0.000000e+00> : vector<256x64xf32>
    %44 = tpu.matmul %41, %43, %cst_29 {dimension_numbers = #tpu.dot_dimension_numbers<[1], [0], [0], [1], [0, 0, 1, 1], [], []>} : vector<256x32xbf16>, vector<32x64xbf16>, vector<256x64xf32> -> vector<256x64xf32>
    %45 = arith.addf %40, %44 : vector<256x64xf32>
    %46 = vector.extract_strided_slice %1 {offsets = [33, 0], sizes = [256, 32], strides = [1, 1]} : vector<290x32xbf16> to vector<256x32xbf16>
    %c7 = arith.constant 7 : index
    %c0_30 = arith.constant 0 : index
    %c0_31 = arith.constant 0 : index
    %47 = vector.load %arg3[%c7, %c0_30, %c0_31] : memref<9x32x64xbf16, #tpu.memory_space<vmem>>, vector<1x32x64xbf16>
    %48 = vector.shape_cast %47 : vector<1x32x64xbf16> to vector<32x64xbf16>
    %cst_32 = arith.constant dense<0.000000e+00> : vector<256x64xf32>
    %49 = tpu.matmul %46, %48, %cst_32 {dimension_numbers = #tpu.dot_dimension_numbers<[1], [0], [0], [1], [0, 0, 1, 1], [], []>} : vector<256x32xbf16>, vector<32x64xbf16>, vector<256x64xf32> -> vector<256x64xf32>
    %50 = arith.addf %45, %49 : vector<256x64xf32>
    %51 = vector.extract_strided_slice %9 {offsets = [34, 0], sizes = [256, 32], strides = [1, 1]} : vector<290x32xbf16> to vector<256x32xbf16>
    %c8 = arith.constant 8 : index
    %c0_33 = arith.constant 0 : index
    %c0_34 = arith.constant 0 : index
    %52 = vector.load %arg3[%c8, %c0_33, %c0_34] : memref<9x32x64xbf16, #tpu.memory_space<vmem>>, vector<1x32x64xbf16>
    %53 = vector.shape_cast %52 : vector<1x32x64xbf16> to vector<32x64xbf16>
    %cst_35 = arith.constant dense<0.000000e+00> : vector<256x64xf32>
    %54 = tpu.matmul %51, %53, %cst_35 {dimension_numbers = #tpu.dot_dimension_numbers<[1], [0], [0], [1], [0, 0, 1, 1], [], []>} : vector<256x32xbf16>, vector<32x64xbf16>, vector<256x64xf32> -> vector<256x64xf32>
    %55 = arith.addf %50, %54 : vector<256x64xf32>
    %c0_36 = arith.constant 0 : index
    %c0_37 = arith.constant 0 : index
    %56 = vector.load %arg5[%c0_36, %c0_37] : memref<1x64xf32, #tpu.memory_space<vmem>>, vector<1x64xf32>
    %57 = vector.broadcast %56 : vector<1x64xf32> to vector<256x64xf32>
    %58 = arith.mulf %55, %57 : vector<256x64xf32>
    %c0_38 = arith.constant 0 : index
    %c0_39 = arith.constant 0 : index
    %59 = vector.load %arg6[%c0_38, %c0_39] : memref<1x64xf32, #tpu.memory_space<vmem>>, vector<1x64xf32>
    %60 = vector.broadcast %59 : vector<1x64xf32> to vector<256x64xf32>
    %61 = arith.addf %58, %60 : vector<256x64xf32>
    %cst_40 = arith.constant 1.000000e-01 : f32
    %62 = vector.broadcast %cst_40 : f32 to vector<256x64xf32>
    %63 = arith.mulf %62, %61 : vector<256x64xf32>
    %64 = arith.maximumf %61, %63 : vector<256x64xf32>
    %65 = arith.truncf %64 : vector<256x64xf32> to vector<256x64xbf16>
    %c0_41 = arith.constant 0 : index
    %c0_42 = arith.constant 0 : index
    %c0_43 = arith.constant 0 : index
    %66 = vector.load %arg7[%c0_41, %c0_42, %c0_43] : memref<1x256x64xbf16, #tpu.memory_space<vmem>>, vector<1x256x64xbf16>
    %67 = vector.shape_cast %66 : vector<1x256x64xbf16> to vector<256x64xbf16>
    %68 = vector.shape_cast %65 : vector<256x64xbf16> to vector<1x256x64xbf16>
    tpu.vector_store %arg7[%c0_41, %c0_42, %c0_43], %68 {strides = array<i32>} : memref<1x256x64xbf16, #tpu.memory_space<vmem>>, vector<1x256x64xbf16>,
    return
  }
  func.func @transform_0(%arg0: i32, %arg1: i32) -> (i32, i32, i32) {
    %c0_i32 = arith.constant 0 : i32
    %c0_i32_0 = arith.constant 0 : i32
    %c0_i32_1 = arith.constant 0 : i32
    return %arg0, %c0_i32, %c0_i32_0 : i32, i32, i32
  }
  func.func @transform_1(%arg0: i32, %arg1: i32) -> (i32, i32, i32) {
    %c0_i32 = arith.constant 0 : i32
    %c0_i32_0 = arith.constant 0 : i32
    %c0_i32_1 = arith.constant 0 : i32
    return %c0_i32, %c0_i32_0, %arg1 : i32, i32, i32
  }
  func.func @transform_2(%arg0: i32, %arg1: i32) -> (i32, i32, i32) {
    %c0_i32 = arith.constant 0 : i32
    %c0_i32_0 = arith.constant 0 : i32
    %c0_i32_1 = arith.constant 0 : i32
    %c0_i32_2 = arith.constant 0 : i32
    return %c0_i32, %c0_i32_0, %c0_i32_1 : i32, i32, i32
  }
  func.func @transform_3(%arg0: i32, %arg1: i32) -> (i32, i32) {
    %c0_i32 = arith.constant 0 : i32
    %c0_i32_0 = arith.constant 0 : i32
    return %c0_i32, %arg1 : i32, i32
  }
  func.func @transform_4(%arg0: i32, %arg1: i32) -> (i32, i32) {
    %c0_i32 = arith.constant 0 : i32
    %c0_i32_0 = arith.constant 0 : i32
    return %c0_i32, %arg1 : i32, i32
  }
  func.func @transform_5(%arg0: i32, %arg1: i32) -> (i32, i32, i32) {
    %c0_i32 = arith.constant 0 : i32
    %c0_i32_0 = arith.constant 0 : i32
    return %arg0, %c0_i32, %arg1 : i32, i32, i32
  }
}

</mosaic_0001>

<llo_original>
// kernel: tpu_custom_call.1
$region0: #{tpu_custom_call.1}
  #allocation0 [shape = 'u32[]', space=smem, size = 0x4, offset = 0x4, fixed_abs, tag = 'smem constant byte address 0x4 - core index']
  #allocation1 [shape = 'u32[144,128]{1,0:T(1,128)}', space=vmem, size = 0x12000, scoped, tag = 'internal scratch']
  %s0 = inlined_call_operand.vmem [shape: bf16[2,290,32], index: 0, kind: input, shape index: {}]
  %s1 = inlined_call_operand.vmem [shape: bf16[9,32,64], index: 1, kind: input, shape index: {}]
  %s2 = inlined_call_operand.vmem [shape: bf16[2,290,1], index: 2, kind: input, shape index: {}]
  %s3 = inlined_call_operand.vmem [shape: f32[1,64], index: 3, kind: input, shape index: {}]
  %s4 = inlined_call_operand.vmem [shape: f32[1,64], index: 4, kind: input, shape index: {}]
  %s5 = inlined_call_operand.vmem [shape: bf16[2,256,64], index: 5, kind: output, shape index: {}]
  %s6 = sld [smem:[#allocation0]]
  $region53: #{tpu_custom_call.1} parent=0
    _
  %s8 = ssub.s32 1, %s6
  %s9 = scalar_select 0, %s8, %s6
  loop: start=0, step=1, limit=4
  $region2: #{tpu_custom_call.1} parent=0 // loop_pre_header
    _
  $region3: #{tpu_custom_call.1} parent=0 // loop_header
    %s11 = sphi 0, %s15
    %p12 = scmp.ge.s32.totalorder %s11, 4
    %s18 = sphi 0, %s30
    %s19 = sphi 0, %s26
    %s20 = sphi 0, %s18
    %s21 = sphi 0, %s19
    %s22 = sphi 0, %s20
    %s23 = sphi 0, %s21
    %s33 = sphi 0, %s35
    %s36 = sphi 0, %s33
    %s37 = sphi 0, %s36
    %s53 = sphi 0, %s37
    %s59 = sphi 0, %s61
    %s62 = sphi 0, %s59
    %s63 = sphi 0, %s62
    %s79 = sphi 0, %s63
    %s83 = sphi 0, %s83
    %s85 = sphi 0, %s83
    %s86 = sphi 0, %s85
    %s100 = sphi 0, %s86
    %s106 = sphi 0, %s108
    %s109 = sphi 0, %s106
    %s110 = sphi 0, %s109
    %s126 = sphi 0, %s110
    %s132 = sphi 0, %s134
    %s135 = sphi 0, %s132
    %s136 = sphi 0, %s135
    %s152 = sphi 0, %s136
    %s160 = sphi 0, %s162
    %s163 = sphi 0, %s160
    %s164 = sphi 0, %s163
    %s180 = sphi 0, %s164
  $region4: #{tpu_custom_call.1} parent=0 // loop_header_branch
    %14 = sbr.rel (%p12) target = $region8
  $region5: #{tpu_custom_call.1} parent=0 // loop_body
    %s16 = ssub.s32 %s11, 1
    %s17 = ssub.s32 %s11, 2
    %s24 = sadd.s32 1, %s19
    %p25 = scmp.ge.s32.totalorder %s24, 1
    %s26 = scalar_select %p25, 0, %s24
    %s27 = sadd.s32 1, %s18
    %s28 = scalar_select %p25, %s27, %s18
    %p29 = scmp.ge.s32.totalorder %s28, 2
    %s30 = scalar_select %p29, 0, %s28
    %s31 = ssub.s32 %s18, %s30
    %p32 = scmp.eq.s32.totalorder %s31, 0
    %s34 = sadd.s32 %s33, 1
    %s35 = scalar_select %p32, %s33, %s34
    %p38 = pneg %p32
    %p39 = scmp.eq.s32.totalorder %s11, 1
    %p40 = por %p38, %p39
    %p41 = scmp.ne.s32.totalorder %s33, %s36
    %p42 = scmp.eq.s32.totalorder %s11, 0
    %p43 = por %p41, %p42
    %p44 = scmp.ne.s32.totalorder %s33, %s36
    %p45 = scmp.eq.s32.totalorder %s16, 1
    %p46 = por %p44, %p45
    %p47 = scmp.ne.s32.totalorder %s36, %s37
    %p48 = scmp.eq.s32.totalorder %s16, 0
    %p49 = por %p47, %p48
    %p50 = scmp.ne.s32.totalorder %s36, %s37
    %p51 = scmp.eq.s32.totalorder %s17, 1
    %p52 = por %p50, %p51
    %p54 = scmp.ne.s32.totalorder %s37, %s53
    %p55 = scmp.eq.s32.totalorder %s17, 0
    %p56 = por %p54, %p55
    %s57 = ssub.s32 %s19, %s26
    %p58 = scmp.eq.s32.totalorder %s57, 0
    %s60 = sadd.s32 %s59, 1
    %s61 = scalar_select %p58, %s59, %s60
    %p64 = pneg %p58
    %p65 = scmp.eq.s32.totalorder %s11, 1
    %p66 = por %p64, %p65
    %p67 = scmp.ne.s32.totalorder %s59, %s62
    %p68 = scmp.eq.s32.totalorder %s11, 0
    %p69 = por %p67, %p68
    %p70 = scmp.ne.s32.totalorder %s59, %s62
    %p71 = scmp.eq.s32.totalorder %s16, 1
    %p72 = por %p70, %p71
    %p73 = scmp.ne.s32.totalorder %s62, %s63
    %p74 = scmp.eq.s32.totalorder %s16, 0
    %p75 = por %p73, %p74
    %p76 = scmp.ne.s32.totalorder %s62, %s63
    %p77 = scmp.eq.s32.totalorder %s17, 1
    %p78 = por %p76, %p77
    %p80 = scmp.ne.s32.totalorder %s63, %s79
    %p81 = scmp.eq.s32.totalorder %s17, 0
    %p82 = por %p80, %p81
    %s84 = sadd.s32 %s83, 1
    %p87 = scmp.eq.s32.totalorder %s11, 1
    %p88 = scmp.ne.s32.totalorder %s83, %s85
    %p89 = scmp.eq.s32.totalorder %s11, 0
    %p90 = por %p88, %p89
    %p91 = scmp.ne.s32.totalorder %s83, %s85
    %p92 = scmp.eq.s32.totalorder %s16, 1
    %p93 = por %p91, %p92
    %p94 = scmp.ne.s32.totalorder %s85, %s86
    %p95 = scmp.eq.s32.totalorder %s16, 0
    %p96 = por %p94, %p95
    %p97 = scmp.ne.s32.totalorder %s85, %s86
    %p98 = scmp.eq.s32.totalorder %s17, 1
    %p99 = por %p97, %p98
    %p101 = scmp.ne.s32.totalorder %s86, %s100
    %p102 = scmp.eq.s32.totalorder %s17, 0
    %p103 = por %p101, %p102
    %s104 = ssub.s32 %s19, %s26
    %p105 = scmp.eq.s32.totalorder %s104, 0
    %s107 = sadd.s32 %s106, 1
    %s108 = scalar_select %p105, %s106, %s107
    %p111 = pneg %p105
    %p112 = scmp.eq.s32.totalorder %s11, 1
    %p113 = por %p111, %p112
    %p114 = scmp.ne.s32.totalorder %s106, %s109
    %p115 = scmp.eq.s32.totalorder %s11, 0
    %p116 = por %p114, %p115
    %p117 = scmp.ne.s32.totalorder %s106, %s109
    %p118 = scmp.eq.s32.totalorder %s16, 1
    %p119 = por %p117, %p118
    %p120 = scmp.ne.s32.totalorder %s109, %s110
    %p121 = scmp.eq.s32.totalorder %s16, 0
    %p122 = por %p120, %p121
    %p123 = scmp.ne.s32.totalorder %s109, %s110
    %p124 = scmp.eq.s32.totalorder %s17, 1
    %p125 = por %p123, %p124
    %p127 = scmp.ne.s32.totalorder %s110, %s126
    %p128 = scmp.eq.s32.totalorder %s17, 0
    %p129 = por %p127, %p128
    %s130 = ssub.s32 %s19, %s26
    %p131 = scmp.eq.s32.totalorder %s130, 0
    %s133 = sadd.s32 %s132, 1
    %s134 = scalar_select %p131, %s132, %s133
    %p137 = pneg %p131
    %p138 = scmp.eq.s32.totalorder %s11, 1
    %p139 = por %p137, %p138
    %p140 = scmp.ne.s32.totalorder %s132, %s135
    %p141 = scmp.eq.s32.totalorder %s11, 0
    %p142 = por %p140, %p141
    %p143 = scmp.ne.s32.totalorder %s132, %s135
    %p144 = scmp.eq.s32.totalorder %s16, 1
    %p145 = por %p143, %p144
    %p146 = scmp.ne.s32.totalorder %s135, %s136
    %p147 = scmp.eq.s32.totalorder %s16, 0
    %p148 = por %p146, %p147
    %p149 = scmp.ne.s32.totalorder %s135, %s136
    %p150 = scmp.eq.s32.totalorder %s17, 1
    %p151 = por %p149, %p150
    %p153 = scmp.ne.s32.totalorder %s136, %s152
    %p154 = scmp.eq.s32.totalorder %s17, 0
    %p155 = por %p153, %p154
    %s156 = ssub.s32 %s18, %s30
    %s157 = ssub.s32 %s19, %s26
    %s158 = sor.u32 %s156, %s157
    %p159 = scmp.eq.s32.totalorder %s158, 0
    %s161 = sadd.s32 %s160, 1
    %s162 = scalar_select %p159, %s160, %s161
    %p165 = pneg %p159
    %p166 = scmp.eq.s32.totalorder %s11, 1
    %p167 = por %p165, %p166
    %p168 = scmp.ne.s32.totalorder %s160, %s163
    %p169 = scmp.eq.s32.totalorder %s11, 0
    %p170 = por %p168, %p169
    %p171 = scmp.ne.s32.totalorder %s160, %s163
    %p172 = scmp.eq.s32.totalorder %s16, 1
    %p173 = por %p171, %p172
    %p174 = scmp.ne.s32.totalorder %s163, %s164
    %p175 = scmp.eq.s32.totalorder %s16, 0
    %p176 = por %p174, %p175
    %p177 = scmp.ne.s32.totalorder %s163, %s164
    %p178 = scmp.eq.s32.totalorder %s17, 1
    %p179 = por %p177, %p178
    %p181 = scmp.ne.s32.totalorder %s164, %s180
    %p182 = scmp.eq.s32.totalorder %s17, 0
    %p183 = por %p181, %p182
    %p184 = scmp.le.s32.totalorder 1, %s11
    %p185 = scmp.lt.s32.totalorder %s11, 3
    %p186 = pnand %p184, %p185
    %p187 = pneg %p186
    // Predicated region
    $region9: #{tpu_custom_call.1} parent=5 // pred_check
      _
    $region10: #{tpu_custom_call.1} parent=5 // pred_check_branch
      %189 = sbr.rel (%p186) target = $region12
    $region11: #{tpu_custom_call.1} parent=5 // pred_region
      %s190 = ssub.s32 %s11, 1
      // Predicated region
      $region13: #{tpu_custom_call.1} parent=11 // pred_check
        %p191 = pneg %p75
      $region14: #{tpu_custom_call.1} parent=11 // pred_check_branch
        %193 = sbr.rel (%p191) target = $region16
      $region15: #{tpu_custom_call.1} parent=11 // pred_region
        %p194 = scmp.lt.s32.totalorder %s21, 0
        %s195 = scalar_select %p194, %s21, 0
        %s196 = smul.addr %s195, 4
        %s197 = scalar_lea.vmem %s1, %s196
      $region16: #{tpu_custom_call.1} parent=11 // pred_fallthru
        _
      // Predicated region
      $region17: #{tpu_custom_call.1} parent=11 // pred_check
        %p198 = pneg %p96
      $region18: #{tpu_custom_call.1} parent=11 // pred_check_branch
        %200 = sbr.rel (%p198) target = $region20
      $region19: #{tpu_custom_call.1} parent=11 // pred_region
        _
      $region20: #{tpu_custom_call.1} parent=11 // pred_fallthru
        _
      // Predicated region
      $region21: #{tpu_custom_call.1} parent=11 // pred_check
        %p201 = pneg %p122
      $region22: #{tpu_custom_call.1} parent=11 // pred_check_branch
        %203 = sbr.rel (%p201) target = $region24
      $region23: #{tpu_custom_call.1} parent=11 // pred_region
        %p204 = scmp.lt.s32.totalorder %s21, 0
        %s205 = scalar_select %p204, %s21, 0
        %s206 = scalar_lea.vmem %s3, %s205
      $region24: #{tpu_custom_call.1} parent=11 // pred_fallthru
        _
      // Predicated region
      $region25: #{tpu_custom_call.1} parent=11 // pred_check
        %p207 = pneg %p148
      $region26: #{tpu_custom_call.1} parent=11 // pred_check_branch
        %209 = sbr.rel (%p207) target = $region28
      $region27: #{tpu_custom_call.1} parent=11 // pred_region
        %p210 = scmp.lt.s32.totalorder %s21, 0
        %s211 = scalar_select %p210, %s21, 0
        %s212 = scalar_lea.vmem %s4, %s211
      $region28: #{tpu_custom_call.1} parent=11 // pred_fallthru
        _
    $region12: #{tpu_custom_call.1} parent=5 // pred_fallthru
      _
    %p213 = scmp.lt.s32.totalorder %s11, 2
    // Predicated region
    $region29: #{tpu_custom_call.1} parent=5 // pred_check
      %p214 = pneg %p213
    $region30: #{tpu_custom_call.1} parent=5 // pred_check_branch
      %216 = sbr.rel (%p214) target = $region32
    $region31: #{tpu_custom_call.1} parent=5 // pred_region
      // Predicated region
      $region33: #{tpu_custom_call.1} parent=31 // pred_check
        %p217 = pneg %p43
      $region34: #{tpu_custom_call.1} parent=31 // pred_check_branch
        %219 = sbr.rel (%p217) target = $region36
      $region35: #{tpu_custom_call.1} parent=31 // pred_region
        %p220 = scmp.lt.s32.totalorder %s18, 1
        %s221 = scalar_select %p220, %s18, 1
        %s222 = smul.addr %s221, 37
        %s223 = smul.addr %s222, 4
        %s224 = scalar_lea.vmem %s0, %s223
      $region36: #{tpu_custom_call.1} parent=31 // pred_fallthru
        _
    $region32: #{tpu_custom_call.1} parent=5 // pred_fallthru
      _
    %p225 = scmp.le.s32.totalorder 1, %s11
    %p226 = scmp.lt.s32.totalorder %s11, 3
    %p227 = pnand %p225, %p226
    %p228 = pneg %p227
    // Predicated region
    $region37: #{tpu_custom_call.1} parent=5 // pred_check
      _
    $region38: #{tpu_custom_call.1} parent=5 // pred_check_branch
      %230 = sbr.rel (%p227) target = $region40
    $region39: #{tpu_custom_call.1} parent=5 // pred_region
      %s231 = ssub.s32 %s11, 1
      %p232 = scmp.lt.s32.totalorder %s20, 1
      %s233 = scalar_select %p232, %s20, 1
      %s234 = smul.addr %s233, 37
      %s235 = smul.addr %s234, 4
      %s236 = scalar_lea.vmem %s0, %s235
      %p237 = pneg %p49
      %p238 = pneg %p46
      %p239 = scmp.lt.s32.totalorder %s21, 0
      %s240 = scalar_select %p239, %s21, 0
      %s241 = smul.addr %s240, 4
      %s242 = scalar_lea.vmem %s1, %s241
      %p243 = pneg %p75
      %p244 = pneg %p72
      %p245 = pneg %p96
      %p246 = pneg %p93
      %p247 = scmp.lt.s32.totalorder %s21, 0
      %s248 = scalar_select %p247, %s21, 0
      %s249 = scalar_lea.vmem %s3, %s248
      %p250 = pneg %p122
      %p251 = pneg %p119
      %p252 = scmp.lt.s32.totalorder %s21, 0
      %s253 = scalar_select %p252, %s21, 0
      %s254 = scalar_lea.vmem %s4, %s253
      %p255 = pneg %p148
      %p256 = pneg %p145
      %p257 = pneg %p176
      %p258 = pneg %p173
      %p259 = scmp.lt.s32.totalorder %s20, 1
      %s260 = scalar_select %p259, %s20, 1
      %p261 = scmp.lt.s32.totalorder %s21, 0
      %s262 = scalar_select %p261, %s21, 0
      %s263 = smul.addr %s260, 32
      %s264 = sadd.s32 %s262, %s263
      %s265 = smul.addr %s264, 4
      %s266 = scalar_lea.vmem %s5, %s265
      %p267 = scmp.lt.s32.totalorder %s20, 1
      %s268 = scalar_select %p267, %s20, 1
      %s269 = smul.addr %s268, 37
      %s270 = smul.addr %s269, 4
      %s271 = scalar_lea.vmem %s0, %s270
      %p272 = scmp.lt.s32.totalorder %s21, 0
      %s273 = scalar_select %p272, %s21, 0
      %s274 = smul.addr %s273, 4
      %s275 = scalar_lea.vmem %s1, %s274
      %p276 = scmp.lt.s32.totalorder %s21, 0
      %s277 = scalar_select %p276, %s21, 0
      %s278 = scalar_lea.vmem %s3, %s277
      %p279 = scmp.lt.s32.totalorder %s21, 0
      %s280 = scalar_select %p279, %s21, 0
      %s281 = scalar_lea.vmem %s4, %s280
      %p282 = scmp.lt.s32.totalorder %s20, 1
      %s283 = scalar_select %p282, %s20, 1
      %p284 = scmp.lt.s32.totalorder %s21, 0
      %s285 = scalar_select %p284, %s21, 0
      %s286 = smul.addr %s283, 32
      %s287 = sadd.s32 %s285, %s286
      %s288 = smul.addr %s287, 4
      %s289 = scalar_lea.vmem %s5, %s288
      %v291 = vld [vmem:[%s271] sm:$0xf]
      %v292 = vld [vmem:[%s271 + $0x4] sm:$0xf]
      %v293 = vld [vmem:[%s271 + $0x8] sm:$0xf]
      %v294 = vld [vmem:[%s271 + $0xc] sm:$0xf]
      %v295 = vld [vmem:[%s271 + $0x10] sm:$0xf]
      %v296 = vld [vmem:[%s271 + $0x14] sm:$0xf]
      %v297 = vld [vmem:[%s271 + $0x18] sm:$0xf]
      %v298 = vld [vmem:[%s271 + $0x1c] sm:$0xf]
      %v299 = vld [vmem:[%s271 + $0x20] sm:$0xf]
      %v300 = vld [vmem:[%s271 + $0x24] sm:$0xf]
      %v301 = vld [vmem:[%s271 + $0x28] sm:$0xf]
      %v302 = vld [vmem:[%s271 + $0x2c] sm:$0xf]
      %v303 = vld [vmem:[%s271 + $0x30] sm:$0xf]
      %v304 = vld [vmem:[%s271 + $0x34] sm:$0xf]
      %v305 = vld [vmem:[%s271 + $0x38] sm:$0xf]
      %v306 = vld [vmem:[%s271 + $0x3c] sm:$0xf]
      %v307 = vld [vmem:[%s271 + $0x40] sm:$0xf]
      %v308 = vld [vmem:[%s271 + $0x44] sm:$0xf]
      %v309 = vld [vmem:[%s271 + $0x48] sm:$0xf]
      %v310 = vld [vmem:[%s271 + $0x4c] sm:$0xf]
      %v311 = vld [vmem:[%s271 + $0x50] sm:$0xf]
      %v312 = vld [vmem:[%s271 + $0x54] sm:$0xf]
      %v313 = vld [vmem:[%s271 + $0x58] sm:$0xf]
      %v314 = vld [vmem:[%s271 + $0x5c] sm:$0xf]
      %v315 = vld [vmem:[%s271 + $0x60] sm:$0xf]
      %v316 = vld [vmem:[%s271 + $0x64] sm:$0xf]
      %v317 = vld [vmem:[%s271 + $0x68] sm:$0xf]
      %v318 = vld [vmem:[%s271 + $0x6c] sm:$0xf]
      %v319 = vld [vmem:[%s271 + $0x70] sm:$0xf]
      %v320 = vld [vmem:[%s271 + $0x74] sm:$0xf]
      %v321 = vld [vmem:[%s271 + $0x78] sm:$0xf]
      %v322 = vld [vmem:[%s271 + $0x7c] sm:$0xf]
      %v323 = vld [vmem:[%s271 + $0x80] sm:$0xf]
      %v324 = vld [vmem:[%s271 + $0x84] sm:$0xf]
      %v325 = vld [vmem:[%s271 + $0x88] sm:$0xf]
      %v326 = vld [vmem:[%s271 + $0x8c] sm:$0xf]
      %v327 = vld [vmem:[%s271 + $0x90] sm:$0x1]
      %v328 = vld [vmem:[%s2] sm:$0xf]
      %v329 = vld [vmem:[%s2 + $0x4] sm:$0xf]
      %v330 = vld [vmem:[%s2 + $0x8] sm:$0xf]
      %v331 = vld [vmem:[%s2 + $0xc] sm:$0xf]
      %v332 = vld [vmem:[%s2 + $0x10] sm:$0xf]
      %v333 = vld [vmem:[%s2 + $0x14] sm:$0xf]
      %v334 = vld [vmem:[%s2 + $0x18] sm:$0xf]
      %v335 = vld [vmem:[%s2 + $0x1c] sm:$0xf]
      %v336 = vld [vmem:[%s2 + $0x20] sm:$0xf]
      %v337 = vld [vmem:[%s2 + $0x24] sm:$0xf]
      %v338 = vld [vmem:[%s2 + $0x28] sm:$0xf]
      %v339 = vld [vmem:[%s2 + $0x2c] sm:$0xf]
      %v340 = vld [vmem:[%s2 + $0x30] sm:$0xf]
      %v341 = vld [vmem:[%s2 + $0x34] sm:$0xf]
      %v342 = vld [vmem:[%s2 + $0x38] sm:$0xf]
      %v343 = vld [vmem:[%s2 + $0x3c] sm:$0xf]
      %v344 = vld [vmem:[%s2 + $0x40] sm:$0xf]
      %v345 = vld [vmem:[%s2 + $0x44] sm:$0xf]
      %v346 = vld [vmem:[%s2 + $0x48] sm:$0xf]
      %v347 = vld [vmem:[%s2 + $0x4c] sm:$0xf]
      %v348 = vld [vmem:[%s2 + $0x50] sm:$0xf]
      %v349 = vld [vmem:[%s2 + $0x54] sm:$0xf]
      %v350 = vld [vmem:[%s2 + $0x58] sm:$0xf]
      %v351 = vld [vmem:[%s2 + $0x5c] sm:$0xf]
      %v352 = vld [vmem:[%s2 + $0x60] sm:$0xf]
      %v353 = vld [vmem:[%s2 + $0x64] sm:$0xf]
      %v354 = vld [vmem:[%s2 + $0x68] sm:$0xf]
      %v355 = vld [vmem:[%s2 + $0x6c] sm:$0xf]
      %v356 = vld [vmem:[%s2 + $0x70] sm:$0xf]
      %v357 = vld [vmem:[%s2 + $0x74] sm:$0xf]
      %v358 = vld [vmem:[%s2 + $0x78] sm:$0xf]
      %v359 = vld [vmem:[%s2 + $0x7c] sm:$0xf]
      %v360 = vld [vmem:[%s2 + $0x80] sm:$0xf]
      %v361 = vld [vmem:[%s2 + $0x84] sm:$0xf]
      %v362 = vld [vmem:[%s2 + $0x88] sm:$0xf]
      %v363 = vld [vmem:[%s2 + $0x8c] sm:$0xf]
      %365 = vset.pattern.permute.xlu0 0
      %366 = vperm.xlu0 %365, %v328
      %v367 = vpop.permute.xlu0 %366
      %v370 = vunpack.c.l.s4 839922192
      %v371 = vunpack.c.0.s8 %v370
      %v372 = vlaneseq
      %v373 = vshrl.u32 %v372, 7
      %v374 = vsub.s32 %v371, %v373
      %v375 = vrot.slane %v367, %v374
      %377 = vset.pattern.permute.xlu0 0
      %378 = vperm.xlu0 %377, %v329
      %v379 = vpop.permute.xlu0 %378
      %v382 = vunpack.c.l.s4 839922192
      %v383 = vunpack.c.0.s8 %v382
      %v384 = vlaneseq
      %v385 = vshrl.u32 %v384, 7
      %v386 = vsub.s32 %v383, %v385
      %v387 = vrot.slane %v379, %v386
      %389 = vset.pattern.permute.xlu0 0
      %390 = vperm.xlu0 %389, %v330
      %v391 = vpop.permute.xlu0 %390
      %v394 = vunpack.c.l.s4 839922192
      %v395 = vunpack.c.0.s8 %v394
      %v396 = vlaneseq
      %v397 = vshrl.u32 %v396, 7
      %v398 = vsub.s32 %v395, %v397
      %v399 = vrot.slane %v391, %v398
      %401 = vset.pattern.permute.xlu0 0
      %402 = vperm.xlu0 %401, %v331
      %v403 = vpop.permute.xlu0 %402
      %v406 = vunpack.c.l.s4 839922192
      %v407 = vunpack.c.0.s8 %v406
      %v408 = vlaneseq
      %v409 = vshrl.u32 %v408, 7
      %v410 = vsub.s32 %v407, %v409
      %v411 = vrot.slane %v403, %v410
      %413 = vset.pattern.permute.xlu0 0
      %414 = vperm.xlu0 %413, %v332
      %v415 = vpop.permute.xlu0 %414
      %v418 = vunpack.c.l.s4 839922192
      %v419 = vunpack.c.0.s8 %v418
      %v420 = vlaneseq
      %v421 = vshrl.u32 %v420, 7
      %v422 = vsub.s32 %v419, %v421
      %v423 = vrot.slane %v415, %v422
      %425 = vset.pattern.permute.xlu0 0
      %426 = vperm.xlu0 %425, %v333
      %v427 = vpop.permute.xlu0 %426
      %v430 = vunpack.c.l.s4 839922192
      %v431 = vunpack.c.0.s8 %v430
      %v432 = vlaneseq
      %v433 = vshrl.u32 %v432, 7
      %v434 = vsub.s32 %v431, %v433
      %v435 = vrot.slane %v427, %v434
      %437 = vset.pattern.permute.xlu0 0
      %438 = vperm.xlu0 %437, %v334
      %v439 = vpop.permute.xlu0 %438
      %v442 = vunpack.c.l.s4 839922192
      %v443 = vunpack.c.0.s8 %v442
      %v444 = vlaneseq
      %v445 = vshrl.u32 %v444, 7
      %v446 = vsub.s32 %v443, %v445
      %v447 = vrot.slane %v439, %v446
      %449 = vset.pattern.permute.xlu0 0
      %450 = vperm.xlu0 %449, %v335
      %v451 = vpop.permute.xlu0 %450
      %v454 = vunpack.c.l.s4 839922192
      %v455 = vunpack.c.0.s8 %v454
      %v456 = vlaneseq
      %v457 = vshrl.u32 %v456, 7
      %v458 = vsub.s32 %v455, %v457
      %v459 = vrot.slane %v451, %v458
      %461 = vset.pattern.permute.xlu0 0
      %462 = vperm.xlu0 %461, %v336
      %v463 = vpop.permute.xlu0 %462
      %v466 = vunpack.c.l.s4 839922192
      %v467 = vunpack.c.0.s8 %v466
      %v468 = vlaneseq
      %v469 = vshrl.u32 %v468, 7
      %v470 = vsub.s32 %v467, %v469
      %v471 = vrot.slane %v463, %v470
      %473 = vset.pattern.permute.xlu0 0
      %474 = vperm.xlu0 %473, %v337
      %v475 = vpop.permute.xlu0 %474
      %v478 = vunpack.c.l.s4 839922192
      %v479 = vunpack.c.0.s8 %v478
      %v480 = vlaneseq
      %v481 = vshrl.u32 %v480, 7
      %v482 = vsub.s32 %v479, %v481
      %v483 = vrot.slane %v475, %v482
      %485 = vset.pattern.permute.xlu0 0
      %486 = vperm.xlu0 %485, %v338
      %v487 = vpop.permute.xlu0 %486
      %v490 = vunpack.c.l.s4 839922192
      %v491 = vunpack.c.0.s8 %v490
      %v492 = vlaneseq
      %v493 = vshrl.u32 %v492, 7
      %v494 = vsub.s32 %v491, %v493
      %v495 = vrot.slane %v487, %v494
      %497 = vset.pattern.permute.xlu0 0
      %498 = vperm.xlu0 %497, %v339
      %v499 = vpop.permute.xlu0 %498
      %v502 = vunpack.c.l.s4 839922192
      %v503 = vunpack.c.0.s8 %v502
      %v504 = vlaneseq
      %v505 = vshrl.u32 %v504, 7
      %v506 = vsub.s32 %v503, %v505
      %v507 = vrot.slane %v499, %v506
      %509 = vset.pattern.permute.xlu0 0
      %510 = vperm.xlu0 %509, %v340
      %v511 = vpop.permute.xlu0 %510
      %v514 = vunpack.c.l.s4 839922192
      %v515 = vunpack.c.0.s8 %v514
      %v516 = vlaneseq
      %v517 = vshrl.u32 %v516, 7
      %v518 = vsub.s32 %v515, %v517
      %v519 = vrot.slane %v511, %v518
      %521 = vset.pattern.permute.xlu0 0
      %522 = vperm.xlu0 %521, %v341
      %v523 = vpop.permute.xlu0 %522
      %v526 = vunpack.c.l.s4 839922192
      %v527 = vunpack.c.0.s8 %v526
      %v528 = vlaneseq
      %v529 = vshrl.u32 %v528, 7
      %v530 = vsub.s32 %v527, %v529
      %v531 = vrot.slane %v523, %v530
      %533 = vset.pattern.permute.xlu0 0
      %534 = vperm.xlu0 %533, %v342
      %v535 = vpop.permute.xlu0 %534
      %v538 = vunpack.c.l.s4 839922192
      %v539 = vunpack.c.0.s8 %v538
      %v540 = vlaneseq
      %v541 = vshrl.u32 %v540, 7
      %v542 = vsub.s32 %v539, %v541
      %v543 = vrot.slane %v535, %v542
      %545 = vset.pattern.permute.xlu0 0
      %546 = vperm.xlu0 %545, %v343
      %v547 = vpop.permute.xlu0 %546
      %v550 = vunpack.c.l.s4 839922192
      %v551 = vunpack.c.0.s8 %v550
      %v552 = vlaneseq
      %v553 = vshrl.u32 %v552, 7
      %v554 = vsub.s32 %v551, %v553
      %v555 = vrot.slane %v547, %v554
      %557 = vset.pattern.permute.xlu0 0
      %558 = vperm.xlu0 %557, %v344
      %v559 = vpop.permute.xlu0 %558
      %v562 = vunpack.c.l.s4 839922192
      %v563 = vunpack.c.0.s8 %v562
      %v564 = vlaneseq
      %v565 = vshrl.u32 %v564, 7
      %v566 = vsub.s32 %v563, %v565
      %v567 = vrot.slane %v559, %v566
      %569 = vset.pattern.permute.xlu0 0
      %570 = vperm.xlu0 %569, %v345
      %v571 = vpop.permute.xlu0 %570
      %v574 = vunpack.c.l.s4 839922192
      %v575 = vunpack.c.0.s8 %v574
      %v576 = vlaneseq
      %v577 = vshrl.u32 %v576, 7
      %v578 = vsub.s32 %v575, %v577
      %v579 = vrot.slane %v571, %v578
      %581 = vset.pattern.permute.xlu0 0
      %582 = vperm.xlu0 %581, %v346
      %v583 = vpop.permute.xlu0 %582
      %v586 = vunpack.c.l.s4 839922192
      %v587 = vunpack.c.0.s8 %v586
      %v588 = vlaneseq
      %v589 = vshrl.u32 %v588, 7
      %v590 = vsub.s32 %v587, %v589
      %v591 = vrot.slane %v583, %v590
      %593 = vset.pattern.permute.xlu0 0
      %594 = vperm.xlu0 %593, %v347
      %v595 = vpop.permute.xlu0 %594
      %v598 = vunpack.c.l.s4 839922192
      %v599 = vunpack.c.0.s8 %v598
      %v600 = vlaneseq
      %v601 = vshrl.u32 %v600, 7
      %v602 = vsub.s32 %v599, %v601
      %v603 = vrot.slane %v595, %v602
      %605 = vset.pattern.permute.xlu0 0
      %606 = vperm.xlu0 %605, %v348
      %v607 = vpop.permute.xlu0 %606
      %v610 = vunpack.c.l.s4 839922192
      %v611 = vunpack.c.0.s8 %v610
      %v612 = vlaneseq
      %v613 = vshrl.u32 %v612, 7
      %v614 = vsub.s32 %v611, %v613
      %v615 = vrot.slane %v607, %v614
      %617 = vset.pattern.permute.xlu0 0
      %618 = vperm.xlu0 %617, %v349
      %v619 = vpop.permute.xlu0 %618
      %v622 = vunpack.c.l.s4 839922192
      %v623 = vunpack.c.0.s8 %v622
      %v624 = vlaneseq
      %v625 = vshrl.u32 %v624, 7
      %v626 = vsub.s32 %v623, %v625
      %v627 = vrot.slane %v619, %v626
      %629 = vset.pattern.permute.xlu0 0
      %630 = vperm.xlu0 %629, %v350
      %v631 = vpop.permute.xlu0 %630
      %v634 = vunpack.c.l.s4 839922192
      %v635 = vunpack.c.0.s8 %v634
      %v636 = vlaneseq
      %v637 = vshrl.u32 %v636, 7
      %v638 = vsub.s32 %v635, %v637
      %v639 = vrot.slane %v631, %v638
      %641 = vset.pattern.permute.xlu0 0
      %642 = vperm.xlu0 %641, %v351
      %v643 = vpop.permute.xlu0 %642
      %v646 = vunpack.c.l.s4 839922192
      %v647 = vunpack.c.0.s8 %v646
      %v648 = vlaneseq
      %v649 = vshrl.u32 %v648, 7
      %v650 = vsub.s32 %v647, %v649
      %v651 = vrot.slane %v643, %v650
      %653 = vset.pattern.permute.xlu0 0
      %654 = vperm.xlu0 %653, %v352
      %v655 = vpop.permute.xlu0 %654
      %v658 = vunpack.c.l.s4 839922192
      %v659 = vunpack.c.0.s8 %v658
      %v660 = vlaneseq
      %v661 = vshrl.u32 %v660, 7
      %v662 = vsub.s32 %v659, %v661
      %v663 = vrot.slane %v655, %v662
      %665 = vset.pattern.permute.xlu0 0
      %666 = vperm.xlu0 %665, %v353
      %v667 = vpop.permute.xlu0 %666
      %v670 = vunpack.c.l.s4 839922192
      %v671 = vunpack.c.0.s8 %v670
      %v672 = vlaneseq
      %v673 = vshrl.u32 %v672, 7
      %v674 = vsub.s32 %v671, %v673
      %v675 = vrot.slane %v667, %v674
      %677 = vset.pattern.permute.xlu0 0
      %678 = vperm.xlu0 %677, %v354
      %v679 = vpop.permute.xlu0 %678
      %v682 = vunpack.c.l.s4 839922192
      %v683 = vunpack.c.0.s8 %v682
      %v684 = vlaneseq
      %v685 = vshrl.u32 %v684, 7
      %v686 = vsub.s32 %v683, %v685
      %v687 = vrot.slane %v679, %v686
      %689 = vset.pattern.permute.xlu0 0
      %690 = vperm.xlu0 %689, %v355
      %v691 = vpop.permute.xlu0 %690
      %v694 = vunpack.c.l.s4 839922192
      %v695 = vunpack.c.0.s8 %v694
      %v696 = vlaneseq
      %v697 = vshrl.u32 %v696, 7
      %v698 = vsub.s32 %v695, %v697
      %v699 = vrot.slane %v691, %v698
      %701 = vset.pattern.permute.xlu0 0
      %702 = vperm.xlu0 %701, %v356
      %v703 = vpop.permute.xlu0 %702
      %v706 = vunpack.c.l.s4 839922192
      %v707 = vunpack.c.0.s8 %v706
      %v708 = vlaneseq
      %v709 = vshrl.u32 %v708, 7
      %v710 = vsub.s32 %v707, %v709
      %v711 = vrot.slane %v703, %v710
      %713 = vset.pattern.permute.xlu0 0
      %714 = vperm.xlu0 %713, %v357
      %v715 = vpop.permute.xlu0 %714
      %v718 = vunpack.c.l.s4 839922192
      %v719 = vunpack.c.0.s8 %v718
      %v720 = vlaneseq
      %v721 = vshrl.u32 %v720, 7
      %v722 = vsub.s32 %v719, %v721
      %v723 = vrot.slane %v715, %v722
      %725 = vset.pattern.permute.xlu0 0
      %726 = vperm.xlu0 %725, %v358
      %v727 = vpop.permute.xlu0 %726
      %v730 = vunpack.c.l.s4 839922192
      %v731 = vunpack.c.0.s8 %v730
      %v732 = vlaneseq
      %v733 = vshrl.u32 %v732, 7
      %v734 = vsub.s32 %v731, %v733
      %v735 = vrot.slane %v727, %v734
      %737 = vset.pattern.permute.xlu0 0
      %738 = vperm.xlu0 %737, %v359
      %v739 = vpop.permute.xlu0 %738
      %v742 = vunpack.c.l.s4 839922192
      %v743 = vunpack.c.0.s8 %v742
      %v744 = vlaneseq
      %v745 = vshrl.u32 %v744, 7
      %v746 = vsub.s32 %v743, %v745
      %v747 = vrot.slane %v739, %v746
      %749 = vset.pattern.permute.xlu0 0
      %750 = vperm.xlu0 %749, %v360
      %v751 = vpop.permute.xlu0 %750
      %v754 = vunpack.c.l.s4 839922192
      %v755 = vunpack.c.0.s8 %v754
      %v756 = vlaneseq
      %v757 = vshrl.u32 %v756, 7
      %v758 = vsub.s32 %v755, %v757
      %v759 = vrot.slane %v751, %v758
      %761 = vset.pattern.permute.xlu0 0
      %762 = vperm.xlu0 %761, %v361
      %v763 = vpop.permute.xlu0 %762
      %v766 = vunpack.c.l.s4 839922192
      %v767 = vunpack.c.0.s8 %v766
      %v768 = vlaneseq
      %v769 = vshrl.u32 %v768, 7
      %v770 = vsub.s32 %v767, %v769
      %v771 = vrot.slane %v763, %v770
      %773 = vset.pattern.permute.xlu0 0
      %774 = vperm.xlu0 %773, %v362
      %v775 = vpop.permute.xlu0 %774
      %v778 = vunpack.c.l.s4 839922192
      %v779 = vunpack.c.0.s8 %v778
      %v780 = vlaneseq
      %v781 = vshrl.u32 %v780, 7
      %v782 = vsub.s32 %v779, %v781
      %v783 = vrot.slane %v775, %v782
      %785 = vset.pattern.permute.xlu0 0
      %786 = vperm.xlu0 %785, %v363
      %v787 = vpop.permute.xlu0 %786
      %v790 = vunpack.c.l.s4 839922192
      %v791 = vunpack.c.0.s8 %v790
      %v792 = vlaneseq
      %v793 = vshrl.u32 %v792, 7
      %v794 = vsub.s32 %v791, %v793
      %v795 = vrot.slane %v787, %v794
      %v796 = vmul.bf16 %v291, %v375
      %v797 = vmul.bf16 %v292, %v387
      %v798 = vmul.bf16 %v293, %v399
      %v799 = vmul.bf16 %v294, %v411
      %v800 = vmul.bf16 %v295, %v423
      %v801 = vmul.bf16 %v296, %v435
      %v802 = vmul.bf16 %v297, %v447
      %v803 = vmul.bf16 %v298, %v459
      %v804 = vmul.bf16 %v299, %v471
      %v805 = vmul.bf16 %v300, %v483
      %v806 = vmul.bf16 %v301, %v495
      %v807 = vmul.bf16 %v302, %v507
      %v808 = vmul.bf16 %v303, %v519
      %v809 = vmul.bf16 %v304, %v531
      %v810 = vmul.bf16 %v305, %v543
      %v811 = vmul.bf16 %v306, %v555
      %v812 = vmul.bf16 %v307, %v567
      %v813 = vmul.bf16 %v308, %v579
      %v814 = vmul.bf16 %v309, %v591
      %v815 = vmul.bf16 %v310, %v603
      %v816 = vmul.bf16 %v311, %v615
      %v817 = vmul.bf16 %v312, %v627
      %v818 = vmul.bf16 %v313, %v639
      %v819 = vmul.bf16 %v314, %v651
      %v820 = vmul.bf16 %v315, %v663
      %v821 = vmul.bf16 %v316, %v675
      %v822 = vmul.bf16 %v317, %v687
      %v823 = vmul.bf16 %v318, %v699
      %v824 = vmul.bf16 %v319, %v711
      %v825 = vmul.bf16 %v320, %v723
      %v826 = vmul.bf16 %v321, %v735
      %v827 = vmul.bf16 %v322, %v747
      %v828 = vmul.bf16 %v323, %v759
      %v829 = vmul.bf16 %v324, %v771
      %v830 = vmul.bf16 %v325, %v783
      %v831 = vmul.bf16 %v326, %v795
      %s832 = scalar_lea.vmem %s2, 148
      %v833 = vld [vmem:[%s832] sm:$0xf]
      %v834 = vld [vmem:[%s832 + $0x4] sm:$0xf]
      %v835 = vld [vmem:[%s832 + $0x8] sm:$0xf]
      %v836 = vld [vmem:[%s832 + $0xc] sm:$0xf]
      %v837 = vld [vmem:[%s832 + $0x10] sm:$0xf]
      %v838 = vld [vmem:[%s832 + $0x14] sm:$0xf]
      %v839 = vld [vmem:[%s832 + $0x18] sm:$0xf]
      %v840 = vld [vmem:[%s832 + $0x1c] sm:$0xf]
      %v841 = vld [vmem:[%s832 + $0x20] sm:$0xf]
      %v842 = vld [vmem:[%s832 + $0x24] sm:$0xf]
      %v843 = vld [vmem:[%s832 + $0x28] sm:$0xf]
      %v844 = vld [vmem:[%s832 + $0x2c] sm:$0xf]
      %v845 = vld [vmem:[%s832 + $0x30] sm:$0xf]
      %v846 = vld [vmem:[%s832 + $0x34] sm:$0xf]
      %v847 = vld [vmem:[%s832 + $0x38] sm:$0xf]
      %v848 = vld [vmem:[%s832 + $0x3c] sm:$0xf]
      %v849 = vld [vmem:[%s832 + $0x40] sm:$0xf]
      %v850 = vld [vmem:[%s832 + $0x44] sm:$0xf]
      %v851 = vld [vmem:[%s832 + $0x48] sm:$0xf]
      %v852 = vld [vmem:[%s832 + $0x4c] sm:$0xf]
      %v853 = vld [vmem:[%s832 + $0x50] sm:$0xf]
      %v854 = vld [vmem:[%s832 + $0x54] sm:$0xf]
      %v855 = vld [vmem:[%s832 + $0x58] sm:$0xf]
      %v856 = vld [vmem:[%s832 + $0x5c] sm:$0xf]
      %v857 = vld [vmem:[%s832 + $0x60] sm:$0xf]
      %v858 = vld [vmem:[%s832 + $0x64] sm:$0xf]
      %v859 = vld [vmem:[%s832 + $0x68] sm:$0xf]
      %v860 = vld [vmem:[%s832 + $0x6c] sm:$0xf]
      %v861 = vld [vmem:[%s832 + $0x70] sm:$0xf]
      %v862 = vld [vmem:[%s832 + $0x74] sm:$0xf]
      %v863 = vld [vmem:[%s832 + $0x78] sm:$0xf]
      %v864 = vld [vmem:[%s832 + $0x7c] sm:$0xf]
      %v865 = vld [vmem:[%s832 + $0x80] sm:$0xf]
      %v866 = vld [vmem:[%s832 + $0x84] sm:$0xf]
      %v867 = vld [vmem:[%s832 + $0x88] sm:$0xf]
      %v868 = vld [vmem:[%s832 + $0x8c] sm:$0xf]
      %v869 = vld [vmem:[%s832 + $0x90] sm:$0x1]
      %871 = vset.pattern.permute.xlu0 0
      %872 = vperm.xlu0 %871, %v833
      %v873 = vpop.permute.xlu0 %872
      %v876 = vunpack.c.l.s4 839922192
      %v877 = vunpack.c.0.s8 %v876
      %v878 = vlaneseq
      %v879 = vshrl.u32 %v878, 7
      %v880 = vsub.s32 %v877, %v879
      %v881 = vrot.slane %v873, %v880
      %883 = vset.pattern.permute.xlu0 0
      %884 = vperm.xlu0 %883, %v834
      %v885 = vpop.permute.xlu0 %884
      %v888 = vunpack.c.l.s4 839922192
      %v889 = vunpack.c.0.s8 %v888
      %v890 = vlaneseq
      %v891 = vshrl.u32 %v890, 7
      %v892 = vsub.s32 %v889, %v891
      %v893 = vrot.slane %v885, %v892
      %895 = vset.pattern.permute.xlu0 0
      %896 = vperm.xlu0 %895, %v835
      %v897 = vpop.permute.xlu0 %896
      %v900 = vunpack.c.l.s4 839922192
      %v901 = vunpack.c.0.s8 %v900
      %v902 = vlaneseq
      %v903 = vshrl.u32 %v902, 7
      %v904 = vsub.s32 %v901, %v903
      %v905 = vrot.slane %v897, %v904
      %907 = vset.pattern.permute.xlu0 0
      %908 = vperm.xlu0 %907, %v836
      %v909 = vpop.permute.xlu0 %908
      %v912 = vunpack.c.l.s4 839922192
      %v913 = vunpack.c.0.s8 %v912
      %v914 = vlaneseq
      %v915 = vshrl.u32 %v914, 7
      %v916 = vsub.s32 %v913, %v915
      %v917 = vrot.slane %v909, %v916
      %919 = vset.pattern.permute.xlu0 0
      %920 = vperm.xlu0 %919, %v837
      %v921 = vpop.permute.xlu0 %920
      %v924 = vunpack.c.l.s4 839922192
      %v925 = vunpack.c.0.s8 %v924
      %v926 = vlaneseq
      %v927 = vshrl.u32 %v926, 7
      %v928 = vsub.s32 %v925, %v927
      %v929 = vrot.slane %v921, %v928
      %931 = vset.pattern.permute.xlu0 0
      %932 = vperm.xlu0 %931, %v838
      %v933 = vpop.permute.xlu0 %932
      %v936 = vunpack.c.l.s4 839922192
      %v937 = vunpack.c.0.s8 %v936
      %v938 = vlaneseq
      %v939 = vshrl.u32 %v938, 7
      %v940 = vsub.s32 %v937, %v939
      %v941 = vrot.slane %v933, %v940
      %943 = vset.pattern.permute.xlu0 0
      %944 = vperm.xlu0 %943, %v839
      %v945 = vpop.permute.xlu0 %944
      %v948 = vunpack.c.l.s4 839922192
      %v949 = vunpack.c.0.s8 %v948
      %v950 = vlaneseq
      %v951 = vshrl.u32 %v950, 7
      %v952 = vsub.s32 %v949, %v951
      %v953 = vrot.slane %v945, %v952
      %955 = vset.pattern.permute.xlu0 0
      %956 = vperm.xlu0 %955, %v840
      %v957 = vpop.permute.xlu0 %956
      %v960 = vunpack.c.l.s4 839922192
      %v961 = vunpack.c.0.s8 %v960
      %v962 = vlaneseq
      %v963 = vshrl.u32 %v962, 7
      %v964 = vsub.s32 %v961, %v963
      %v965 = vrot.slane %v957, %v964
      %967 = vset.pattern.permute.xlu0 0
      %968 = vperm.xlu0 %967, %v841
      %v969 = vpop.permute.xlu0 %968
      %v972 = vunpack.c.l.s4 839922192
      %v973 = vunpack.c.0.s8 %v972
      %v974 = vlaneseq
      %v975 = vshrl.u32 %v974, 7
      %v976 = vsub.s32 %v973, %v975
      %v977 = vrot.slane %v969, %v976
      %979 = vset.pattern.permute.xlu0 0
      %980 = vperm.xlu0 %979, %v842
      %v981 = vpop.permute.xlu0 %980
      %v984 = vunpack.c.l.s4 839922192
      %v985 = vunpack.c.0.s8 %v984
      %v986 = vlaneseq
      %v987 = vshrl.u32 %v986, 7
      %v988 = vsub.s32 %v985, %v987
      %v989 = vrot.slane %v981, %v988
      %991 = vset.pattern.permute.xlu0 0
      %992 = vperm.xlu0 %991, %v843
      %v993 = vpop.permute.xlu0 %992
      %v996 = vunpack.c.l.s4 839922192
      %v997 = vunpack.c.0.s8 %v996
      %v998 = vlaneseq
      %v999 = vshrl.u32 %v998, 7
      %v1000 = vsub.s32 %v997, %v999
      %v1001 = vrot.slane %v993, %v1000
      %1003 = vset.pattern.permute.xlu0 0
      %1004 = vperm.xlu0 %1003, %v844
      %v1005 = vpop.permute.xlu0 %1004
      %v1008 = vunpack.c.l.s4 839922192
      %v1009 = vunpack.c.0.s8 %v1008
      %v1010 = vlaneseq
      %v1011 = vshrl.u32 %v1010, 7
      %v1012 = vsub.s32 %v1009, %v1011
      %v1013 = vrot.slane %v1005, %v1012
      %1015 = vset.pattern.permute.xlu0 0
      %1016 = vperm.xlu0 %1015, %v845
      %v1017 = vpop.permute.xlu0 %1016
      %v1020 = vunpack.c.l.s4 839922192
      %v1021 = vunpack.c.0.s8 %v1020
      %v1022 = vlaneseq
      %v1023 = vshrl.u32 %v1022, 7
      %v1024 = vsub.s32 %v1021, %v1023
      %v1025 = vrot.slane %v1017, %v1024
      %1027 = vset.pattern.permute.xlu0 0
      %1028 = vperm.xlu0 %1027, %v846
      %v1029 = vpop.permute.xlu0 %1028
      %v1032 = vunpack.c.l.s4 839922192
      %v1033 = vunpack.c.0.s8 %v1032
      %v1034 = vlaneseq
      %v1035 = vshrl.u32 %v1034, 7
      %v1036 = vsub.s32 %v1033, %v1035
      %v1037 = vrot.slane %v1029, %v1036
      %1039 = vset.pattern.permute.xlu0 0
      %1040 = vperm.xlu0 %1039, %v847
      %v1041 = vpop.permute.xlu0 %1040
      %v1044 = vunpack.c.l.s4 839922192
      %v1045 = vunpack.c.0.s8 %v1044
      %v1046 = vlaneseq
      %v1047 = vshrl.u32 %v1046, 7
      %v1048 = vsub.s32 %v1045, %v1047
      %v1049 = vrot.slane %v1041, %v1048
      %1051 = vset.pattern.permute.xlu0 0
      %1052 = vperm.xlu0 %1051, %v848
      %v1053 = vpop.permute.xlu0 %1052
      %v1056 = vunpack.c.l.s4 839922192
      %v1057 = vunpack.c.0.s8 %v1056
      %v1058 = vlaneseq
      %v1059 = vshrl.u32 %v1058, 7
      %v1060 = vsub.s32 %v1057, %v1059
      %v1061 = vrot.slane %v1053, %v1060
      %1063 = vset.pattern.permute.xlu0 0
      %1064 = vperm.xlu0 %1063, %v849
      %v1065 = vpop.permute.xlu0 %1064
      %v1068 = vunpack.c.l.s4 839922192
      %v1069 = vunpack.c.0.s8 %v1068
      %v1070 = vlaneseq
      %v1071 = vshrl.u32 %v1070, 7
      %v1072 = vsub.s32 %v1069, %v1071
      %v1073 = vrot.slane %v1065, %v1072
      %1075 = vset.pattern.permute.xlu0 0
      %1076 = vperm.xlu0 %1075, %v850
      %v1077 = vpop.permute.xlu0 %1076
      %v1080 = vunpack.c.l.s4 839922192
      %v1081 = vunpack.c.0.s8 %v1080
      %v1082 = vlaneseq
      %v1083 = vshrl.u32 %v1082, 7
      %v1084 = vsub.s32 %v1081, %v1083
      %v1085 = vrot.slane %v1077, %v1084
      %1087 = vset.pattern.permute.xlu0 0
      %1088 = vperm.xlu0 %1087, %v851
      %v1089 = vpop.permute.xlu0 %1088
      %v1092 = vunpack.c.l.s4 839922192
      %v1093 = vunpack.c.0.s8 %v1092
      %v1094 = vlaneseq
      %v1095 = vshrl.u32 %v1094, 7
      %v1096 = vsub.s32 %v1093, %v1095
      %v1097 = vrot.slane %v1089, %v1096
      %1099 = vset.pattern.permute.xlu0 0
      %1100 = vperm.xlu0 %1099, %v852
      %v1101 = vpop.permute.xlu0 %1100
      %v1104 = vunpack.c.l.s4 839922192
      %v1105 = vunpack.c.0.s8 %v1104
      %v1106 = vlaneseq
      %v1107 = vshrl.u32 %v1106, 7
      %v1108 = vsub.s32 %v1105, %v1107
      %v1109 = vrot.slane %v1101, %v1108
      %1111 = vset.pattern.permute.xlu0 0
      %1112 = vperm.xlu0 %1111, %v853
      %v1113 = vpop.permute.xlu0 %1112
      %v1116 = vunpack.c.l.s4 839922192
      %v1117 = vunpack.c.0.s8 %v1116
      %v1118 = vlaneseq
      %v1119 = vshrl.u32 %v1118, 7
      %v1120 = vsub.s32 %v1117, %v1119
      %v1121 = vrot.slane %v1113, %v1120
      %1123 = vset.pattern.permute.xlu0 0
      %1124 = vperm.xlu0 %1123, %v854
      %v1125 = vpop.permute.xlu0 %1124
      %v1128 = vunpack.c.l.s4 839922192
      %v1129 = vunpack.c.0.s8 %v1128
      %v1130 = vlaneseq
      %v1131 = vshrl.u32 %v1130, 7
      %v1132 = vsub.s32 %v1129, %v1131
      %v1133 = vrot.slane %v1125, %v1132
      %1135 = vset.pattern.permute.xlu0 0
      %1136 = vperm.xlu0 %1135, %v855
      %v1137 = vpop.permute.xlu0 %1136
      %v1140 = vunpack.c.l.s4 839922192
      %v1141 = vunpack.c.0.s8 %v1140
      %v1142 = vlaneseq
      %v1143 = vshrl.u32 %v1142, 7
      %v1144 = vsub.s32 %v1141, %v1143
      %v1145 = vrot.slane %v1137, %v1144
      %1147 = vset.pattern.permute.xlu0 0
      %1148 = vperm.xlu0 %1147, %v856
      %v1149 = vpop.permute.xlu0 %1148
      %v1152 = vunpack.c.l.s4 839922192
      %v1153 = vunpack.c.0.s8 %v1152
      %v1154 = vlaneseq
      %v1155 = vshrl.u32 %v1154, 7
      %v1156 = vsub.s32 %v1153, %v1155
      %v1157 = vrot.slane %v1149, %v1156
      %1159 = vset.pattern.permute.xlu0 0
      %1160 = vperm.xlu0 %1159, %v857
      %v1161 = vpop.permute.xlu0 %1160
      %v1164 = vunpack.c.l.s4 839922192
      %v1165 = vunpack.c.0.s8 %v1164
      %v1166 = vlaneseq
      %v1167 = vshrl.u32 %v1166, 7
      %v1168 = vsub.s32 %v1165, %v1167
      %v1169 = vrot.slane %v1161, %v1168
      %1171 = vset.pattern.permute.xlu0 0
      %1172 = vperm.xlu0 %1171, %v858
      %v1173 = vpop.permute.xlu0 %1172
      %v1176 = vunpack.c.l.s4 839922192
      %v1177 = vunpack.c.0.s8 %v1176
      %v1178 = vlaneseq
      %v1179 = vshrl.u32 %v1178, 7
      %v1180 = vsub.s32 %v1177, %v1179
      %v1181 = vrot.slane %v1173, %v1180
      %1183 = vset.pattern.permute.xlu0 0
      %1184 = vperm.xlu0 %1183, %v859
      %v1185 = vpop.permute.xlu0 %1184
      %v1188 = vunpack.c.l.s4 839922192
      %v1189 = vunpack.c.0.s8 %v1188
      %v1190 = vlaneseq
      %v1191 = vshrl.u32 %v1190, 7
      %v1192 = vsub.s32 %v1189, %v1191
      %v1193 = vrot.slane %v1185, %v1192
      %1195 = vset.pattern.permute.xlu0 0
      %1196 = vperm.xlu0 %1195, %v860
      %v1197 = vpop.permute.xlu0 %1196
      %v1200 = vunpack.c.l.s4 839922192
      %v1201 = vunpack.c.0.s8 %v1200
      %v1202 = vlaneseq
      %v1203 = vshrl.u32 %v1202, 7
      %v1204 = vsub.s32 %v1201, %v1203
      %v1205 = vrot.slane %v1197, %v1204
      %1207 = vset.pattern.permute.xlu0 0
      %1208 = vperm.xlu0 %1207, %v861
      %v1209 = vpop.permute.xlu0 %1208
      %v1212 = vunpack.c.l.s4 839922192
      %v1213 = vunpack.c.0.s8 %v1212
      %v1214 = vlaneseq
      %v1215 = vshrl.u32 %v1214, 7
      %v1216 = vsub.s32 %v1213, %v1215
      %v1217 = vrot.slane %v1209, %v1216
      %1219 = vset.pattern.permute.xlu0 0
      %1220 = vperm.xlu0 %1219, %v862
      %v1221 = vpop.permute.xlu0 %1220
      %v1224 = vunpack.c.l.s4 839922192
      %v1225 = vunpack.c.0.s8 %v1224
      %v1226 = vlaneseq
      %v1227 = vshrl.u32 %v1226, 7
      %v1228 = vsub.s32 %v1225, %v1227
      %v1229 = vrot.slane %v1221, %v1228
      %1231 = vset.pattern.permute.xlu0 0
      %1232 = vperm.xlu0 %1231, %v863
      %v1233 = vpop.permute.xlu0 %1232
      %v1236 = vunpack.c.l.s4 839922192
      %v1237 = vunpack.c.0.s8 %v1236
      %v1238 = vlaneseq
      %v1239 = vshrl.u32 %v1238, 7
      %v1240 = vsub.s32 %v1237, %v1239
      %v1241 = vrot.slane %v1233, %v1240
      %1243 = vset.pattern.permute.xlu0 0
      %1244 = vperm.xlu0 %1243, %v864
      %v1245 = vpop.permute.xlu0 %1244
      %v1248 = vunpack.c.l.s4 839922192
      %v1249 = vunpack.c.0.s8 %v1248
      %v1250 = vlaneseq
      %v1251 = vshrl.u32 %v1250, 7
      %v1252 = vsub.s32 %v1249, %v1251
      %v1253 = vrot.slane %v1245, %v1252
      %1255 = vset.pattern.permute.xlu0 0
      %1256 = vperm.xlu0 %1255, %v865
      %v1257 = vpop.permute.xlu0 %1256
      %v1260 = vunpack.c.l.s4 839922192
      %v1261 = vunpack.c.0.s8 %v1260
      %v1262 = vlaneseq
      %v1263 = vshrl.u32 %v1262, 7
      %v1264 = vsub.s32 %v1261, %v1263
      %v1265 = vrot.slane %v1257, %v1264
      %1267 = vset.pattern.permute.xlu0 0
      %1268 = vperm.xlu0 %1267, %v866
      %v1269 = vpop.permute.xlu0 %1268
      %v1272 = vunpack.c.l.s4 839922192
      %v1273 = vunpack.c.0.s8 %v1272
      %v1274 = vlaneseq
      %v1275 = vshrl.u32 %v1274, 7
      %v1276 = vsub.s32 %v1273, %v1275
      %v1277 = vrot.slane %v1269, %v1276
      %1279 = vset.pattern.permute.xlu0 0
      %1280 = vperm.xlu0 %1279, %v867
      %v1281 = vpop.permute.xlu0 %1280
      %v1284 = vunpack.c.l.s4 839922192
      %v1285 = vunpack.c.0.s8 %v1284
      %v1286 = vlaneseq
      %v1287 = vshrl.u32 %v1286, 7
      %v1288 = vsub.s32 %v1285, %v1287
      %v1289 = vrot.slane %v1281, %v1288
      %1291 = vset.pattern.permute.xlu0 0
      %1292 = vperm.xlu0 %1291, %v868
      %v1293 = vpop.permute.xlu0 %1292
      %v1296 = vunpack.c.l.s4 839922192
      %v1297 = vunpack.c.0.s8 %v1296
      %v1298 = vlaneseq
      %v1299 = vshrl.u32 %v1298, 7
      %v1300 = vsub.s32 %v1297, %v1299
      %v1301 = vrot.slane %v1293, %v1300
      %1303 = vset.pattern.permute.xlu0 0
      %1304 = vperm.xlu0 %1303, %v869
      %v1305 = vpop.permute.xlu0 %1304
      %v1308 = vunpack.c.l.s4 839922192
      %v1309 = vunpack.c.0.s8 %v1308
      %v1310 = vlaneseq
      %v1311 = vshrl.u32 %v1310, 7
      %v1312 = vsub.s32 %v1309, %v1311
      %v1313 = vrot.slane %v1305, %v1312
      %v1314 = vmul.bf16 %v291, %v881
      %v1315 = vmul.bf16 %v292, %v893
      %v1316 = vmul.bf16 %v293, %v905
      %v1317 = vmul.bf16 %v294, %v917
      %v1318 = vmul.bf16 %v295, %v929
      %v1319 = vmul.bf16 %v296, %v941
      %v1320 = vmul.bf16 %v297, %v953
      %v1321 = vmul.bf16 %v298, %v965
      %v1322 = vmul.bf16 %v299, %v977
      %v1323 = vmul.bf16 %v300, %v989
      %v1324 = vmul.bf16 %v301, %v1001
      %v1325 = vmul.bf16 %v302, %v1013
      %v1326 = vmul.bf16 %v303, %v1025
      %v1327 = vmul.bf16 %v304, %v1037
      %v1328 = vmul.bf16 %v305, %v1049
      %v1329 = vmul.bf16 %v306, %v1061
      %v1330 = vmul.bf16 %v307, %v1073
      %v1331 = vmul.bf16 %v308, %v1085
      %v1332 = vmul.bf16 %v309, %v1097
      %v1333 = vmul.bf16 %v310, %v1109
      %v1334 = vmul.bf16 %v311, %v1121
      %v1335 = vmul.bf16 %v312, %v1133
      %v1336 = vmul.bf16 %v313, %v1145
      %v1337 = vmul.bf16 %v314, %v1157
      %v1338 = vmul.bf16 %v315, %v1169
      %v1339 = vmul.bf16 %v316, %v1181
      %v1340 = vmul.bf16 %v317, %v1193
      %v1341 = vmul.bf16 %v318, %v1205
      %v1342 = vmul.bf16 %v319, %v1217
      %v1343 = vmul.bf16 %v320, %v1229
      %v1344 = vmul.bf16 %v321, %v1241
      %v1345 = vmul.bf16 %v322, %v1253
      %v1346 = vmul.bf16 %v323, %v1265
      %v1347 = vmul.bf16 %v324, %v1277
      %v1348 = vmul.bf16 %v325, %v1289
      %v1349 = vmul.bf16 %v326, %v1301
      %v1350 = vmul.bf16 %v327, %v1313
      %v1351 = vld [vmem:[%s275] sm:$0xf]
      %v1352 = vld [vmem:[%s275 + $0x4] sm:$0xf]
      %v1353 = vld [vmem:[%s275 + $0x8] sm:$0xf]
      %v1354 = vld [vmem:[%s275 + $0xc] sm:$0xf]
      %s1355 = scalar_lea.vmem %s275, 16
      %v1356 = vld [vmem:[%s1355] sm:$0xf]
      %v1357 = vld [vmem:[%s1355 + $0x4] sm:$0xf]
      %v1358 = vld [vmem:[%s1355 + $0x8] sm:$0xf]
      %v1359 = vld [vmem:[%s1355 + $0xc] sm:$0xf]
      %v1393 = vunpack.c.l.b16 %v291
      %v1394 = vunpack.c.l.b16 %v292
      %v1395 = vunpack.c.l.b16 %v293
      %v1396 = vunpack.c.l.b16 %v294
      %v1397 = vunpack.c.l.b16 %v295
      %v1398 = vunpack.c.l.b16 %v296
      %v1399 = vunpack.c.l.b16 %v297
      %v1400 = vunpack.c.l.b16 %v298
      %v1401 = vunpack.c.l.b16 %v299
      %v1402 = vunpack.c.l.b16 %v300
      %v1403 = vunpack.c.l.b16 %v301
      %v1404 = vunpack.c.l.b16 %v302
      %v1405 = vunpack.c.l.b16 %v303
      %v1406 = vunpack.c.l.b16 %v304
      %v1407 = vunpack.c.l.b16 %v305
      %v1408 = vunpack.c.l.b16 %v306
      %v1409 = vunpack.c.l.b16 %v307
      %v1410 = vunpack.c.l.b16 %v308
      %v1411 = vunpack.c.l.b16 %v309
      %v1412 = vunpack.c.l.b16 %v310
      %v1413 = vunpack.c.l.b16 %v311
      %v1414 = vunpack.c.l.b16 %v312
      %v1415 = vunpack.c.l.b16 %v313
      %v1416 = vunpack.c.l.b16 %v314
      %v1417 = vunpack.c.l.b16 %v315
      %v1418 = vunpack.c.l.b16 %v316
      %v1419 = vunpack.c.l.b16 %v317
      %v1420 = vunpack.c.l.b16 %v318
      %v1421 = vunpack.c.l.b16 %v319
      %v1422 = vunpack.c.l.b16 %v320
      %v1423 = vunpack.c.l.b16 %v321
      %v1424 = vunpack.c.l.b16 %v322
      %v1425 = vunpack.c.l.b16 %v323
      %v1426 = vpack.c.b16 %v1394, %v1393
      %v1427 = vpack.c.b16 %v1396, %v1395
      %v1428 = vpack.c.b16 %v1398, %v1397
      %v1429 = vpack.c.b16 %v1400, %v1399
      %v1430 = vpack.c.b16 %v1402, %v1401
      %v1431 = vpack.c.b16 %v1404, %v1403
      %v1432 = vpack.c.b16 %v1406, %v1405
      %v1433 = vpack.c.b16 %v1408, %v1407
      %v1434 = vpack.c.b16 %v1410, %v1409
      %v1435 = vpack.c.b16 %v1412, %v1411
      %v1436 = vpack.c.b16 %v1414, %v1413
      %v1437 = vpack.c.b16 %v1416, %v1415
      %v1438 = vpack.c.b16 %v1418, %v1417
      %v1439 = vpack.c.b16 %v1420, %v1419
      %v1440 = vpack.c.b16 %v1422, %v1421
      %v1441 = vpack.c.b16 %v1424, %v1423
      %v1442 = vpack.c.b16 %v1425, %v1425
      %vm1443 = vsmask.f32 7424
      %v1445 = vshrl.u32 %v1426, 16
      %v1447 = vshll.u32 %v1426, 16
      %v1449 = vrot.slane %v1447, 1
      %v1450 = vor.u32 %v1445, %v1449
      %v1452 = vshll.u32 %v1427, 16
      %v1454 = vrot.slane %v1452, 1
      %v1455 = vsel %vm1443, %v1450, %v1454
      %v1456 = vshrl.u32 %v1427, 16
      %v1458 = vor.u32 %v1456, %v1454
      %v1460 = vshll.u32 %v1428, 16
      %v1462 = vrot.slane %v1460, 1
      %v1463 = vsel %vm1443, %v1458, %v1462
      %v1464 = vshrl.u32 %v1428, 16
      %v1466 = vor.u32 %v1464, %v1462
      %v1468 = vshll.u32 %v1429, 16
      %v1470 = vrot.slane %v1468, 1
      %v1471 = vsel %vm1443, %v1466, %v1470
      %v1472 = vshrl.u32 %v1429, 16
      %v1474 = vor.u32 %v1472, %v1470
      %v1476 = vshll.u32 %v1430, 16
      %v1478 = vrot.slane %v1476, 1
      %v1479 = vsel %vm1443, %v1474, %v1478
      %v1480 = vshrl.u32 %v1430, 16
      %v1482 = vor.u32 %v1480, %v1478
      %v1484 = vshll.u32 %v1431, 16
      %v1486 = vrot.slane %v1484, 1
      %v1487 = vsel %vm1443, %v1482, %v1486
      %v1488 = vshrl.u32 %v1431, 16
      %v1490 = vor.u32 %v1488, %v1486
      %v1492 = vshll.u32 %v1432, 16
      %v1494 = vrot.slane %v1492, 1
      %v1495 = vsel %vm1443, %v1490, %v1494
      %v1496 = vshrl.u32 %v1432, 16
      %v1498 = vor.u32 %v1496, %v1494
      %v1500 = vshll.u32 %v1433, 16
      %v1502 = vrot.slane %v1500, 1
      %v1503 = vsel %vm1443, %v1498, %v1502
      %v1504 = vshrl.u32 %v1433, 16
      %v1506 = vor.u32 %v1504, %v1502
      %v1508 = vshll.u32 %v1434, 16
      %v1510 = vrot.slane %v1508, 1
      %v1511 = vsel %vm1443, %v1506, %v1510
      %v1512 = vshrl.u32 %v1434, 16
      %v1514 = vor.u32 %v1512, %v1510
      %v1516 = vshll.u32 %v1435, 16
      %v1518 = vrot.slane %v1516, 1
      %v1519 = vsel %vm1443, %v1514, %v1518
      %v1520 = vshrl.u32 %v1435, 16
      %v1522 = vor.u32 %v1520, %v1518
      %v1524 = vshll.u32 %v1436, 16
      %v1526 = vrot.slane %v1524, 1
      %v1527 = vsel %vm1443, %v1522, %v1526
      %v1528 = vshrl.u32 %v1436, 16
      %v1530 = vor.u32 %v1528, %v1526
      %v1532 = vshll.u32 %v1437, 16
      %v1534 = vrot.slane %v1532, 1
      %v1535 = vsel %vm1443, %v1530, %v1534
      %v1536 = vshrl.u32 %v1437, 16
      %v1538 = vor.u32 %v1536, %v1534
      %v1540 = vshll.u32 %v1438, 16
      %v1542 = vrot.slane %v1540, 1
      %v1543 = vsel %vm1443, %v1538, %v1542
      %v1544 = vshrl.u32 %v1438, 16
      %v1546 = vor.u32 %v1544, %v1542
      %v1548 = vshll.u32 %v1439, 16
      %v1550 = vrot.slane %v1548, 1
      %v1551 = vsel %vm1443, %v1546, %v1550
      %v1552 = vshrl.u32 %v1439, 16
      %v1554 = vor.u32 %v1552, %v1550
      %v1556 = vshll.u32 %v1440, 16
      %v1558 = vrot.slane %v1556, 1
      %v1559 = vsel %vm1443, %v1554, %v1558
      %v1560 = vshrl.u32 %v1440, 16
      %v1562 = vor.u32 %v1560, %v1558
      %v1564 = vshll.u32 %v1441, 16
      %v1566 = vrot.slane %v1564, 1
      %v1567 = vsel %vm1443, %v1562, %v1566
      %v1568 = vshrl.u32 %v1441, 16
      %v1570 = vor.u32 %v1568, %v1566
      %v1572 = vshll.u32 %v1442, 16
      %v1574 = vrot.slane %v1572, 1
      %v1575 = vsel %vm1443, %v1570, %v1574
      %v1580 = vunpack.c.l.b16 %v1356
      %v1581 = vunpack.c.l.b16 %v1357
      %v1582 = vunpack.c.l.b16 %v1358
      %v1583 = vunpack.c.l.b16 %v1359
      %v1584 = vpack.c.b16 %v1581, %v1580
      %v1585 = vpack.c.b16 %v1583, %v1582
      %vm1588 = vcmask 261120
      %v1590 = vsel %vm1588, %v1455, 0
      %v1593 = vsel %vm1588, %v1463, 0
      %v1596 = vsel %vm1588, %v1471, 0
      %v1599 = vsel %vm1588, %v1479, 0
      %v1602 = vsel %vm1588, %v1487, 0
      %v1605 = vsel %vm1588, %v1495, 0
      %v1608 = vsel %vm1588, %v1503, 0
      %v1611 = vsel %vm1588, %v1511, 0
      %v1614 = vsel %vm1588, %v1519, 0
      %v1617 = vsel %vm1588, %v1527, 0
      %v1620 = vsel %vm1588, %v1535, 0
      %v1623 = vsel %vm1588, %v1543, 0
      %v1626 = vsel %vm1588, %v1551, 0
      %v1629 = vsel %vm1588, %v1559, 0
      %v1632 = vsel %vm1588, %v1567, 0
      %v1635 = vsel %vm1588, %v1575, 0
      %1637 = vmatprep.subr.bf16.mxu0 0
      %1638 = vmatpush1.bf16.msra.mxu0 0
      %1639 = vmatprep.subr.bf16.mxu0 0
      %1640 = vmatpush1.bf16.msra.mxu0 0
      %1641 = vmatprep.subr.bf16.mxu0 0
      %1642 = vmatpush1.bf16.msra.mxu0 0
      %1643 = vmatprep.subr.bf16.mxu0 0
      %1644 = vmatpush1.bf16.msra.mxu0 0
      %1645 = vmatprep.subr.bf16.mxu0 0
      %1646 = vmatpush1.bf16.msra.mxu0 0
      %1647 = vmatprep.subr.bf16.mxu0 0
      %1648 = vmatpush1.bf16.msra.mxu0 0
      %1649 = vmatprep.subr.bf16.mxu0 0
      %1650 = vmatpush1.bf16.msra.mxu0 %v1585
      %1651 = vmatprep.subr.bf16.mxu0 0
      %1652 = vmatpush1.bf16.msra.mxu0 %v1584
      %1653 = vmatprep.subr.bf16.mxu0 0
      %1654 = vmatpush2.bf16.msra.mxu0 0
      %1655 = vmatprep.subr.bf16.mxu0 0
      %1656 = vmatpush2.bf16.msra.mxu0 0
      %1657 = vmatprep.subr.bf16.mxu0 0
      %1658 = vmatpush2.bf16.msra.mxu0 0
      %1659 = vmatprep.subr.bf16.mxu0 0
      %1660 = vmatpush2.bf16.msra.mxu0 0
      %1661 = vmatprep.subr.bf16.mxu0 0
      %1662 = vmatpush2.bf16.msra.mxu0 0
      %1663 = vmatprep.subr.bf16.mxu0 0
      %1664 = vmatpush2.bf16.msra.mxu0 0
      %1665 = vmatprep.subr.bf16.mxu0 0
      %1666 = vmatpush2.bf16.msra.mxu0 0
      %1667 = vmatprep.subr.bf16.mxu0 0
      %1668 = vmatpush2.bf16.msra.mxu0 0
      %1669 = vmatprep.mubr.bf16.mxu0 0
      %1670 = vmatmul.mubr.bf16.gmra.mxu0 %v1590
      %v1671 = vpop.f32.mrf.mxu0
      %v1672 = vadd.f32 0.0, %v1671
      %v1673 = vpop.f32.mrf.mxu0
      %v1674 = vpop.f32.mrf.mxu0
      %v1675 = vadd.f32 0.0, %v1674
      %v1676 = vpop.f32.mrf.mxu0
      %1677 = vmatprep.mubr.bf16.mxu0 0
      %1678 = vmatmul.mubr.bf16.gmra.mxu0 %v1593
      %v1679 = vpop.f32.mrf.mxu0
      %v1680 = vadd.f32 0.0, %v1679
      %v1681 = vpop.f32.mrf.mxu0
      %v1682 = vpop.f32.mrf.mxu0
      %v1683 = vadd.f32 0.0, %v1682
      %v1684 = vpop.f32.mrf.mxu0
      %1685 = vmatprep.mubr.bf16.mxu0 0
      %1686 = vmatmul.mubr.bf16.gmra.mxu0 %v1596
      %v1687 = vpop.f32.mrf.mxu0
      %v1688 = vadd.f32 0.0, %v1687
      %v1689 = vpop.f32.mrf.mxu0
      %v1690 = vpop.f32.mrf.mxu0
      %v1691 = vadd.f32 0.0, %v1690
      %v1692 = vpop.f32.mrf.mxu0
      %1693 = vmatprep.mubr.bf16.mxu0 0
      %1694 = vmatmul.mubr.bf16.gmra.mxu0 %v1599
      %v1695 = vpop.f32.mrf.mxu0
      %v1696 = vadd.f32 0.0, %v1695
      %v1697 = vpop.f32.mrf.mxu0
      %v1698 = vpop.f32.mrf.mxu0
      %v1699 = vadd.f32 0.0, %v1698
      %v1700 = vpop.f32.mrf.mxu0
      %1701 = vmatprep.mubr.bf16.mxu0 0
      %1702 = vmatmul.mubr.bf16.gmra.mxu0 %v1602
      %v1703 = vpop.f32.mrf.mxu0
      %v1704 = vadd.f32 0.0, %v1703
      %v1705 = vpop.f32.mrf.mxu0
      %v1706 = vpop.f32.mrf.mxu0
      %v1707 = vadd.f32 0.0, %v1706
      %v1708 = vpop.f32.mrf.mxu0
      %1709 = vmatprep.mubr.bf16.mxu0 0
      %1710 = vmatmul.mubr.bf16.gmra.mxu0 %v1605
      %v1711 = vpop.f32.mrf.mxu0
      %v1712 = vadd.f32 0.0, %v1711
      %v1713 = vpop.f32.mrf.mxu0
      %v1714 = vpop.f32.mrf.mxu0
      %v1715 = vadd.f32 0.0, %v1714
      %v1716 = vpop.f32.mrf.mxu0
      %1717 = vmatprep.mubr.bf16.mxu0 0
      %1718 = vmatmul.mubr.bf16.gmra.mxu0 %v1608
      %v1719 = vpop.f32.mrf.mxu0
      %v1720 = vadd.f32 0.0, %v1719
      %v1721 = vpop.f32.mrf.mxu0
      %v1722 = vpop.f32.mrf.mxu0
      %v1723 = vadd.f32 0.0, %v1722
      %v1724 = vpop.f32.mrf.mxu0
      %1725 = vmatprep.mubr.bf16.mxu0 0
      %1726 = vmatmul.mubr.bf16.gmra.mxu0 %v1611
      %v1727 = vpop.f32.mrf.mxu0
      %v1728 = vadd.f32 0.0, %v1727
      %v1729 = vpop.f32.mrf.mxu0
      %v1730 = vpop.f32.mrf.mxu0
      %v1731 = vadd.f32 0.0, %v1730
      %v1732 = vpop.f32.mrf.mxu0
      %1733 = vmatprep.mubr.bf16.mxu0 0
      %1734 = vmatmul.mubr.bf16.gmra.mxu0 %v1614
      %v1735 = vpop.f32.mrf.mxu0
      %v1736 = vadd.f32 0.0, %v1735
      %v1737 = vpop.f32.mrf.mxu0
      %v1738 = vpop.f32.mrf.mxu0
      %v1739 = vadd.f32 0.0, %v1738
      %v1740 = vpop.f32.mrf.mxu0
      %1741 = vmatprep.mubr.bf16.mxu0 0
      %1742 = vmatmul.mubr.bf16.gmra.mxu0 %v1617
      %v1743 = vpop.f32.mrf.mxu0
      %v1744 = vadd.f32 0.0, %v1743
      %v1745 = vpop.f32.mrf.mxu0
      %v1746 = vpop.f32.mrf.mxu0
      %v1747 = vadd.f32 0.0, %v1746
      %v1748 = vpop.f32.mrf.mxu0
      %1749 = vmatprep.mubr.bf16.mxu0 0
      %1750 = vmatmul.mubr.bf16.gmra.mxu0 %v1620
      %v1751 = vpop.f32.mrf.mxu0
      %v1752 = vadd.f32 0.0, %v1751
      %v1753 = vpop.f32.mrf.mxu0
      %v1754 = vpop.f32.mrf.mxu0
      %v1755 = vadd.f32 0.0, %v1754
      %v1756 = vpop.f32.mrf.mxu0
      %1757 = vmatprep.mubr.bf16.mxu0 0
      %1758 = vmatmul.mubr.bf16.gmra.mxu0 %v1623
      %v1759 = vpop.f32.mrf.mxu0
      %v1760 = vadd.f32 0.0, %v1759
      %v1761 = vpop.f32.mrf.mxu0
      %v1762 = vpop.f32.mrf.mxu0
      %v1763 = vadd.f32 0.0, %v1762
      %v1764 = vpop.f32.mrf.mxu0
      %1765 = vmatprep.mubr.bf16.mxu0 0
      %1766 = vmatmul.mubr.bf16.gmra.mxu0 %v1626
      %v1767 = vpop.f32.mrf.mxu0
      %v1768 = vadd.f32 0.0, %v1767
      %v1769 = vpop.f32.mrf.mxu0
      %v1770 = vpop.f32.mrf.mxu0
      %v1771 = vadd.f32 0.0, %v1770
      %v1772 = vpop.f32.mrf.mxu0
      %1773 = vmatprep.mubr.bf16.mxu0 0
      %1774 = vmatmul.mubr.bf16.gmra.mxu0 %v1629
      %v1775 = vpop.f32.mrf.mxu0
      %v1776 = vadd.f32 0.0, %v1775
      %v1777 = vpop.f32.mrf.mxu0
      %v1778 = vpop.f32.mrf.mxu0
      %v1779 = vadd.f32 0.0, %v1778
      %v1780 = vpop.f32.mrf.mxu0
      %1781 = vmatprep.mubr.bf16.mxu0 0
      %1782 = vmatmul.mubr.bf16.gmra.mxu0 %v1632
      %v1783 = vpop.f32.mrf.mxu0
      %v1784 = vadd.f32 0.0, %v1783
      %v1785 = vpop.f32.mrf.mxu0
      %v1786 = vpop.f32.mrf.mxu0
      %v1787 = vadd.f32 0.0, %v1786
      %v1788 = vpop.f32.mrf.mxu0
      %1789 = vmatprep.mubr.bf16.mxu0 0
      %1790 = vmatmul.mubr.bf16.gmra.mxu0 %v1635
      %v1791 = vpop.f32.mrf.mxu0
      %v1792 = vadd.f32 0.0, %v1791
      %v1793 = vpop.f32.mrf.mxu0
      %v1794 = vpop.f32.mrf.mxu0
      %v1795 = vadd.f32 0.0, %v1794
      %v1796 = vpop.f32.mrf.mxu0
      %1797 = vdwg.mxu0
      %v1830 = vunpack.c.l.b16 %v796
      %v1831 = vunpack.c.l.b16 %v797
      %v1832 = vunpack.c.l.b16 %v798
      %v1833 = vunpack.c.l.b16 %v799
      %v1834 = vunpack.c.l.b16 %v800
      %v1835 = vunpack.c.l.b16 %v801
      %v1836 = vunpack.c.l.b16 %v802
      %v1837 = vunpack.c.l.b16 %v803
      %v1838 = vunpack.c.l.b16 %v804
      %v1839 = vunpack.c.l.b16 %v805
      %v1840 = vunpack.c.l.b16 %v806
      %v1841 = vunpack.c.l.b16 %v807
      %v1842 = vunpack.c.l.b16 %v808
      %v1843 = vunpack.c.l.b16 %v809
      %v1844 = vunpack.c.l.b16 %v810
      %v1845 = vunpack.c.l.b16 %v811
      %v1846 = vunpack.c.l.b16 %v812
      %v1847 = vunpack.c.l.b16 %v813
      %v1848 = vunpack.c.l.b16 %v814
      %v1849 = vunpack.c.l.b16 %v815
      %v1850 = vunpack.c.l.b16 %v816
      %v1851 = vunpack.c.l.b16 %v817
      %v1852 = vunpack.c.l.b16 %v818
      %v1853 = vunpack.c.l.b16 %v819
      %v1854 = vunpack.c.l.b16 %v820
      %v1855 = vunpack.c.l.b16 %v821
      %v1856 = vunpack.c.l.b16 %v822
      %v1857 = vunpack.c.l.b16 %v823
      %v1858 = vunpack.c.l.b16 %v824
      %v1859 = vunpack.c.l.b16 %v825
      %v1860 = vunpack.c.l.b16 %v826
      %v1861 = vunpack.c.l.b16 %v827
      %v1862 = vpack.c.b16 %v1831, %v1830
      %v1863 = vpack.c.b16 %v1833, %v1832
      %v1864 = vpack.c.b16 %v1835, %v1834
      %v1865 = vpack.c.b16 %v1837, %v1836
      %v1866 = vpack.c.b16 %v1839, %v1838
      %v1867 = vpack.c.b16 %v1841, %v1840
      %v1868 = vpack.c.b16 %v1843, %v1842
      %v1869 = vpack.c.b16 %v1845, %v1844
      %v1870 = vpack.c.b16 %v1847, %v1846
      %v1871 = vpack.c.b16 %v1849, %v1848
      %v1872 = vpack.c.b16 %v1851, %v1850
      %v1873 = vpack.c.b16 %v1853, %v1852
      %v1874 = vpack.c.b16 %v1855, %v1854
      %v1875 = vpack.c.b16 %v1857, %v1856
      %v1876 = vpack.c.b16 %v1859, %v1858
      %v1877 = vpack.c.b16 %v1861, %v1860
      %v1882 = vunpack.c.l.b16 %v1351
      %v1883 = vunpack.c.l.b16 %v1352
      %v1884 = vunpack.c.l.b16 %v1353
      %v1885 = vunpack.c.l.b16 %v1354
      %v1886 = vpack.c.b16 %v1883, %v1882
      %v1887 = vpack.c.b16 %v1885, %v1884
      %v1891 = vsel %vm1588, %v1862, 0
      %v1894 = vsel %vm1588, %v1863, 0
      %v1897 = vsel %vm1588, %v1864, 0
      %v1900 = vsel %vm1588, %v1865, 0
      %v1903 = vsel %vm1588, %v1866, 0
      %v1906 = vsel %vm1588, %v1867, 0
      %v1909 = vsel %vm1588, %v1868, 0
      %v1912 = vsel %vm1588, %v1869, 0
      %v1915 = vsel %vm1588, %v1870, 0
      %v1918 = vsel %vm1588, %v1871, 0
      %v1921 = vsel %vm1588, %v1872, 0
      %v1924 = vsel %vm1588, %v1873, 0
      %v1927 = vsel %vm1588, %v1874, 0
      %v1930 = vsel %vm1588, %v1875, 0
      %v1933 = vsel %vm1588, %v1876, 0
      %v1936 = vsel %vm1588, %v1877, 0
      %1938 = vmatprep.subr.bf16.mxu0 0
      %1939 = vmatpush1.bf16.msra.mxu0 0
      %1940 = vmatprep.subr.bf16.mxu0 0
      %1941 = vmatpush1.bf16.msra.mxu0 0
      %1942 = vmatprep.subr.bf16.mxu0 0
      %1943 = vmatpush1.bf16.msra.mxu0 0
      %1944 = vmatprep.subr.bf16.mxu0 0
      %1945 = vmatpush1.bf16.msra.mxu0 0
      %1946 = vmatprep.subr.bf16.mxu0 0
      %1947 = vmatpush1.bf16.msra.mxu0 0
      %1948 = vmatprep.subr.bf16.mxu0 0
      %1949 = vmatpush1.bf16.msra.mxu0 0
      %1950 = vmatprep.subr.bf16.mxu0 0
      %1951 = vmatpush1.bf16.msra.mxu0 %v1887
      %1952 = vmatprep.subr.bf16.mxu0 0
      %1953 = vmatpush1.bf16.msra.mxu0 %v1886
      %1954 = vmatprep.subr.bf16.mxu0 0
      %1955 = vmatpush2.bf16.msra.mxu0 0
      %1956 = vmatprep.subr.bf16.mxu0 0
      %1957 = vmatpush2.bf16.msra.mxu0 0
      %1958 = vmatprep.subr.bf16.mxu0 0
      %1959 = vmatpush2.bf16.msra.mxu0 0
      %1960 = vmatprep.subr.bf16.mxu0 0
      %1961 = vmatpush2.bf16.msra.mxu0 0
      %1962 = vmatprep.subr.bf16.mxu0 0
      %1963 = vmatpush2.bf16.msra.mxu0 0
      %1964 = vmatprep.subr.bf16.mxu0 0
      %1965 = vmatpush2.bf16.msra.mxu0 0
      %1966 = vmatprep.subr.bf16.mxu0 0
      %1967 = vmatpush2.bf16.msra.mxu0 0
      %1968 = vmatprep.subr.bf16.mxu0 0
      %1969 = vmatpush2.bf16.msra.mxu0 0
      %1970 = vmatprep.mubr.bf16.mxu0 0
      %1971 = vmatmul.mubr.bf16.gmra.mxu0 %v1891
      %v1972 = vpop.f32.mrf.mxu0
      %v1973 = vadd.f32 %v1672, %v1972
      %v1974 = vpop.f32.mrf.mxu0
      %v1975 = vpop.f32.mrf.mxu0
      %v1976 = vadd.f32 %v1675, %v1975
      %v1977 = vpop.f32.mrf.mxu0
      %1978 = vmatprep.mubr.bf16.mxu0 0
      %1979 = vmatmul.mubr.bf16.gmra.mxu0 %v1894
      %v1980 = vpop.f32.mrf.mxu0
      %v1981 = vadd.f32 %v1680, %v1980
      %v1982 = vpop.f32.mrf.mxu0
      %v1983 = vpop.f32.mrf.mxu0
      %v1984 = vadd.f32 %v1683, %v1983
      %v1985 = vpop.f32.mrf.mxu0
      %1986 = vmatprep.mubr.bf16.mxu0 0
      %1987 = vmatmul.mubr.bf16.gmra.mxu0 %v1897
      %v1988 = vpop.f32.mrf.mxu0
      %v1989 = vadd.f32 %v1688, %v1988
      %v1990 = vpop.f32.mrf.mxu0
      %v1991 = vpop.f32.mrf.mxu0
      %v1992 = vadd.f32 %v1691, %v1991
      %v1993 = vpop.f32.mrf.mxu0
      %1994 = vmatprep.mubr.bf16.mxu0 0
      %1995 = vmatmul.mubr.bf16.gmra.mxu0 %v1900
      %v1996 = vpop.f32.mrf.mxu0
      %v1997 = vadd.f32 %v1696, %v1996
      %v1998 = vpop.f32.mrf.mxu0
      %v1999 = vpop.f32.mrf.mxu0
      %v2000 = vadd.f32 %v1699, %v1999
      %v2001 = vpop.f32.mrf.mxu0
      %2002 = vmatprep.mubr.bf16.mxu0 0
      %2003 = vmatmul.mubr.bf16.gmra.mxu0 %v1903
      %v2004 = vpop.f32.mrf.mxu0
      %v2005 = vadd.f32 %v1704, %v2004
      %v2006 = vpop.f32.mrf.mxu0
      %v2007 = vpop.f32.mrf.mxu0
      %v2008 = vadd.f32 %v1707, %v2007
      %v2009 = vpop.f32.mrf.mxu0
      %2010 = vmatprep.mubr.bf16.mxu0 0
      %2011 = vmatmul.mubr.bf16.gmra.mxu0 %v1906
      %v2012 = vpop.f32.mrf.mxu0
      %v2013 = vadd.f32 %v1712, %v2012
      %v2014 = vpop.f32.mrf.mxu0
      %v2015 = vpop.f32.mrf.mxu0
      %v2016 = vadd.f32 %v1715, %v2015
      %v2017 = vpop.f32.mrf.mxu0
      %2018 = vmatprep.mubr.bf16.mxu0 0
      %2019 = vmatmul.mubr.bf16.gmra.mxu0 %v1909
      %v2020 = vpop.f32.mrf.mxu0
      %v2021 = vadd.f32 %v1720, %v2020
      %v2022 = vpop.f32.mrf.mxu0
      %v2023 = vpop.f32.mrf.mxu0
      %v2024 = vadd.f32 %v1723, %v2023
      %v2025 = vpop.f32.mrf.mxu0
      %2026 = vmatprep.mubr.bf16.mxu0 0
      %2027 = vmatmul.mubr.bf16.gmra.mxu0 %v1912
      %v2028 = vpop.f32.mrf.mxu0
      %v2029 = vadd.f32 %v1728, %v2028
      %v2030 = vpop.f32.mrf.mxu0
      %v2031 = vpop.f32.mrf.mxu0
      %v2032 = vadd.f32 %v1731, %v2031
      %v2033 = vpop.f32.mrf.mxu0
      %2034 = vmatprep.mubr.bf16.mxu0 0
      %2035 = vmatmul.mubr.bf16.gmra.mxu0 %v1915
      %v2036 = vpop.f32.mrf.mxu0
      %v2037 = vadd.f32 %v1736, %v2036
      %v2038 = vpop.f32.mrf.mxu0
      %v2039 = vpop.f32.mrf.mxu0
      %v2040 = vadd.f32 %v1739, %v2039
      %v2041 = vpop.f32.mrf.mxu0
      %2042 = vmatprep.mubr.bf16.mxu0 0
      %2043 = vmatmul.mubr.bf16.gmra.mxu0 %v1918
      %v2044 = vpop.f32.mrf.mxu0
      %v2045 = vadd.f32 %v1744, %v2044
      %v2046 = vpop.f32.mrf.mxu0
      %v2047 = vpop.f32.mrf.mxu0
      %v2048 = vadd.f32 %v1747, %v2047
      %v2049 = vpop.f32.mrf.mxu0
      %2050 = vmatprep.mubr.bf16.mxu0 0
      %2051 = vmatmul.mubr.bf16.gmra.mxu0 %v1921
      %v2052 = vpop.f32.mrf.mxu0
      %v2053 = vadd.f32 %v1752, %v2052
      %v2054 = vpop.f32.mrf.mxu0
      %v2055 = vpop.f32.mrf.mxu0
      %v2056 = vadd.f32 %v1755, %v2055
      %v2057 = vpop.f32.mrf.mxu0
      %2058 = vmatprep.mubr.bf16.mxu0 0
      %2059 = vmatmul.mubr.bf16.gmra.mxu0 %v1924
      %v2060 = vpop.f32.mrf.mxu0
      %v2061 = vadd.f32 %v1760, %v2060
      %v2062 = vpop.f32.mrf.mxu0
      %v2063 = vpop.f32.mrf.mxu0
      %v2064 = vadd.f32 %v1763, %v2063
      %v2065 = vpop.f32.mrf.mxu0
      %2066 = vmatprep.mubr.bf16.mxu0 0
      %2067 = vmatmul.mubr.bf16.gmra.mxu0 %v1927
      %v2068 = vpop.f32.mrf.mxu0
      %v2069 = vadd.f32 %v1768, %v2068
      %v2070 = vpop.f32.mrf.mxu0
      %v2071 = vpop.f32.mrf.mxu0
      %v2072 = vadd.f32 %v1771, %v2071
      %v2073 = vpop.f32.mrf.mxu0
      %2074 = vmatprep.mubr.bf16.mxu0 0
      %2075 = vmatmul.mubr.bf16.gmra.mxu0 %v1930
      %v2076 = vpop.f32.mrf.mxu0
      %v2077 = vadd.f32 %v1776, %v2076
      %v2078 = vpop.f32.mrf.mxu0
      %v2079 = vpop.f32.mrf.mxu0
      %v2080 = vadd.f32 %v1779, %v2079
      %v2081 = vpop.f32.mrf.mxu0
      %2082 = vmatprep.mubr.bf16.mxu0 0
      %2083 = vmatmul.mubr.bf16.gmra.mxu0 %v1933
      %v2084 = vpop.f32.mrf.mxu0
      %v2085 = vadd.f32 %v1784, %v2084
      %v2086 = vpop.f32.mrf.mxu0
      %v2087 = vpop.f32.mrf.mxu0
      %v2088 = vadd.f32 %v1787, %v2087
      %v2089 = vpop.f32.mrf.mxu0
      %2090 = vmatprep.mubr.bf16.mxu0 0
      %2091 = vmatmul.mubr.bf16.gmra.mxu0 %v1936
      %v2092 = vpop.f32.mrf.mxu0
      %v2093 = vadd.f32 %v1792, %v2092
      %v2094 = vpop.f32.mrf.mxu0
      %v2095 = vpop.f32.mrf.mxu0
      %v2096 = vadd.f32 %v1795, %v2095
      %v2097 = vpop.f32.mrf.mxu0
      %2098 = vdwg.mxu0
      %s2099 = scalar_lea.vmem %s275, 32
      %v2100 = vld [vmem:[%s2099] sm:$0xf]
      %v2101 = vld [vmem:[%s2099 + $0x4] sm:$0xf]
      %v2102 = vld [vmem:[%s2099 + $0x8] sm:$0xf]
      %v2103 = vld [vmem:[%s2099 + $0xc] sm:$0xf]
      %v2137 = vunpack.c.l.b16 %v1314
      %v2138 = vunpack.c.l.b16 %v1315
      %v2139 = vunpack.c.l.b16 %v1316
      %v2140 = vunpack.c.l.b16 %v1317
      %v2141 = vunpack.c.l.b16 %v1318
      %v2142 = vunpack.c.l.b16 %v1319
      %v2143 = vunpack.c.l.b16 %v1320
      %v2144 = vunpack.c.l.b16 %v1321
      %v2145 = vunpack.c.l.b16 %v1322
      %v2146 = vunpack.c.l.b16 %v1323
      %v2147 = vunpack.c.l.b16 %v1324
      %v2148 = vunpack.c.l.b16 %v1325
      %v2149 = vunpack.c.l.b16 %v1326
      %v2150 = vunpack.c.l.b16 %v1327
      %v2151 = vunpack.c.l.b16 %v1328
      %v2152 = vunpack.c.l.b16 %v1329
      %v2153 = vunpack.c.l.b16 %v1330
      %v2154 = vunpack.c.l.b16 %v1331
      %v2155 = vunpack.c.l.b16 %v1332
      %v2156 = vunpack.c.l.b16 %v1333
      %v2157 = vunpack.c.l.b16 %v1334
      %v2158 = vunpack.c.l.b16 %v1335
      %v2159 = vunpack.c.l.b16 %v1336
      %v2160 = vunpack.c.l.b16 %v1337
      %v2161 = vunpack.c.l.b16 %v1338
      %v2162 = vunpack.c.l.b16 %v1339
      %v2163 = vunpack.c.l.b16 %v1340
      %v2164 = vunpack.c.l.b16 %v1341
      %v2165 = vunpack.c.l.b16 %v1342
      %v2166 = vunpack.c.l.b16 %v1343
      %v2167 = vunpack.c.l.b16 %v1344
      %v2168 = vunpack.c.l.b16 %v1345
      %v2169 = vunpack.c.l.b16 %v1346
      %v2170 = vpack.c.b16 %v2138, %v2137
      %v2171 = vpack.c.b16 %v2140, %v2139
      %v2172 = vpack.c.b16 %v2142, %v2141
      %v2173 = vpack.c.b16 %v2144, %v2143
      %v2174 = vpack.c.b16 %v2146, %v2145
      %v2175 = vpack.c.b16 %v2148, %v2147
      %v2176 = vpack.c.b16 %v2150, %v2149
      %v2177 = vpack.c.b16 %v2152, %v2151
      %v2178 = vpack.c.b16 %v2154, %v2153
      %v2179 = vpack.c.b16 %v2156, %v2155
      %v2180 = vpack.c.b16 %v2158, %v2157
      %v2181 = vpack.c.b16 %v2160, %v2159
      %v2182 = vpack.c.b16 %v2162, %v2161
      %v2183 = vpack.c.b16 %v2164, %v2163
      %v2184 = vpack.c.b16 %v2166, %v2165
      %v2185 = vpack.c.b16 %v2168, %v2167
      %v2186 = vpack.c.b16 %v2169, %v2169
      %vm2187 = vcmask 1046528
      %v2188 = vrot.slane %v2170, 1
      %v2189 = vrot.slane %v2171, 1
      %v2190 = vsel %vm2187, %v2188, %v2189
      %v2191 = vrot.slane %v2172, 1
      %v2192 = vsel %vm2187, %v2189, %v2191
      %v2193 = vrot.slane %v2173, 1
      %v2194 = vsel %vm2187, %v2191, %v2193
      %v2195 = vrot.slane %v2174, 1
      %v2196 = vsel %vm2187, %v2193, %v2195
      %v2197 = vrot.slane %v2175, 1
      %v2198 = vsel %vm2187, %v2195, %v2197
      %v2199 = vrot.slane %v2176, 1
      %v2200 = vsel %vm2187, %v2197, %v2199
      %v2201 = vrot.slane %v2177, 1
      %v2202 = vsel %vm2187, %v2199, %v2201
      %v2203 = vrot.slane %v2178, 1
      %v2204 = vsel %vm2187, %v2201, %v2203
      %v2205 = vrot.slane %v2179, 1
      %v2206 = vsel %vm2187, %v2203, %v2205
      %v2207 = vrot.slane %v2180, 1
      %v2208 = vsel %vm2187, %v2205, %v2207
      %v2209 = vrot.slane %v2181, 1
      %v2210 = vsel %vm2187, %v2207, %v2209
      %v2211 = vrot.slane %v2182, 1
      %v2212 = vsel %vm2187, %v2209, %v2211
      %v2213 = vrot.slane %v2183, 1
      %v2214 = vsel %vm2187, %v2211, %v2213
      %v2215 = vrot.slane %v2184, 1
      %v2216 = vsel %vm2187, %v2213, %v2215
      %v2217 = vrot.slane %v2185, 1
      %v2218 = vsel %vm2187, %v2215, %v2217
      %v2219 = vrot.slane %v2186, 1
      %v2220 = vsel %vm2187, %v2217, %v2219
      %v2225 = vunpack.c.l.b16 %v2100
      %v2226 = vunpack.c.l.b16 %v2101
      %v2227 = vunpack.c.l.b16 %v2102
      %v2228 = vunpack.c.l.b16 %v2103
      %v2229 = vpack.c.b16 %v2226, %v2225
      %v2230 = vpack.c.b16 %v2228, %v2227
      %v2234 = vsel %vm1588, %v2190, 0
      %v2237 = vsel %vm1588, %v2192, 0
      %v2240 = vsel %vm1588, %v2194, 0
      %v2243 = vsel %vm1588, %v2196, 0
      %v2246 = vsel %vm1588, %v2198, 0
      %v2249 = vsel %vm1588, %v2200, 0
      %v2252 = vsel %vm1588, %v2202, 0
      %v2255 = vsel %vm1588, %v2204, 0
      %v2258 = vsel %vm1588, %v2206, 0
      %v2261 = vsel %vm1588, %v2208, 0
      %v2264 = vsel %vm1588, %v2210, 0
      %v2267 = vsel %vm1588, %v2212, 0
      %v2270 = vsel %vm1588, %v2214, 0
      %v2273 = vsel %vm1588, %v2216, 0
      %v2276 = vsel %vm1588, %v2218, 0
      %v2279 = vsel %vm1588, %v2220, 0
      %2281 = vmatprep.subr.bf16.mxu0 0
      %2282 = vmatpush1.bf16.msra.mxu0 0
      %2283 = vmatprep.subr.bf16.mxu0 0
      %2284 = vmatpush1.bf16.msra.mxu0 0
      %2285 = vmatprep.subr.bf16.mxu0 0
      %2286 = vmatpush1.bf16.msra.mxu0 0
      %2287 = vmatprep.subr.bf16.mxu0 0
      %2288 = vmatpush1.bf16.msra.mxu0 0
      %2289 = vmatprep.subr.bf16.mxu0 0
      %2290 = vmatpush1.bf16.msra.mxu0 0
      %2291 = vmatprep.subr.bf16.mxu0 0
      %2292 = vmatpush1.bf16.msra.mxu0 0
      %2293 = vmatprep.subr.bf16.mxu0 0
      %2294 = vmatpush1.bf16.msra.mxu0 %v2230
      %2295 = vmatprep.subr.bf16.mxu0 0
      %2296 = vmatpush1.bf16.msra.mxu0 %v2229
      %2297 = vmatprep.subr.bf16.mxu0 0
      %2298 = vmatpush2.bf16.msra.mxu0 0
      %2299 = vmatprep.subr.bf16.mxu0 0
      %2300 = vmatpush2.bf16.msra.mxu0 0
      %2301 = vmatprep.subr.bf16.mxu0 0
      %2302 = vmatpush2.bf16.msra.mxu0 0
      %2303 = vmatprep.subr.bf16.mxu0 0
      %2304 = vmatpush2.bf16.msra.mxu0 0
      %2305 = vmatprep.subr.bf16.mxu0 0
      %2306 = vmatpush2.bf16.msra.mxu0 0
      %2307 = vmatprep.subr.bf16.mxu0 0
      %2308 = vmatpush2.bf16.msra.mxu0 0
      %2309 = vmatprep.subr.bf16.mxu0 0
      %2310 = vmatpush2.bf16.msra.mxu0 0
      %2311 = vmatprep.subr.bf16.mxu0 0
      %2312 = vmatpush2.bf16.msra.mxu0 0
      %2313 = vmatprep.mubr.bf16.mxu0 0
      %2314 = vmatmul.mubr.bf16.gmra.mxu0 %v2234
      %v2315 = vpop.f32.mrf.mxu0
      %v2316 = vadd.f32 0.0, %v2315
      %v2317 = vpop.f32.mrf.mxu0
      %v2318 = vpop.f32.mrf.mxu0
      %v2319 = vadd.f32 0.0, %v2318
      %v2320 = vpop.f32.mrf.mxu0
      %2321 = vmatprep.mubr.bf16.mxu0 0
      %2322 = vmatmul.mubr.bf16.gmra.mxu0 %v2237
      %v2323 = vpop.f32.mrf.mxu0
      %v2324 = vadd.f32 0.0, %v2323
      %v2325 = vpop.f32.mrf.mxu0
      %v2326 = vpop.f32.mrf.mxu0
      %v2327 = vadd.f32 0.0, %v2326
      %v2328 = vpop.f32.mrf.mxu0
      %2329 = vmatprep.mubr.bf16.mxu0 0
      %2330 = vmatmul.mubr.bf16.gmra.mxu0 %v2240
      %v2331 = vpop.f32.mrf.mxu0
      %v2332 = vadd.f32 0.0, %v2331
      %v2333 = vpop.f32.mrf.mxu0
      %v2334 = vpop.f32.mrf.mxu0
      %v2335 = vadd.f32 0.0, %v2334
      %v2336 = vpop.f32.mrf.mxu0
      %2337 = vmatprep.mubr.bf16.mxu0 0
      %2338 = vmatmul.mubr.bf16.gmra.mxu0 %v2243
      %v2339 = vpop.f32.mrf.mxu0
      %v2340 = vadd.f32 0.0, %v2339
      %v2341 = vpop.f32.mrf.mxu0
      %v2342 = vpop.f32.mrf.mxu0
      %v2343 = vadd.f32 0.0, %v2342
      %v2344 = vpop.f32.mrf.mxu0
      %2345 = vmatprep.mubr.bf16.mxu0 0
      %2346 = vmatmul.mubr.bf16.gmra.mxu0 %v2246
      %v2347 = vpop.f32.mrf.mxu0
      %v2348 = vadd.f32 0.0, %v2347
      %v2349 = vpop.f32.mrf.mxu0
      %v2350 = vpop.f32.mrf.mxu0
      %v2351 = vadd.f32 0.0, %v2350
      %v2352 = vpop.f32.mrf.mxu0
      %2353 = vmatprep.mubr.bf16.mxu0 0
      %2354 = vmatmul.mubr.bf16.gmra.mxu0 %v2249
      %v2355 = vpop.f32.mrf.mxu0
      %v2356 = vadd.f32 0.0, %v2355
      %v2357 = vpop.f32.mrf.mxu0
      %v2358 = vpop.f32.mrf.mxu0
      %v2359 = vadd.f32 0.0, %v2358
      %v2360 = vpop.f32.mrf.mxu0
      %2361 = vmatprep.mubr.bf16.mxu0 0
      %2362 = vmatmul.mubr.bf16.gmra.mxu0 %v2252
      %v2363 = vpop.f32.mrf.mxu0
      %v2364 = vadd.f32 0.0, %v2363
      %v2365 = vpop.f32.mrf.mxu0
      %v2366 = vpop.f32.mrf.mxu0
      %v2367 = vadd.f32 0.0, %v2366
      %v2368 = vpop.f32.mrf.mxu0
      %2369 = vmatprep.mubr.bf16.mxu0 0
      %2370 = vmatmul.mubr.bf16.gmra.mxu0 %v2255
      %v2371 = vpop.f32.mrf.mxu0
      %v2372 = vadd.f32 0.0, %v2371
      %v2373 = vpop.f32.mrf.mxu0
      %v2374 = vpop.f32.mrf.mxu0
      %v2375 = vadd.f32 0.0, %v2374
      %v2376 = vpop.f32.mrf.mxu0
      %2377 = vmatprep.mubr.bf16.mxu0 0
      %2378 = vmatmul.mubr.bf16.gmra.mxu0 %v2258
      %v2379 = vpop.f32.mrf.mxu0
      %v2380 = vadd.f32 0.0, %v2379
      %v2381 = vpop.f32.mrf.mxu0
      %v2382 = vpop.f32.mrf.mxu0
      %v2383 = vadd.f32 0.0, %v2382
      %v2384 = vpop.f32.mrf.mxu0
      %2385 = vmatprep.mubr.bf16.mxu0 0
      %2386 = vmatmul.mubr.bf16.gmra.mxu0 %v2261
      %v2387 = vpop.f32.mrf.mxu0
      %v2388 = vadd.f32 0.0, %v2387
      %v2389 = vpop.f32.mrf.mxu0
      %v2390 = vpop.f32.mrf.mxu0
      %v2391 = vadd.f32 0.0, %v2390
      %v2392 = vpop.f32.mrf.mxu0
      %2393 = vmatprep.mubr.bf16.mxu0 0
      %2394 = vmatmul.mubr.bf16.gmra.mxu0 %v2264
      %v2395 = vpop.f32.mrf.mxu0
      %v2396 = vadd.f32 0.0, %v2395
      %v2397 = vpop.f32.mrf.mxu0
      %v2398 = vpop.f32.mrf.mxu0
      %v2399 = vadd.f32 0.0, %v2398
      %v2400 = vpop.f32.mrf.mxu0
      %2401 = vmatprep.mubr.bf16.mxu0 0
      %2402 = vmatmul.mubr.bf16.gmra.mxu0 %v2267
      %v2403 = vpop.f32.mrf.mxu0
      %v2404 = vadd.f32 0.0, %v2403
      %v2405 = vpop.f32.mrf.mxu0
      %v2406 = vpop.f32.mrf.mxu0
      %v2407 = vadd.f32 0.0, %v2406
      %v2408 = vpop.f32.mrf.mxu0
      %2409 = vmatprep.mubr.bf16.mxu0 0
      %2410 = vmatmul.mubr.bf16.gmra.mxu0 %v2270
      %v2411 = vpop.f32.mrf.mxu0
      %v2412 = vadd.f32 0.0, %v2411
      %v2413 = vpop.f32.mrf.mxu0
      %v2414 = vpop.f32.mrf.mxu0
      %v2415 = vadd.f32 0.0, %v2414
      %v2416 = vpop.f32.mrf.mxu0
      %2417 = vmatprep.mubr.bf16.mxu0 0
      %2418 = vmatmul.mubr.bf16.gmra.mxu0 %v2273
      %v2419 = vpop.f32.mrf.mxu0
      %v2420 = vadd.f32 0.0, %v2419
      %v2421 = vpop.f32.mrf.mxu0
      %v2422 = vpop.f32.mrf.mxu0
      %v2423 = vadd.f32 0.0, %v2422
      %v2424 = vpop.f32.mrf.mxu0
      %2425 = vmatprep.mubr.bf16.mxu0 0
      %2426 = vmatmul.mubr.bf16.gmra.mxu0 %v2276
      %v2427 = vpop.f32.mrf.mxu0
      %v2428 = vadd.f32 0.0, %v2427
      %v2429 = vpop.f32.mrf.mxu0
      %v2430 = vpop.f32.mrf.mxu0
      %v2431 = vadd.f32 0.0, %v2430
      %v2432 = vpop.f32.mrf.mxu0
      %2433 = vmatprep.mubr.bf16.mxu0 0
      %2434 = vmatmul.mubr.bf16.gmra.mxu0 %v2279
      %v2435 = vpop.f32.mrf.mxu0
      %v2436 = vadd.f32 0.0, %v2435
      %v2437 = vpop.f32.mrf.mxu0
      %v2438 = vpop.f32.mrf.mxu0
      %v2439 = vadd.f32 0.0, %v2438
      %v2440 = vpop.f32.mrf.mxu0
      %2441 = vdwg.mxu0
      %v2442 = vadd.f32 %v1973, %v2316
      %v2443 = vadd.f32 %v1976, %v2319
      %v2444 = vadd.f32 %v1981, %v2324
      %v2445 = vadd.f32 %v1984, %v2327
      %v2446 = vadd.f32 %v1989, %v2332
      %v2447 = vadd.f32 %v1992, %v2335
      %v2448 = vadd.f32 %v1997, %v2340
      %v2449 = vadd.f32 %v2000, %v2343
      %v2450 = vadd.f32 %v2005, %v2348
      %v2451 = vadd.f32 %v2008, %v2351
      %v2452 = vadd.f32 %v2013, %v2356
      %v2453 = vadd.f32 %v2016, %v2359
      %v2454 = vadd.f32 %v2021, %v2364
      %v2455 = vadd.f32 %v2024, %v2367
      %v2456 = vadd.f32 %v2029, %v2372
      %v2457 = vadd.f32 %v2032, %v2375
      %v2458 = vadd.f32 %v2037, %v2380
      %v2459 = vadd.f32 %v2040, %v2383
      %v2460 = vadd.f32 %v2045, %v2388
      %v2461 = vadd.f32 %v2048, %v2391
      %v2462 = vadd.f32 %v2053, %v2396
      %v2463 = vadd.f32 %v2056, %v2399
      %v2464 = vadd.f32 %v2061, %v2404
      %v2465 = vadd.f32 %v2064, %v2407
      %v2466 = vadd.f32 %v2069, %v2412
      %v2467 = vadd.f32 %v2072, %v2415
      %v2468 = vadd.f32 %v2077, %v2420
      %v2469 = vadd.f32 %v2080, %v2423
      %v2470 = vadd.f32 %v2085, %v2428
      %v2471 = vadd.f32 %v2088, %v2431
      %v2472 = vadd.f32 %v2093, %v2436
      %v2473 = vadd.f32 %v2096, %v2439
      %s2474 = scalar_lea.vmem %s275, 48
      %v2475 = vld [vmem:[%s2474] sm:$0xf]
      %v2476 = vld [vmem:[%s2474 + $0x4] sm:$0xf]
      %v2477 = vld [vmem:[%s2474 + $0x8] sm:$0xf]
      %v2478 = vld [vmem:[%s2474 + $0xc] sm:$0xf]
      %v2481 = vunpack.c.l.b16 %v828
      %v2482 = vunpack.c.l.b16 %v829
      %v2483 = vpack.c.b16 %v2482, %v2481
      %v2488 = vunpack.c.l.b16 %v2475
      %v2489 = vunpack.c.l.b16 %v2476
      %v2490 = vunpack.c.l.b16 %v2477
      %v2491 = vunpack.c.l.b16 %v2478
      %v2492 = vpack.c.b16 %v2489, %v2488
      %v2493 = vpack.c.b16 %v2491, %v2490
      %v2497 = vsel %vm1588, %v2483, 0
      %2499 = vmatprep.subr.bf16.mxu0 0
      %2500 = vmatpush1.bf16.msra.mxu0 0
      %2501 = vmatprep.subr.bf16.mxu0 0
      %2502 = vmatpush1.bf16.msra.mxu0 0
      %2503 = vmatprep.subr.bf16.mxu0 0
      %2504 = vmatpush1.bf16.msra.mxu0 0
      %2505 = vmatprep.subr.bf16.mxu0 0
      %2506 = vmatpush1.bf16.msra.mxu0 0
      %2507 = vmatprep.subr.bf16.mxu0 0
      %2508 = vmatpush1.bf16.msra.mxu0 0
      %2509 = vmatprep.subr.bf16.mxu0 0
      %2510 = vmatpush1.bf16.msra.mxu0 0
      %2511 = vmatprep.subr.bf16.mxu0 0
      %2512 = vmatpush1.bf16.msra.mxu0 %v2493
      %2513 = vmatprep.subr.bf16.mxu0 0
      %2514 = vmatpush1.bf16.msra.mxu0 %v2492
      %2515 = vmatprep.subr.bf16.mxu0 0
      %2516 = vmatpush2.bf16.msra.mxu0 0
      %2517 = vmatprep.subr.bf16.mxu0 0
      %2518 = vmatpush2.bf16.msra.mxu0 0
      %2519 = vmatprep.subr.bf16.mxu0 0
      %2520 = vmatpush2.bf16.msra.mxu0 0
      %2521 = vmatprep.subr.bf16.mxu0 0
      %2522 = vmatpush2.bf16.msra.mxu0 0
      %2523 = vmatprep.subr.bf16.mxu0 0
      %2524 = vmatpush2.bf16.msra.mxu0 0
      %2525 = vmatprep.subr.bf16.mxu0 0
      %2526 = vmatpush2.bf16.msra.mxu0 0
      %2527 = vmatprep.subr.bf16.mxu0 0
      %2528 = vmatpush2.bf16.msra.mxu0 0
      %2529 = vmatprep.subr.bf16.mxu0 0
      %2530 = vmatpush2.bf16.msra.mxu0 0
      %2531 = vmatprep.mubr.bf16.mxu0 0
      %2532 = vmatmul.mubr.bf16.gmra.mxu0 %v1894
      %v2533 = vpop.f32.mrf.mxu0
      %v2534 = vadd.f32 0.0, %v2533
      %v2535 = vpop.f32.mrf.mxu0
      %v2536 = vpop.f32.mrf.mxu0
      %v2537 = vadd.f32 0.0, %v2536
      %v2538 = vpop.f32.mrf.mxu0
      %2539 = vmatprep.mubr.bf16.mxu0 0
      %2540 = vmatmul.mubr.bf16.gmra.mxu0 %v1897
      %v2541 = vpop.f32.mrf.mxu0
      %v2542 = vadd.f32 0.0, %v2541
      %v2543 = vpop.f32.mrf.mxu0
      %v2544 = vpop.f32.mrf.mxu0
      %v2545 = vadd.f32 0.0, %v2544
      %v2546 = vpop.f32.mrf.mxu0
      %2547 = vmatprep.mubr.bf16.mxu0 0
      %2548 = vmatmul.mubr.bf16.gmra.mxu0 %v1900
      %v2549 = vpop.f32.mrf.mxu0
      %v2550 = vadd.f32 0.0, %v2549
      %v2551 = vpop.f32.mrf.mxu0
      %v2552 = vpop.f32.mrf.mxu0
      %v2553 = vadd.f32 0.0, %v2552
      %v2554 = vpop.f32.mrf.mxu0
      %2555 = vmatprep.mubr.bf16.mxu0 0
      %2556 = vmatmul.mubr.bf16.gmra.mxu0 %v1903
      %v2557 = vpop.f32.mrf.mxu0
      %v2558 = vadd.f32 0.0, %v2557
      %v2559 = vpop.f32.mrf.mxu0
      %v2560 = vpop.f32.mrf.mxu0
      %v2561 = vadd.f32 0.0, %v2560
      %v2562 = vpop.f32.mrf.mxu0
      %2563 = vmatprep.mubr.bf16.mxu0 0
      %2564 = vmatmul.mubr.bf16.gmra.mxu0 %v1906
      %v2565 = vpop.f32.mrf.mxu0
      %v2566 = vadd.f32 0.0, %v2565
      %v2567 = vpop.f32.mrf.mxu0
      %v2568 = vpop.f32.mrf.mxu0
      %v2569 = vadd.f32 0.0, %v2568
      %v2570 = vpop.f32.mrf.mxu0
      %2571 = vmatprep.mubr.bf16.mxu0 0
      %2572 = vmatmul.mubr.bf16.gmra.mxu0 %v1909
      %v2573 = vpop.f32.mrf.mxu0
      %v2574 = vadd.f32 0.0, %v2573
      %v2575 = vpop.f32.mrf.mxu0
      %v2576 = vpop.f32.mrf.mxu0
      %v2577 = vadd.f32 0.0, %v2576
      %v2578 = vpop.f32.mrf.mxu0
      %2579 = vmatprep.mubr.bf16.mxu0 0
      %2580 = vmatmul.mubr.bf16.gmra.mxu0 %v1912
      %v2581 = vpop.f32.mrf.mxu0
      %v2582 = vadd.f32 0.0, %v2581
      %v2583 = vpop.f32.mrf.mxu0
      %v2584 = vpop.f32.mrf.mxu0
      %v2585 = vadd.f32 0.0, %v2584
      %v2586 = vpop.f32.mrf.mxu0
      %2587 = vmatprep.mubr.bf16.mxu0 0
      %2588 = vmatmul.mubr.bf16.gmra.mxu0 %v1915
      %v2589 = vpop.f32.mrf.mxu0
      %v2590 = vadd.f32 0.0, %v2589
      %v2591 = vpop.f32.mrf.mxu0
      %v2592 = vpop.f32.mrf.mxu0
      %v2593 = vadd.f32 0.0, %v2592
      %v2594 = vpop.f32.mrf.mxu0
      %2595 = vmatprep.mubr.bf16.mxu0 0
      %2596 = vmatmul.mubr.bf16.gmra.mxu0 %v1918
      %v2597 = vpop.f32.mrf.mxu0
      %v2598 = vadd.f32 0.0, %v2597
      %v2599 = vpop.f32.mrf.mxu0
      %v2600 = vpop.f32.mrf.mxu0
      %v2601 = vadd.f32 0.0, %v2600
      %v2602 = vpop.f32.mrf.mxu0
      %2603 = vmatprep.mubr.bf16.mxu0 0
      %2604 = vmatmul.mubr.bf16.gmra.mxu0 %v1921
      %v2605 = vpop.f32.mrf.mxu0
      %v2606 = vadd.f32 0.0, %v2605
      %v2607 = vpop.f32.mrf.mxu0
      %v2608 = vpop.f32.mrf.mxu0
      %v2609 = vadd.f32 0.0, %v2608
      %v2610 = vpop.f32.mrf.mxu0
      %2611 = vmatprep.mubr.bf16.mxu0 0
      %2612 = vmatmul.mubr.bf16.gmra.mxu0 %v1924
      %v2613 = vpop.f32.mrf.mxu0
      %v2614 = vadd.f32 0.0, %v2613
      %v2615 = vpop.f32.mrf.mxu0
      %v2616 = vpop.f32.mrf.mxu0
      %v2617 = vadd.f32 0.0, %v2616
      %v2618 = vpop.f32.mrf.mxu0
      %2619 = vmatprep.mubr.bf16.mxu0 0
      %2620 = vmatmul.mubr.bf16.gmra.mxu0 %v1927
      %v2621 = vpop.f32.mrf.mxu0
      %v2622 = vadd.f32 0.0, %v2621
      %v2623 = vpop.f32.mrf.mxu0
      %v2624 = vpop.f32.mrf.mxu0
      %v2625 = vadd.f32 0.0, %v2624
      %v2626 = vpop.f32.mrf.mxu0
      %2627 = vmatprep.mubr.bf16.mxu0 0
      %2628 = vmatmul.mubr.bf16.gmra.mxu0 %v1930
      %v2629 = vpop.f32.mrf.mxu0
      %v2630 = vadd.f32 0.0, %v2629
      %v2631 = vpop.f32.mrf.mxu0
      %v2632 = vpop.f32.mrf.mxu0
      %v2633 = vadd.f32 0.0, %v2632
      %v2634 = vpop.f32.mrf.mxu0
      %2635 = vmatprep.mubr.bf16.mxu0 0
      %2636 = vmatmul.mubr.bf16.gmra.mxu0 %v1933
      %v2637 = vpop.f32.mrf.mxu0
      %v2638 = vadd.f32 0.0, %v2637
      %v2639 = vpop.f32.mrf.mxu0
      %v2640 = vpop.f32.mrf.mxu0
      %v2641 = vadd.f32 0.0, %v2640
      %v2642 = vpop.f32.mrf.mxu0
      %2643 = vmatprep.mubr.bf16.mxu0 0
      %2644 = vmatmul.mubr.bf16.gmra.mxu0 %v1936
      %v2645 = vpop.f32.mrf.mxu0
      %v2646 = vadd.f32 0.0, %v2645
      %v2647 = vpop.f32.mrf.mxu0
      %v2648 = vpop.f32.mrf.mxu0
      %v2649 = vadd.f32 0.0, %v2648
      %v2650 = vpop.f32.mrf.mxu0
      %2651 = vmatprep.mubr.bf16.mxu0 0
      %2652 = vmatmul.mubr.bf16.gmra.mxu0 %v2497
      %v2653 = vpop.f32.mrf.mxu0
      %v2654 = vadd.f32 0.0, %v2653
      %v2655 = vpop.f32.mrf.mxu0
      %v2656 = vpop.f32.mrf.mxu0
      %v2657 = vadd.f32 0.0, %v2656
      %v2658 = vpop.f32.mrf.mxu0
      %2659 = vdwg.mxu0
      %v2660 = vadd.f32 %v2442, %v2534
      %v2661 = vadd.f32 %v2443, %v2537
      %v2662 = vadd.f32 %v2444, %v2542
      %v2663 = vadd.f32 %v2445, %v2545
      %v2664 = vadd.f32 %v2446, %v2550
      %v2665 = vadd.f32 %v2447, %v2553
      %v2666 = vadd.f32 %v2448, %v2558
      %v2667 = vadd.f32 %v2449, %v2561
      %v2668 = vadd.f32 %v2450, %v2566
      %v2669 = vadd.f32 %v2451, %v2569
      %v2670 = vadd.f32 %v2452, %v2574
      %v2671 = vadd.f32 %v2453, %v2577
      %v2672 = vadd.f32 %v2454, %v2582
      %v2673 = vadd.f32 %v2455, %v2585
      %v2674 = vadd.f32 %v2456, %v2590
      %v2675 = vadd.f32 %v2457, %v2593
      %v2676 = vadd.f32 %v2458, %v2598
      %v2677 = vadd.f32 %v2459, %v2601
      %v2678 = vadd.f32 %v2460, %v2606
      %v2679 = vadd.f32 %v2461, %v2609
      %v2680 = vadd.f32 %v2462, %v2614
      %v2681 = vadd.f32 %v2463, %v2617
      %v2682 = vadd.f32 %v2464, %v2622
      %v2683 = vadd.f32 %v2465, %v2625
      %v2684 = vadd.f32 %v2466, %v2630
      %v2685 = vadd.f32 %v2467, %v2633
      %v2686 = vadd.f32 %v2468, %v2638
      %v2687 = vadd.f32 %v2469, %v2641
      %v2688 = vadd.f32 %v2470, %v2646
      %v2689 = vadd.f32 %v2471, %v2649
      %v2690 = vadd.f32 %v2472, %v2654
      %v2691 = vadd.f32 %v2473, %v2657
      %s2692 = scalar_lea.vmem %s275, 64
      %v2693 = vld [vmem:[%s2692] sm:$0xf]
      %v2694 = vld [vmem:[%s2692 + $0x4] sm:$0xf]
      %v2695 = vld [vmem:[%s2692 + $0x8] sm:$0xf]
      %v2696 = vld [vmem:[%s2692 + $0xc] sm:$0xf]
      %v2699 = vunpack.c.l.b16 %v324
      %v2700 = vunpack.c.l.b16 %v325
      %v2701 = vpack.c.b16 %v2699, %v1425
      %v2702 = vpack.c.b16 %v2700, %v2700
      %v2704 = vshll.u32 %v2701, 16
      %v2706 = vrot.slane %v2704, 1
      %v2707 = vsel %vm1443, %v1570, %v2706
      %v2708 = vshrl.u32 %v2701, 16
      %v2710 = vor.u32 %v2708, %v2706
      %v2712 = vshll.u32 %v2702, 16
      %v2714 = vrot.slane %v2712, 1
      %v2715 = vsel %vm1443, %v2710, %v2714
      %v2720 = vunpack.c.l.b16 %v2693
      %v2721 = vunpack.c.l.b16 %v2694
      %v2722 = vunpack.c.l.b16 %v2695
      %v2723 = vunpack.c.l.b16 %v2696
      %v2724 = vpack.c.b16 %v2721, %v2720
      %v2725 = vpack.c.b16 %v2723, %v2722
      %v2729 = vsel %vm1588, %v2707, 0
      %v2732 = vsel %vm1588, %v2715, 0
      %2734 = vmatprep.subr.bf16.mxu0 0
      %2735 = vmatpush1.bf16.msra.mxu0 0
      %2736 = vmatprep.subr.bf16.mxu0 0
      %2737 = vmatpush1.bf16.msra.mxu0 0
      %2738 = vmatprep.subr.bf16.mxu0 0
      %2739 = vmatpush1.bf16.msra.mxu0 0
      %2740 = vmatprep.subr.bf16.mxu0 0
      %2741 = vmatpush1.bf16.msra.mxu0 0
      %2742 = vmatprep.subr.bf16.mxu0 0
      %2743 = vmatpush1.bf16.msra.mxu0 0
      %2744 = vmatprep.subr.bf16.mxu0 0
      %2745 = vmatpush1.bf16.msra.mxu0 0
      %2746 = vmatprep.subr.bf16.mxu0 0
      %2747 = vmatpush1.bf16.msra.mxu0 %v2725
      %2748 = vmatprep.subr.bf16.mxu0 0
      %2749 = vmatpush1.bf16.msra.mxu0 %v2724
      %2750 = vmatprep.subr.bf16.mxu0 0
      %2751 = vmatpush2.bf16.msra.mxu0 0
      %2752 = vmatprep.subr.bf16.mxu0 0
      %2753 = vmatpush2.bf16.msra.mxu0 0
      %2754 = vmatprep.subr.bf16.mxu0 0
      %2755 = vmatpush2.bf16.msra.mxu0 0
      %2756 = vmatprep.subr.bf16.mxu0 0
      %2757 = vmatpush2.bf16.msra.mxu0 0
      %2758 = vmatprep.subr.bf16.mxu0 0
      %2759 = vmatpush2.bf16.msra.mxu0 0
      %2760 = vmatprep.subr.bf16.mxu0 0
      %2761 = vmatpush2.bf16.msra.mxu0 0
      %2762 = vmatprep.subr.bf16.mxu0 0
      %2763 = vmatpush2.bf16.msra.mxu0 0
      %2764 = vmatprep.subr.bf16.mxu0 0
      %2765 = vmatpush2.bf16.msra.mxu0 0
      %2766 = vmatprep.mubr.bf16.mxu0 0
      %2767 = vmatmul.mubr.bf16.gmra.mxu0 %v1593
      %v2768 = vpop.f32.mrf.mxu0
      %v2769 = vadd.f32 0.0, %v2768
      %v2770 = vpop.f32.mrf.mxu0
      %v2771 = vpop.f32.mrf.mxu0
      %v2772 = vadd.f32 0.0, %v2771
      %v2773 = vpop.f32.mrf.mxu0
      %2774 = vmatprep.mubr.bf16.mxu0 0
      %2775 = vmatmul.mubr.bf16.gmra.mxu0 %v1596
      %v2776 = vpop.f32.mrf.mxu0
      %v2777 = vadd.f32 0.0, %v2776
      %v2778 = vpop.f32.mrf.mxu0
      %v2779 = vpop.f32.mrf.mxu0
      %v2780 = vadd.f32 0.0, %v2779
      %v2781 = vpop.f32.mrf.mxu0
      %2782 = vmatprep.mubr.bf16.mxu0 0
      %2783 = vmatmul.mubr.bf16.gmra.mxu0 %v1599
      %v2784 = vpop.f32.mrf.mxu0
      %v2785 = vadd.f32 0.0, %v2784
      %v2786 = vpop.f32.mrf.mxu0
      %v2787 = vpop.f32.mrf.mxu0
      %v2788 = vadd.f32 0.0, %v2787
      %v2789 = vpop.f32.mrf.mxu0
      %2790 = vmatprep.mubr.bf16.mxu0 0
      %2791 = vmatmul.mubr.bf16.gmra.mxu0 %v1602
      %v2792 = vpop.f32.mrf.mxu0
      %v2793 = vadd.f32 0.0, %v2792
      %v2794 = vpop.f32.mrf.mxu0
      %v2795 = vpop.f32.mrf.mxu0
      %v2796 = vadd.f32 0.0, %v2795
      %v2797 = vpop.f32.mrf.mxu0
      %2798 = vmatprep.mubr.bf16.mxu0 0
      %2799 = vmatmul.mubr.bf16.gmra.mxu0 %v1605
      %v2800 = vpop.f32.mrf.mxu0
      %v2801 = vadd.f32 0.0, %v2800
      %v2802 = vpop.f32.mrf.mxu0
      %v2803 = vpop.f32.mrf.mxu0
      %v2804 = vadd.f32 0.0, %v2803
      %v2805 = vpop.f32.mrf.mxu0
      %2806 = vmatprep.mubr.bf16.mxu0 0
      %2807 = vmatmul.mubr.bf16.gmra.mxu0 %v1608
      %v2808 = vpop.f32.mrf.mxu0
      %v2809 = vadd.f32 0.0, %v2808
      %v2810 = vpop.f32.mrf.mxu0
      %v2811 = vpop.f32.mrf.mxu0
      %v2812 = vadd.f32 0.0, %v2811
      %v2813 = vpop.f32.mrf.mxu0
      %2814 = vmatprep.mubr.bf16.mxu0 0
      %2815 = vmatmul.mubr.bf16.gmra.mxu0 %v1611
      %v2816 = vpop.f32.mrf.mxu0
      %v2817 = vadd.f32 0.0, %v2816
      %v2818 = vpop.f32.mrf.mxu0
      %v2819 = vpop.f32.mrf.mxu0
      %v2820 = vadd.f32 0.0, %v2819
      %v2821 = vpop.f32.mrf.mxu0
      %2822 = vmatprep.mubr.bf16.mxu0 0
      %2823 = vmatmul.mubr.bf16.gmra.mxu0 %v1614
      %v2824 = vpop.f32.mrf.mxu0
      %v2825 = vadd.f32 0.0, %v2824
      %v2826 = vpop.f32.mrf.mxu0
      %v2827 = vpop.f32.mrf.mxu0
      %v2828 = vadd.f32 0.0, %v2827
      %v2829 = vpop.f32.mrf.mxu0
      %2830 = vmatprep.mubr.bf16.mxu0 0
      %2831 = vmatmul.mubr.bf16.gmra.mxu0 %v1617
      %v2832 = vpop.f32.mrf.mxu0
      %v2833 = vadd.f32 0.0, %v2832
      %v2834 = vpop.f32.mrf.mxu0
      %v2835 = vpop.f32.mrf.mxu0
      %v2836 = vadd.f32 0.0, %v2835
      %v2837 = vpop.f32.mrf.mxu0
      %2838 = vmatprep.mubr.bf16.mxu0 0
      %2839 = vmatmul.mubr.bf16.gmra.mxu0 %v1620
      %v2840 = vpop.f32.mrf.mxu0
      %v2841 = vadd.f32 0.0, %v2840
      %v2842 = vpop.f32.mrf.mxu0
      %v2843 = vpop.f32.mrf.mxu0
      %v2844 = vadd.f32 0.0, %v2843
      %v2845 = vpop.f32.mrf.mxu0
      %2846 = vmatprep.mubr.bf16.mxu0 0
      %2847 = vmatmul.mubr.bf16.gmra.mxu0 %v1623
      %v2848 = vpop.f32.mrf.mxu0
      %v2849 = vadd.f32 0.0, %v2848
      %v2850 = vpop.f32.mrf.mxu0
      %v2851 = vpop.f32.mrf.mxu0
      %v2852 = vadd.f32 0.0, %v2851
      %v2853 = vpop.f32.mrf.mxu0
      %2854 = vmatprep.mubr.bf16.mxu0 0
      %2855 = vmatmul.mubr.bf16.gmra.mxu0 %v1626
      %v2856 = vpop.f32.mrf.mxu0
      %v2857 = vadd.f32 0.0, %v2856
      %v2858 = vpop.f32.mrf.mxu0
      %v2859 = vpop.f32.mrf.mxu0
      %v2860 = vadd.f32 0.0, %v2859
      %v2861 = vpop.f32.mrf.mxu0
      %2862 = vmatprep.mubr.bf16.mxu0 0
      %2863 = vmatmul.mubr.bf16.gmra.mxu0 %v1629
      %v2864 = vpop.f32.mrf.mxu0
      %v2865 = vadd.f32 0.0, %v2864
      %v2866 = vpop.f32.mrf.mxu0
      %v2867 = vpop.f32.mrf.mxu0
      %v2868 = vadd.f32 0.0, %v2867
      %v2869 = vpop.f32.mrf.mxu0
      %2870 = vmatprep.mubr.bf16.mxu0 0
      %2871 = vmatmul.mubr.bf16.gmra.mxu0 %v1632
      %v2872 = vpop.f32.mrf.mxu0
      %v2873 = vadd.f32 0.0, %v2872
      %v2874 = vpop.f32.mrf.mxu0
      %v2875 = vpop.f32.mrf.mxu0
      %v2876 = vadd.f32 0.0, %v2875
      %v2877 = vpop.f32.mrf.mxu0
      %2878 = vmatprep.mubr.bf16.mxu0 0
      %2879 = vmatmul.mubr.bf16.gmra.mxu0 %v2729
      %v2880 = vpop.f32.mrf.mxu0
      %v2881 = vadd.f32 0.0, %v2880
      %v2882 = vpop.f32.mrf.mxu0
      %v2883 = vpop.f32.mrf.mxu0
      %v2884 = vadd.f32 0.0, %v2883
      %v2885 = vpop.f32.mrf.mxu0
      %2886 = vmatprep.mubr.bf16.mxu0 0
      %2887 = vmatmul.mubr.bf16.gmra.mxu0 %v2732
      %v2888 = vpop.f32.mrf.mxu0
      %v2889 = vadd.f32 0.0, %v2888
      %v2890 = vpop.f32.mrf.mxu0
      %v2891 = vpop.f32.mrf.mxu0
      %v2892 = vadd.f32 0.0, %v2891
      %v2893 = vpop.f32.mrf.mxu0
      %2894 = vdwg.mxu0
      %v2895 = vadd.f32 %v2660, %v2769
      %v2896 = vadd.f32 %v2661, %v2772
      %v2897 = vadd.f32 %v2662, %v2777
      %v2898 = vadd.f32 %v2663, %v2780
      %v2899 = vadd.f32 %v2664, %v2785
      %v2900 = vadd.f32 %v2665, %v2788
      %v2901 = vadd.f32 %v2666, %v2793
      %v2902 = vadd.f32 %v2667, %v2796
      %v2903 = vadd.f32 %v2668, %v2801
      %v2904 = vadd.f32 %v2669, %v2804
      %v2905 = vadd.f32 %v2670, %v2809
      %v2906 = vadd.f32 %v2671, %v2812
      %v2907 = vadd.f32 %v2672, %v2817
      %v2908 = vadd.f32 %v2673, %v2820
      %v2909 = vadd.f32 %v2674, %v2825
      %v2910 = vadd.f32 %v2675, %v2828
      %v2911 = vadd.f32 %v2676, %v2833
      %v2912 = vadd.f32 %v2677, %v2836
      %v2913 = vadd.f32 %v2678, %v2841
      %v2914 = vadd.f32 %v2679, %v2844
      %v2915 = vadd.f32 %v2680, %v2849
      %v2916 = vadd.f32 %v2681, %v2852
      %v2917 = vadd.f32 %v2682, %v2857
      %v2918 = vadd.f32 %v2683, %v2860
      %v2919 = vadd.f32 %v2684, %v2865
      %v2920 = vadd.f32 %v2685, %v2868
      %v2921 = vadd.f32 %v2686, %v2873
      %v2922 = vadd.f32 %v2687, %v2876
      %v2923 = vadd.f32 %v2688, %v2881
      %v2924 = vadd.f32 %v2689, %v2884
      %v2925 = vadd.f32 %v2690, %v2889
      %v2926 = vadd.f32 %v2691, %v2892
      %s2927 = scalar_lea.vmem %s275, 80
      %v2928 = vld [vmem:[%s2927] sm:$0xf]
      %v2929 = vld [vmem:[%s2927 + $0x4] sm:$0xf]
      %v2930 = vld [vmem:[%s2927 + $0x8] sm:$0xf]
      %v2931 = vld [vmem:[%s2927 + $0xc] sm:$0xf]
      %v2934 = vunpack.c.l.b16 %v1347
      %v2935 = vunpack.c.l.b16 %v1348
      %v2936 = vpack.c.b16 %v2934, %v2169
      %v2937 = vpack.c.b16 %v2935, %v2935
      %v2938 = vrot.slane %v2936, 1
      %v2939 = vsel %vm2187, %v2217, %v2938
      %v2940 = vrot.slane %v2937, 1
      %v2941 = vsel %vm2187, %v2938, %v2940
      %v2946 = vunpack.c.l.b16 %v2928
      %v2947 = vunpack.c.l.b16 %v2929
      %v2948 = vunpack.c.l.b16 %v2930
      %v2949 = vunpack.c.l.b16 %v2931
      %v2950 = vpack.c.b16 %v2947, %v2946
      %v2951 = vpack.c.b16 %v2949, %v2948
      %v2955 = vsel %vm1588, %v2939, 0
      %v2958 = vsel %vm1588, %v2941, 0
      %2960 = vmatprep.subr.bf16.mxu0 0
      %2961 = vmatpush1.bf16.msra.mxu0 0
      %2962 = vmatprep.subr.bf16.mxu0 0
      %2963 = vmatpush1.bf16.msra.mxu0 0
      %2964 = vmatprep.subr.bf16.mxu0 0
      %2965 = vmatpush1.bf16.msra.mxu0 0
      %2966 = vmatprep.subr.bf16.mxu0 0
      %2967 = vmatpush1.bf16.msra.mxu0 0
      %2968 = vmatprep.subr.bf16.mxu0 0
      %2969 = vmatpush1.bf16.msra.mxu0 0
      %2970 = vmatprep.subr.bf16.mxu0 0
      %2971 = vmatpush1.bf16.msra.mxu0 0
      %2972 = vmatprep.subr.bf16.mxu0 0
      %2973 = vmatpush1.bf16.msra.mxu0 %v2951
      %2974 = vmatprep.subr.bf16.mxu0 0
      %2975 = vmatpush1.bf16.msra.mxu0 %v2950
      %2976 = vmatprep.subr.bf16.mxu0 0
      %2977 = vmatpush2.bf16.msra.mxu0 0
      %2978 = vmatprep.subr.bf16.mxu0 0
      %2979 = vmatpush2.bf16.msra.mxu0 0
      %2980 = vmatprep.subr.bf16.mxu0 0
      %2981 = vmatpush2.bf16.msra.mxu0 0
      %2982 = vmatprep.subr.bf16.mxu0 0
      %2983 = vmatpush2.bf16.msra.mxu0 0
      %2984 = vmatprep.subr.bf16.mxu0 0
      %2985 = vmatpush2.bf16.msra.mxu0 0
      %2986 = vmatprep.subr.bf16.mxu0 0
      %2987 = vmatpush2.bf16.msra.mxu0 0
      %2988 = vmatprep.subr.bf16.mxu0 0
      %2989 = vmatpush2.bf16.msra.mxu0 0
      %2990 = vmatprep.subr.bf16.mxu0 0
      %2991 = vmatpush2.bf16.msra.mxu0 0
      %2992 = vmatprep.mubr.bf16.mxu0 0
      %2993 = vmatmul.mubr.bf16.gmra.mxu0 %v2237
      %v2994 = vpop.f32.mrf.mxu0
      %v2995 = vadd.f32 0.0, %v2994
      %v2996 = vpop.f32.mrf.mxu0
      %v2997 = vpop.f32.mrf.mxu0
      %v2998 = vadd.f32 0.0, %v2997
      %v2999 = vpop.f32.mrf.mxu0
      %3000 = vmatprep.mubr.bf16.mxu0 0
      %3001 = vmatmul.mubr.bf16.gmra.mxu0 %v2240
      %v3002 = vpop.f32.mrf.mxu0
      %v3003 = vadd.f32 0.0, %v3002
      %v3004 = vpop.f32.mrf.mxu0
      %v3005 = vpop.f32.mrf.mxu0
      %v3006 = vadd.f32 0.0, %v3005
      %v3007 = vpop.f32.mrf.mxu0
      %3008 = vmatprep.mubr.bf16.mxu0 0
      %3009 = vmatmul.mubr.bf16.gmra.mxu0 %v2243
      %v3010 = vpop.f32.mrf.mxu0
      %v3011 = vadd.f32 0.0, %v3010
      %v3012 = vpop.f32.mrf.mxu0
      %v3013 = vpop.f32.mrf.mxu0
      %v3014 = vadd.f32 0.0, %v3013
      %v3015 = vpop.f32.mrf.mxu0
      %3016 = vmatprep.mubr.bf16.mxu0 0
      %3017 = vmatmul.mubr.bf16.gmra.mxu0 %v2246
      %v3018 = vpop.f32.mrf.mxu0
      %v3019 = vadd.f32 0.0, %v3018
      %v3020 = vpop.f32.mrf.mxu0
      %v3021 = vpop.f32.mrf.mxu0
      %v3022 = vadd.f32 0.0, %v3021
      %v3023 = vpop.f32.mrf.mxu0
      %3024 = vmatprep.mubr.bf16.mxu0 0
      %3025 = vmatmul.mubr.bf16.gmra.mxu0 %v2249
      %v3026 = vpop.f32.mrf.mxu0
      %v3027 = vadd.f32 0.0, %v3026
      %v3028 = vpop.f32.mrf.mxu0
      %v3029 = vpop.f32.mrf.mxu0
      %v3030 = vadd.f32 0.0, %v3029
      %v3031 = vpop.f32.mrf.mxu0
      %3032 = vmatprep.mubr.bf16.mxu0 0
      %3033 = vmatmul.mubr.bf16.gmra.mxu0 %v2252
      %v3034 = vpop.f32.mrf.mxu0
      %v3035 = vadd.f32 0.0, %v3034
      %v3036 = vpop.f32.mrf.mxu0
      %v3037 = vpop.f32.mrf.mxu0
      %v3038 = vadd.f32 0.0, %v3037
      %v3039 = vpop.f32.mrf.mxu0
      %3040 = vmatprep.mubr.bf16.mxu0 0
      %3041 = vmatmul.mubr.bf16.gmra.mxu0 %v2255
      %v3042 = vpop.f32.mrf.mxu0
      %v3043 = vadd.f32 0.0, %v3042
      %v3044 = vpop.f32.mrf.mxu0
      %v3045 = vpop.f32.mrf.mxu0
      %v3046 = vadd.f32 0.0, %v3045
      %v3047 = vpop.f32.mrf.mxu0
      %3048 = vmatprep.mubr.bf16.mxu0 0
      %3049 = vmatmul.mubr.bf16.gmra.mxu0 %v2258
      %v3050 = vpop.f32.mrf.mxu0
      %v3051 = vadd.f32 0.0, %v3050
      %v3052 = vpop.f32.mrf.mxu0
      %v3053 = vpop.f32.mrf.mxu0
      %v3054 = vadd.f32 0.0, %v3053
      %v3055 = vpop.f32.mrf.mxu0
      %3056 = vmatprep.mubr.bf16.mxu0 0
      %3057 = vmatmul.mubr.bf16.gmra.mxu0 %v2261
      %v3058 = vpop.f32.mrf.mxu0
      %v3059 = vadd.f32 0.0, %v3058
      %v3060 = vpop.f32.mrf.mxu0
      %v3061 = vpop.f32.mrf.mxu0
      %v3062 = vadd.f32 0.0, %v3061
      %v3063 = vpop.f32.mrf.mxu0
      %3064 = vmatprep.mubr.bf16.mxu0 0
      %3065 = vmatmul.mubr.bf16.gmra.mxu0 %v2264
      %v3066 = vpop.f32.mrf.mxu0
      %v3067 = vadd.f32 0.0, %v3066
      %v3068 = vpop.f32.mrf.mxu0
      %v3069 = vpop.f32.mrf.mxu0
      %v3070 = vadd.f32 0.0, %v3069
      %v3071 = vpop.f32.mrf.mxu0
      %3072 = vmatprep.mubr.bf16.mxu0 0
      %3073 = vmatmul.mubr.bf16.gmra.mxu0 %v2267
      %v3074 = vpop.f32.mrf.mxu0
      %v3075 = vadd.f32 0.0, %v3074
      %v3076 = vpop.f32.mrf.mxu0
      %v3077 = vpop.f32.mrf.mxu0
      %v3078 = vadd.f32 0.0, %v3077
      %v3079 = vpop.f32.mrf.mxu0
      %3080 = vmatprep.mubr.bf16.mxu0 0
      %3081 = vmatmul.mubr.bf16.gmra.mxu0 %v2270
      %v3082 = vpop.f32.mrf.mxu0
      %v3083 = vadd.f32 0.0, %v3082
      %v3084 = vpop.f32.mrf.mxu0
      %v3085 = vpop.f32.mrf.mxu0
      %v3086 = vadd.f32 0.0, %v3085
      %v3087 = vpop.f32.mrf.mxu0
      %3088 = vmatprep.mubr.bf16.mxu0 0
      %3089 = vmatmul.mubr.bf16.gmra.mxu0 %v2273
      %v3090 = vpop.f32.mrf.mxu0
      %v3091 = vadd.f32 0.0, %v3090
      %v3092 = vpop.f32.mrf.mxu0
      %v3093 = vpop.f32.mrf.mxu0
      %v3094 = vadd.f32 0.0, %v3093
      %v3095 = vpop.f32.mrf.mxu0
      %3096 = vmatprep.mubr.bf16.mxu0 0
      %3097 = vmatmul.mubr.bf16.gmra.mxu0 %v2276
      %v3098 = vpop.f32.mrf.mxu0
      %v3099 = vadd.f32 0.0, %v3098
      %v3100 = vpop.f32.mrf.mxu0
      %v3101 = vpop.f32.mrf.mxu0
      %v3102 = vadd.f32 0.0, %v3101
      %v3103 = vpop.f32.mrf.mxu0
      %3104 = vmatprep.mubr.bf16.mxu0 0
      %3105 = vmatmul.mubr.bf16.gmra.mxu0 %v2955
      %v3106 = vpop.f32.mrf.mxu0
      %v3107 = vadd.f32 0.0, %v3106
      %v3108 = vpop.f32.mrf.mxu0
      %v3109 = vpop.f32.mrf.mxu0
      %v3110 = vadd.f32 0.0, %v3109
      %v3111 = vpop.f32.mrf.mxu0
      %3112 = vmatprep.mubr.bf16.mxu0 0
      %3113 = vmatmul.mubr.bf16.gmra.mxu0 %v2958
      %v3114 = vpop.f32.mrf.mxu0
      %v3115 = vadd.f32 0.0, %v3114
      %v3116 = vpop.f32.mrf.mxu0
      %v3117 = vpop.f32.mrf.mxu0
      %v3118 = vadd.f32 0.0, %v3117
      %v3119 = vpop.f32.mrf.mxu0
      %3120 = vdwg.mxu0
      %v3121 = vadd.f32 %v2895, %v2995
      %v3122 = vadd.f32 %v2896, %v2998
      %v3123 = vadd.f32 %v2897, %v3003
      %v3124 = vadd.f32 %v2898, %v3006
      %v3125 = vadd.f32 %v2899, %v3011
      %v3126 = vadd.f32 %v2900, %v3014
      %v3127 = vadd.f32 %v2901, %v3019
      %v3128 = vadd.f32 %v2902, %v3022
      %v3129 = vadd.f32 %v2903, %v3027
      %v3130 = vadd.f32 %v2904, %v3030
      %v3131 = vadd.f32 %v2905, %v3035
      %v3132 = vadd.f32 %v2906, %v3038
      %v3133 = vadd.f32 %v2907, %v3043
      %v3134 = vadd.f32 %v2908, %v3046
      %v3135 = vadd.f32 %v2909, %v3051
      %v3136 = vadd.f32 %v2910, %v3054
      %v3137 = vadd.f32 %v2911, %v3059
      %v3138 = vadd.f32 %v2912, %v3062
      %v3139 = vadd.f32 %v2913, %v3067
      %v3140 = vadd.f32 %v2914, %v3070
      %v3141 = vadd.f32 %v2915, %v3075
      %v3142 = vadd.f32 %v2916, %v3078
      %v3143 = vadd.f32 %v2917, %v3083
      %v3144 = vadd.f32 %v2918, %v3086
      %v3145 = vadd.f32 %v2919, %v3091
      %v3146 = vadd.f32 %v2920, %v3094
      %v3147 = vadd.f32 %v2921, %v3099
      %v3148 = vadd.f32 %v2922, %v3102
      %v3149 = vadd.f32 %v2923, %v3107
      %v3150 = vadd.f32 %v2924, %v3110
      %v3151 = vadd.f32 %v2925, %v3115
      %v3152 = vadd.f32 %v2926, %v3118
      %s3153 = scalar_lea.vmem %s275, 96
      %v3154 = vld [vmem:[%s3153] sm:$0xf]
      %v3155 = vld [vmem:[%s3153 + $0x4] sm:$0xf]
      %v3156 = vld [vmem:[%s3153 + $0x8] sm:$0xf]
      %v3157 = vld [vmem:[%s3153 + $0xc] sm:$0xf]
      %v3160 = vunpack.c.l.b16 %v830
      %v3161 = vunpack.c.l.b16 %v831
      %v3162 = vpack.c.b16 %v3161, %v3160
      %v3167 = vunpack.c.l.b16 %v3154
      %v3168 = vunpack.c.l.b16 %v3155
      %v3169 = vunpack.c.l.b16 %v3156
      %v3170 = vunpack.c.l.b16 %v3157
      %v3171 = vpack.c.b16 %v3168, %v3167
      %v3172 = vpack.c.b16 %v3170, %v3169
      %v3176 = vsel %vm1588, %v3162, 0
      %3178 = vmatprep.subr.bf16.mxu0 0
      %3179 = vmatpush1.bf16.msra.mxu0 0
      %3180 = vmatprep.subr.bf16.mxu0 0
      %3181 = vmatpush1.bf16.msra.mxu0 0
      %3182 = vmatprep.subr.bf16.mxu0 0
      %3183 = vmatpush1.bf16.msra.mxu0 0
      %3184 = vmatprep.subr.bf16.mxu0 0
      %3185 = vmatpush1.bf16.msra.mxu0 0
      %3186 = vmatprep.subr.bf16.mxu0 0
      %3187 = vmatpush1.bf16.msra.mxu0 0
      %3188 = vmatprep.subr.bf16.mxu0 0
      %3189 = vmatpush1.bf16.msra.mxu0 0
      %3190 = vmatprep.subr.bf16.mxu0 0
      %3191 = vmatpush1.bf16.msra.mxu0 %v3172
      %3192 = vmatprep.subr.bf16.mxu0 0
      %3193 = vmatpush1.bf16.msra.mxu0 %v3171
      %3194 = vmatprep.subr.bf16.mxu0 0
      %3195 = vmatpush2.bf16.msra.mxu0 0
      %3196 = vmatprep.subr.bf16.mxu0 0
      %3197 = vmatpush2.bf16.msra.mxu0 0
      %3198 = vmatprep.subr.bf16.mxu0 0
      %3199 = vmatpush2.bf16.msra.mxu0 0
      %3200 = vmatprep.subr.bf16.mxu0 0
      %3201 = vmatpush2.bf16.msra.mxu0 0
      %3202 = vmatprep.subr.bf16.mxu0 0
      %3203 = vmatpush2.bf16.msra.mxu0 0
      %3204 = vmatprep.subr.bf16.mxu0 0
      %3205 = vmatpush2.bf16.msra.mxu0 0
      %3206 = vmatprep.subr.bf16.mxu0 0
      %3207 = vmatpush2.bf16.msra.mxu0 0
      %3208 = vmatprep.subr.bf16.mxu0 0
      %3209 = vmatpush2.bf16.msra.mxu0 0
      %3210 = vmatprep.mubr.bf16.mxu0 0
      %3211 = vmatmul.mubr.bf16.gmra.mxu0 %v1897
      %v3212 = vpop.f32.mrf.mxu0
      %v3213 = vadd.f32 0.0, %v3212
      %v3214 = vpop.f32.mrf.mxu0
      %v3215 = vpop.f32.mrf.mxu0
      %v3216 = vadd.f32 0.0, %v3215
      %v3217 = vpop.f32.mrf.mxu0
      %3218 = vmatprep.mubr.bf16.mxu0 0
      %3219 = vmatmul.mubr.bf16.gmra.mxu0 %v1900
      %v3220 = vpop.f32.mrf.mxu0
      %v3221 = vadd.f32 0.0, %v3220
      %v3222 = vpop.f32.mrf.mxu0
      %v3223 = vpop.f32.mrf.mxu0
      %v3224 = vadd.f32 0.0, %v3223
      %v3225 = vpop.f32.mrf.mxu0
      %3226 = vmatprep.mubr.bf16.mxu0 0
      %3227 = vmatmul.mubr.bf16.gmra.mxu0 %v1903
      %v3228 = vpop.f32.mrf.mxu0
      %v3229 = vadd.f32 0.0, %v3228
      %v3230 = vpop.f32.mrf.mxu0
      %v3231 = vpop.f32.mrf.mxu0
      %v3232 = vadd.f32 0.0, %v3231
      %v3233 = vpop.f32.mrf.mxu0
      %3234 = vmatprep.mubr.bf16.mxu0 0
      %3235 = vmatmul.mubr.bf16.gmra.mxu0 %v1906
      %v3236 = vpop.f32.mrf.mxu0
      %v3237 = vadd.f32 0.0, %v3236
      %v3238 = vpop.f32.mrf.mxu0
      %v3239 = vpop.f32.mrf.mxu0
      %v3240 = vadd.f32 0.0, %v3239
      %v3241 = vpop.f32.mrf.mxu0
      %3242 = vmatprep.mubr.bf16.mxu0 0
      %3243 = vmatmul.mubr.bf16.gmra.mxu0 %v1909
      %v3244 = vpop.f32.mrf.mxu0
      %v3245 = vadd.f32 0.0, %v3244
      %v3246 = vpop.f32.mrf.mxu0
      %v3247 = vpop.f32.mrf.mxu0
      %v3248 = vadd.f32 0.0, %v3247
      %v3249 = vpop.f32.mrf.mxu0
      %3250 = vmatprep.mubr.bf16.mxu0 0
      %3251 = vmatmul.mubr.bf16.gmra.mxu0 %v1912
      %v3252 = vpop.f32.mrf.mxu0
      %v3253 = vadd.f32 0.0, %v3252
      %v3254 = vpop.f32.mrf.mxu0
      %v3255 = vpop.f32.mrf.mxu0
      %v3256 = vadd.f32 0.0, %v3255
      %v3257 = vpop.f32.mrf.mxu0
      %3258 = vmatprep.mubr.bf16.mxu0 0
      %3259 = vmatmul.mubr.bf16.gmra.mxu0 %v1915
      %v3260 = vpop.f32.mrf.mxu0
      %v3261 = vadd.f32 0.0, %v3260
      %v3262 = vpop.f32.mrf.mxu0
      %v3263 = vpop.f32.mrf.mxu0
      %v3264 = vadd.f32 0.0, %v3263
      %v3265 = vpop.f32.mrf.mxu0
      %3266 = vmatprep.mubr.bf16.mxu0 0
      %3267 = vmatmul.mubr.bf16.gmra.mxu0 %v1918
      %v3268 = vpop.f32.mrf.mxu0
      %v3269 = vadd.f32 0.0, %v3268
      %v3270 = vpop.f32.mrf.mxu0
      %v3271 = vpop.f32.mrf.mxu0
      %v3272 = vadd.f32 0.0, %v3271
      %v3273 = vpop.f32.mrf.mxu0
      %3274 = vmatprep.mubr.bf16.mxu0 0
      %3275 = vmatmul.mubr.bf16.gmra.mxu0 %v1921
      %v3276 = vpop.f32.mrf.mxu0
      %v3277 = vadd.f32 0.0, %v3276
      %v3278 = vpop.f32.mrf.mxu0
      %v3279 = vpop.f32.mrf.mxu0
      %v3280 = vadd.f32 0.0, %v3279
      %v3281 = vpop.f32.mrf.mxu0
      %3282 = vmatprep.mubr.bf16.mxu0 0
      %3283 = vmatmul.mubr.bf16.gmra.mxu0 %v1924
      %v3284 = vpop.f32.mrf.mxu0
      %v3285 = vadd.f32 0.0, %v3284
      %v3286 = vpop.f32.mrf.mxu0
      %v3287 = vpop.f32.mrf.mxu0
      %v3288 = vadd.f32 0.0, %v3287
      %v3289 = vpop.f32.mrf.mxu0
      %3290 = vmatprep.mubr.bf16.mxu0 0
      %3291 = vmatmul.mubr.bf16.gmra.mxu0 %v1927
      %v3292 = vpop.f32.mrf.mxu0
      %v3293 = vadd.f32 0.0, %v3292
      %v3294 = vpop.f32.mrf.mxu0
      %v3295 = vpop.f32.mrf.mxu0
      %v3296 = vadd.f32 0.0, %v3295
      %v3297 = vpop.f32.mrf.mxu0
      %3298 = vmatprep.mubr.bf16.mxu0 0
      %3299 = vmatmul.mubr.bf16.gmra.mxu0 %v1930
      %v3300 = vpop.f32.mrf.mxu0
      %v3301 = vadd.f32 0.0, %v3300
      %v3302 = vpop.f32.mrf.mxu0
      %v3303 = vpop.f32.mrf.mxu0
      %v3304 = vadd.f32 0.0, %v3303
      %v3305 = vpop.f32.mrf.mxu0
      %3306 = vmatprep.mubr.bf16.mxu0 0
      %3307 = vmatmul.mubr.bf16.gmra.mxu0 %v1933
      %v3308 = vpop.f32.mrf.mxu0
      %v3309 = vadd.f32 0.0, %v3308
      %v3310 = vpop.f32.mrf.mxu0
      %v3311 = vpop.f32.mrf.mxu0
      %v3312 = vadd.f32 0.0, %v3311
      %v3313 = vpop.f32.mrf.mxu0
      %3314 = vmatprep.mubr.bf16.mxu0 0
      %3315 = vmatmul.mubr.bf16.gmra.mxu0 %v1936
      %v3316 = vpop.f32.mrf.mxu0
      %v3317 = vadd.f32 0.0, %v3316
      %v3318 = vpop.f32.mrf.mxu0
      %v3319 = vpop.f32.mrf.mxu0
      %v3320 = vadd.f32 0.0, %v3319
      %v3321 = vpop.f32.mrf.mxu0
      %3322 = vmatprep.mubr.bf16.mxu0 0
      %3323 = vmatmul.mubr.bf16.gmra.mxu0 %v2497
      %v3324 = vpop.f32.mrf.mxu0
      %v3325 = vadd.f32 0.0, %v3324
      %v3326 = vpop.f32.mrf.mxu0
      %v3327 = vpop.f32.mrf.mxu0
      %v3328 = vadd.f32 0.0, %v3327
      %v3329 = vpop.f32.mrf.mxu0
      %3330 = vmatprep.mubr.bf16.mxu0 0
      %3331 = vmatmul.mubr.bf16.gmra.mxu0 %v3176
      %v3332 = vpop.f32.mrf.mxu0
      %v3333 = vadd.f32 0.0, %v3332
      %v3334 = vpop.f32.mrf.mxu0
      %v3335 = vpop.f32.mrf.mxu0
      %v3336 = vadd.f32 0.0, %v3335
      %v3337 = vpop.f32.mrf.mxu0
      %3338 = vdwg.mxu0
      %v3339 = vadd.f32 %v3121, %v3213
      %v3340 = vadd.f32 %v3122, %v3216
      %v3341 = vadd.f32 %v3123, %v3221
      %v3342 = vadd.f32 %v3124, %v3224
      %v3343 = vadd.f32 %v3125, %v3229
      %v3344 = vadd.f32 %v3126, %v3232
      %v3345 = vadd.f32 %v3127, %v3237
      %v3346 = vadd.f32 %v3128, %v3240
      %v3347 = vadd.f32 %v3129, %v3245
      %v3348 = vadd.f32 %v3130, %v3248
      %v3349 = vadd.f32 %v3131, %v3253
      %v3350 = vadd.f32 %v3132, %v3256
      %v3351 = vadd.f32 %v3133, %v3261
      %v3352 = vadd.f32 %v3134, %v3264
      %v3353 = vadd.f32 %v3135, %v3269
      %v3354 = vadd.f32 %v3136, %v3272
      %v3355 = vadd.f32 %v3137, %v3277
      %v3356 = vadd.f32 %v3138, %v3280
      %v3357 = vadd.f32 %v3139, %v3285
      %v3358 = vadd.f32 %v3140, %v3288
      %v3359 = vadd.f32 %v3141, %v3293
      %v3360 = vadd.f32 %v3142, %v3296
      %v3361 = vadd.f32 %v3143, %v3301
      %v3362 = vadd.f32 %v3144, %v3304
      %v3363 = vadd.f32 %v3145, %v3309
      %v3364 = vadd.f32 %v3146, %v3312
      %v3365 = vadd.f32 %v3147, %v3317
      %v3366 = vadd.f32 %v3148, %v3320
      %v3367 = vadd.f32 %v3149, %v3325
      %v3368 = vadd.f32 %v3150, %v3328
      %v3369 = vadd.f32 %v3151, %v3333
      %v3370 = vadd.f32 %v3152, %v3336
      %s3371 = scalar_lea.vmem %s275, 112
      %v3372 = vld [vmem:[%s3371] sm:$0xf]
      %v3373 = vld [vmem:[%s3371 + $0x4] sm:$0xf]
      %v3374 = vld [vmem:[%s3371 + $0x8] sm:$0xf]
      %v3375 = vld [vmem:[%s3371 + $0xc] sm:$0xf]
      %v3378 = vunpack.c.l.b16 %v326
      %v3379 = vunpack.c.l.b16 %v327
      %v3380 = vpack.c.b16 %v3378, %v2700
      %v3381 = vpack.c.b16 %v3379, %v3379
      %v3383 = vshll.u32 %v3380, 16
      %v3385 = vrot.slane %v3383, 1
      %v3386 = vsel %vm1443, %v2710, %v3385
      %v3387 = vshrl.u32 %v3380, 16
      %v3389 = vor.u32 %v3387, %v3385
      %v3391 = vshll.u32 %v3381, 16
      %v3393 = vrot.slane %v3391, 1
      %v3394 = vsel %vm1443, %v3389, %v3393
      %v3399 = vunpack.c.l.b16 %v3372
      %v3400 = vunpack.c.l.b16 %v3373
      %v3401 = vunpack.c.l.b16 %v3374
      %v3402 = vunpack.c.l.b16 %v3375
      %v3403 = vpack.c.b16 %v3400, %v3399
      %v3404 = vpack.c.b16 %v3402, %v3401
      %v3408 = vsel %vm1588, %v3386, 0
      %v3411 = vsel %vm1588, %v3394, 0
      %3413 = vmatprep.subr.bf16.mxu0 0
      %3414 = vmatpush1.bf16.msra.mxu0 0
      %3415 = vmatprep.subr.bf16.mxu0 0
      %3416 = vmatpush1.bf16.msra.mxu0 0
      %3417 = vmatprep.subr.bf16.mxu0 0
      %3418 = vmatpush1.bf16.msra.mxu0 0
      %3419 = vmatprep.subr.bf16.mxu0 0
      %3420 = vmatpush1.bf16.msra.mxu0 0
      %3421 = vmatprep.subr.bf16.mxu0 0
      %3422 = vmatpush1.bf16.msra.mxu0 0
      %3423 = vmatprep.subr.bf16.mxu0 0
      %3424 = vmatpush1.bf16.msra.mxu0 0
      %3425 = vmatprep.subr.bf16.mxu0 0
      %3426 = vmatpush1.bf16.msra.mxu0 %v3404
      %3427 = vmatprep.subr.bf16.mxu0 0
      %3428 = vmatpush1.bf16.msra.mxu0 %v3403
      %3429 = vmatprep.subr.bf16.mxu0 0
      %3430 = vmatpush2.bf16.msra.mxu0 0
      %3431 = vmatprep.subr.bf16.mxu0 0
      %3432 = vmatpush2.bf16.msra.mxu0 0
      %3433 = vmatprep.subr.bf16.mxu0 0
      %3434 = vmatpush2.bf16.msra.mxu0 0
      %3435 = vmatprep.subr.bf16.mxu0 0
      %3436 = vmatpush2.bf16.msra.mxu0 0
      %3437 = vmatprep.subr.bf16.mxu0 0
      %3438 = vmatpush2.bf16.msra.mxu0 0
      %3439 = vmatprep.subr.bf16.mxu0 0
      %3440 = vmatpush2.bf16.msra.mxu0 0
      %3441 = vmatprep.subr.bf16.mxu0 0
      %3442 = vmatpush2.bf16.msra.mxu0 0
      %3443 = vmatprep.subr.bf16.mxu0 0
      %3444 = vmatpush2.bf16.msra.mxu0 0
      %3445 = vmatprep.mubr.bf16.mxu0 0
      %3446 = vmatmul.mubr.bf16.gmra.mxu0 %v1596
      %v3447 = vpop.f32.mrf.mxu0
      %v3448 = vadd.f32 0.0, %v3447
      %v3449 = vpop.f32.mrf.mxu0
      %v3450 = vpop.f32.mrf.mxu0
      %v3451 = vadd.f32 0.0, %v3450
      %v3452 = vpop.f32.mrf.mxu0
      %3453 = vmatprep.mubr.bf16.mxu0 0
      %3454 = vmatmul.mubr.bf16.gmra.mxu0 %v1599
      %v3455 = vpop.f32.mrf.mxu0
      %v3456 = vadd.f32 0.0, %v3455
      %v3457 = vpop.f32.mrf.mxu0
      %v3458 = vpop.f32.mrf.mxu0
      %v3459 = vadd.f32 0.0, %v3458
      %v3460 = vpop.f32.mrf.mxu0
      %3461 = vmatprep.mubr.bf16.mxu0 0
      %3462 = vmatmul.mubr.bf16.gmra.mxu0 %v1602
      %v3463 = vpop.f32.mrf.mxu0
      %v3464 = vadd.f32 0.0, %v3463
      %v3465 = vpop.f32.mrf.mxu0
      %v3466 = vpop.f32.mrf.mxu0
      %v3467 = vadd.f32 0.0, %v3466
      %v3468 = vpop.f32.mrf.mxu0
      %3469 = vmatprep.mubr.bf16.mxu0 0
      %3470 = vmatmul.mubr.bf16.gmra.mxu0 %v1605
      %v3471 = vpop.f32.mrf.mxu0
      %v3472 = vadd.f32 0.0, %v3471
      %v3473 = vpop.f32.mrf.mxu0
      %v3474 = vpop.f32.mrf.mxu0
      %v3475 = vadd.f32 0.0, %v3474
      %v3476 = vpop.f32.mrf.mxu0
      %3477 = vmatprep.mubr.bf16.mxu0 0
      %3478 = vmatmul.mubr.bf16.gmra.mxu0 %v1608
      %v3479 = vpop.f32.mrf.mxu0
      %v3480 = vadd.f32 0.0, %v3479
      %v3481 = vpop.f32.mrf.mxu0
      %v3482 = vpop.f32.mrf.mxu0
      %v3483 = vadd.f32 0.0, %v3482
      %v3484 = vpop.f32.mrf.mxu0
      %3485 = vmatprep.mubr.bf16.mxu0 0
      %3486 = vmatmul.mubr.bf16.gmra.mxu0 %v1611
      %v3487 = vpop.f32.mrf.mxu0
      %v3488 = vadd.f32 0.0, %v3487
      %v3489 = vpop.f32.mrf.mxu0
      %v3490 = vpop.f32.mrf.mxu0
      %v3491 = vadd.f32 0.0, %v3490
      %v3492 = vpop.f32.mrf.mxu0
      %3493 = vmatprep.mubr.bf16.mxu0 0
      %3494 = vmatmul.mubr.bf16.gmra.mxu0 %v1614
      %v3495 = vpop.f32.mrf.mxu0
      %v3496 = vadd.f32 0.0, %v3495
      %v3497 = vpop.f32.mrf.mxu0
      %v3498 = vpop.f32.mrf.mxu0
      %v3499 = vadd.f32 0.0, %v3498
      %v3500 = vpop.f32.mrf.mxu0
      %3501 = vmatprep.mubr.bf16.mxu0 0
      %3502 = vmatmul.mubr.bf16.gmra.mxu0 %v1617
      %v3503 = vpop.f32.mrf.mxu0
      %v3504 = vadd.f32 0.0, %v3503
      %v3505 = vpop.f32.mrf.mxu0
      %v3506 = vpop.f32.mrf.mxu0
      %v3507 = vadd.f32 0.0, %v3506
      %v3508 = vpop.f32.mrf.mxu0
      %3509 = vmatprep.mubr.bf16.mxu0 0
      %3510 = vmatmul.mubr.bf16.gmra.mxu0 %v1620
      %v3511 = vpop.f32.mrf.mxu0
      %v3512 = vadd.f32 0.0, %v3511
      %v3513 = vpop.f32.mrf.mxu0
      %v3514 = vpop.f32.mrf.mxu0
      %v3515 = vadd.f32 0.0, %v3514
      %v3516 = vpop.f32.mrf.mxu0
      %3517 = vmatprep.mubr.bf16.mxu0 0
      %3518 = vmatmul.mubr.bf16.gmra.mxu0 %v1623
      %v3519 = vpop.f32.mrf.mxu0
      %v3520 = vadd.f32 0.0, %v3519
      %v3521 = vpop.f32.mrf.mxu0
      %v3522 = vpop.f32.mrf.mxu0
      %v3523 = vadd.f32 0.0, %v3522
      %v3524 = vpop.f32.mrf.mxu0
      %3525 = vmatprep.mubr.bf16.mxu0 0
      %3526 = vmatmul.mubr.bf16.gmra.mxu0 %v1626
      %v3527 = vpop.f32.mrf.mxu0
      %v3528 = vadd.f32 0.0, %v3527
      %v3529 = vpop.f32.mrf.mxu0
      %v3530 = vpop.f32.mrf.mxu0
      %v3531 = vadd.f32 0.0, %v3530
      %v3532 = vpop.f32.mrf.mxu0
      %3533 = vmatprep.mubr.bf16.mxu0 0
      %3534 = vmatmul.mubr.bf16.gmra.mxu0 %v1629
      %v3535 = vpop.f32.mrf.mxu0
      %v3536 = vadd.f32 0.0, %v3535
      %v3537 = vpop.f32.mrf.mxu0
      %v3538 = vpop.f32.mrf.mxu0
      %v3539 = vadd.f32 0.0, %v3538
      %v3540 = vpop.f32.mrf.mxu0
      %3541 = vmatprep.mubr.bf16.mxu0 0
      %3542 = vmatmul.mubr.bf16.gmra.mxu0 %v1632
      %v3543 = vpop.f32.mrf.mxu0
      %v3544 = vadd.f32 0.0, %v3543
      %v3545 = vpop.f32.mrf.mxu0
      %v3546 = vpop.f32.mrf.mxu0
      %v3547 = vadd.f32 0.0, %v3546
      %v3548 = vpop.f32.mrf.mxu0
      %3549 = vmatprep.mubr.bf16.mxu0 0
      %3550 = vmatmul.mubr.bf16.gmra.mxu0 %v2729
      %v3551 = vpop.f32.mrf.mxu0
      %v3552 = vadd.f32 0.0, %v3551
      %v3553 = vpop.f32.mrf.mxu0
      %v3554 = vpop.f32.mrf.mxu0
      %v3555 = vadd.f32 0.0, %v3554
      %v3556 = vpop.f32.mrf.mxu0
      %3557 = vmatprep.mubr.bf16.mxu0 0
      %3558 = vmatmul.mubr.bf16.gmra.mxu0 %v3408
      %v3559 = vpop.f32.mrf.mxu0
      %v3560 = vadd.f32 0.0, %v3559
      %v3561 = vpop.f32.mrf.mxu0
      %v3562 = vpop.f32.mrf.mxu0
      %v3563 = vadd.f32 0.0, %v3562
      %v3564 = vpop.f32.mrf.mxu0
      %3565 = vmatprep.mubr.bf16.mxu0 0
      %3566 = vmatmul.mubr.bf16.gmra.mxu0 %v3411
      %v3567 = vpop.f32.mrf.mxu0
      %v3568 = vadd.f32 0.0, %v3567
      %v3569 = vpop.f32.mrf.mxu0
      %v3570 = vpop.f32.mrf.mxu0
      %v3571 = vadd.f32 0.0, %v3570
      %v3572 = vpop.f32.mrf.mxu0
      %3573 = vdwg.mxu0
      %v3574 = vadd.f32 %v3339, %v3448
      %v3575 = vadd.f32 %v3340, %v3451
      %v3576 = vadd.f32 %v3341, %v3456
      %v3577 = vadd.f32 %v3342, %v3459
      %v3578 = vadd.f32 %v3343, %v3464
      %v3579 = vadd.f32 %v3344, %v3467
      %v3580 = vadd.f32 %v3345, %v3472
      %v3581 = vadd.f32 %v3346, %v3475
      %v3582 = vadd.f32 %v3347, %v3480
      %v3583 = vadd.f32 %v3348, %v3483
      %v3584 = vadd.f32 %v3349, %v3488
      %v3585 = vadd.f32 %v3350, %v3491
      %v3586 = vadd.f32 %v3351, %v3496
      %v3587 = vadd.f32 %v3352, %v3499
      %v3588 = vadd.f32 %v3353, %v3504
      %v3589 = vadd.f32 %v3354, %v3507
      %v3590 = vadd.f32 %v3355, %v3512
      %v3591 = vadd.f32 %v3356, %v3515
      %v3592 = vadd.f32 %v3357, %v3520
      %v3593 = vadd.f32 %v3358, %v3523
      %v3594 = vadd.f32 %v3359, %v3528
      %v3595 = vadd.f32 %v3360, %v3531
      %v3596 = vadd.f32 %v3361, %v3536
      %v3597 = vadd.f32 %v3362, %v3539
      %v3598 = vadd.f32 %v3363, %v3544
      %v3599 = vadd.f32 %v3364, %v3547
      %v3600 = vadd.f32 %v3365, %v3552
      %v3601 = vadd.f32 %v3366, %v3555
      %v3602 = vadd.f32 %v3367, %v3560
      %v3603 = vadd.f32 %v3368, %v3563
      %v3604 = vadd.f32 %v3369, %v3568
      %v3605 = vadd.f32 %v3370, %v3571
      %s3606 = scalar_lea.vmem %s275, 128
      %v3607 = vld [vmem:[%s3606] sm:$0xf]
      %v3608 = vld [vmem:[%s3606 + $0x4] sm:$0xf]
      %v3609 = vld [vmem:[%s3606 + $0x8] sm:$0xf]
      %v3610 = vld [vmem:[%s3606 + $0xc] sm:$0xf]
      %v3613 = vunpack.c.l.b16 %v1349
      %v3614 = vunpack.c.l.b16 %v1350
      %v3615 = vpack.c.b16 %v3613, %v2935
      %v3616 = vpack.c.b16 %v3614, %v3614
      %v3617 = vrot.slane %v3615, 1
      %v3618 = vsel %vm2187, %v2938, %v3617
      %v3619 = vrot.slane %v3616, 1
      %v3620 = vsel %vm2187, %v3617, %v3619
      %v3625 = vunpack.c.l.b16 %v3607
      %v3626 = vunpack.c.l.b16 %v3608
      %v3627 = vunpack.c.l.b16 %v3609
      %v3628 = vunpack.c.l.b16 %v3610
      %v3629 = vpack.c.b16 %v3626, %v3625
      %v3630 = vpack.c.b16 %v3628, %v3627
      %v3634 = vsel %vm1588, %v3618, 0
      %v3637 = vsel %vm1588, %v3620, 0
      %3639 = vmatprep.subr.bf16.mxu0 0
      %3640 = vmatpush1.bf16.msra.mxu0 0
      %3641 = vmatprep.subr.bf16.mxu0 0
      %3642 = vmatpush1.bf16.msra.mxu0 0
      %3643 = vmatprep.subr.bf16.mxu0 0
      %3644 = vmatpush1.bf16.msra.mxu0 0
      %3645 = vmatprep.subr.bf16.mxu0 0
      %3646 = vmatpush1.bf16.msra.mxu0 0
      %3647 = vmatprep.subr.bf16.mxu0 0
      %3648 = vmatpush1.bf16.msra.mxu0 0
      %3649 = vmatprep.subr.bf16.mxu0 0
      %3650 = vmatpush1.bf16.msra.mxu0 0
      %3651 = vmatprep.subr.bf16.mxu0 0
      %3652 = vmatpush1.bf16.msra.mxu0 %v3630
      %3653 = vmatprep.subr.bf16.mxu0 0
      %3654 = vmatpush1.bf16.msra.mxu0 %v3629
      %3655 = vmatprep.subr.bf16.mxu0 0
      %3656 = vmatpush2.bf16.msra.mxu0 0
      %3657 = vmatprep.subr.bf16.mxu0 0
      %3658 = vmatpush2.bf16.msra.mxu0 0
      %3659 = vmatprep.subr.bf16.mxu0 0
      %3660 = vmatpush2.bf16.msra.mxu0 0
      %3661 = vmatprep.subr.bf16.mxu0 0
      %3662 = vmatpush2.bf16.msra.mxu0 0
      %3663 = vmatprep.subr.bf16.mxu0 0
      %3664 = vmatpush2.bf16.msra.mxu0 0
      %3665 = vmatprep.subr.bf16.mxu0 0
      %3666 = vmatpush2.bf16.msra.mxu0 0
      %3667 = vmatprep.subr.bf16.mxu0 0
      %3668 = vmatpush2.bf16.msra.mxu0 0
      %3669 = vmatprep.subr.bf16.mxu0 0
      %3670 = vmatpush2.bf16.msra.mxu0 0
      %3671 = vmatprep.mubr.bf16.mxu0 0
      %3672 = vmatmul.mubr.bf16.gmra.mxu0 %v2240
      %v3673 = vpop.f32.mrf.mxu0
      %v3674 = vadd.f32 0.0, %v3673
      %v3675 = vpop.f32.mrf.mxu0
      %v3676 = vpop.f32.mrf.mxu0
      %v3677 = vadd.f32 0.0, %v3676
      %v3678 = vpop.f32.mrf.mxu0
      %3679 = vmatprep.mubr.bf16.mxu0 0
      %3680 = vmatmul.mubr.bf16.gmra.mxu0 %v2243
      %v3681 = vpop.f32.mrf.mxu0
      %v3682 = vadd.f32 0.0, %v3681
      %v3683 = vpop.f32.mrf.mxu0
      %v3684 = vpop.f32.mrf.mxu0
      %v3685 = vadd.f32 0.0, %v3684
      %v3686 = vpop.f32.mrf.mxu0
      %3687 = vmatprep.mubr.bf16.mxu0 0
      %3688 = vmatmul.mubr.bf16.gmra.mxu0 %v2246
      %v3689 = vpop.f32.mrf.mxu0
      %v3690 = vadd.f32 0.0, %v3689
      %v3691 = vpop.f32.mrf.mxu0
      %v3692 = vpop.f32.mrf.mxu0
      %v3693 = vadd.f32 0.0, %v3692
      %v3694 = vpop.f32.mrf.mxu0
      %3695 = vmatprep.mubr.bf16.mxu0 0
      %3696 = vmatmul.mubr.bf16.gmra.mxu0 %v2249
      %v3697 = vpop.f32.mrf.mxu0
      %v3698 = vadd.f32 0.0, %v3697
      %v3699 = vpop.f32.mrf.mxu0
      %v3700 = vpop.f32.mrf.mxu0
      %v3701 = vadd.f32 0.0, %v3700
      %v3702 = vpop.f32.mrf.mxu0
      %3703 = vmatprep.mubr.bf16.mxu0 0
      %3704 = vmatmul.mubr.bf16.gmra.mxu0 %v2252
      %v3705 = vpop.f32.mrf.mxu0
      %v3706 = vadd.f32 0.0, %v3705
      %v3707 = vpop.f32.mrf.mxu0
      %v3708 = vpop.f32.mrf.mxu0
      %v3709 = vadd.f32 0.0, %v3708
      %v3710 = vpop.f32.mrf.mxu0
      %3711 = vmatprep.mubr.bf16.mxu0 0
      %3712 = vmatmul.mubr.bf16.gmra.mxu0 %v2255
      %v3713 = vpop.f32.mrf.mxu0
      %v3714 = vadd.f32 0.0, %v3713
      %v3715 = vpop.f32.mrf.mxu0
      %v3716 = vpop.f32.mrf.mxu0
      %v3717 = vadd.f32 0.0, %v3716
      %v3718 = vpop.f32.mrf.mxu0
      %3719 = vmatprep.mubr.bf16.mxu0 0
      %3720 = vmatmul.mubr.bf16.gmra.mxu0 %v2258
      %v3721 = vpop.f32.mrf.mxu0
      %v3722 = vadd.f32 0.0, %v3721
      %v3723 = vpop.f32.mrf.mxu0
      %v3724 = vpop.f32.mrf.mxu0
      %v3725 = vadd.f32 0.0, %v3724
      %v3726 = vpop.f32.mrf.mxu0
      %3727 = vmatprep.mubr.bf16.mxu0 0
      %3728 = vmatmul.mubr.bf16.gmra.mxu0 %v2261
      %v3729 = vpop.f32.mrf.mxu0
      %v3730 = vadd.f32 0.0, %v3729
      %v3731 = vpop.f32.mrf.mxu0
      %v3732 = vpop.f32.mrf.mxu0
      %v3733 = vadd.f32 0.0, %v3732
      %v3734 = vpop.f32.mrf.mxu0
      %3735 = vmatprep.mubr.bf16.mxu0 0
      %3736 = vmatmul.mubr.bf16.gmra.mxu0 %v2264
      %v3737 = vpop.f32.mrf.mxu0
      %v3738 = vadd.f32 0.0, %v3737
      %v3739 = vpop.f32.mrf.mxu0
      %v3740 = vpop.f32.mrf.mxu0
      %v3741 = vadd.f32 0.0, %v3740
      %v3742 = vpop.f32.mrf.mxu0
      %3743 = vmatprep.mubr.bf16.mxu0 0
      %3744 = vmatmul.mubr.bf16.gmra.mxu0 %v2267
      %v3745 = vpop.f32.mrf.mxu0
      %v3746 = vadd.f32 0.0, %v3745
      %v3747 = vpop.f32.mrf.mxu0
      %v3748 = vpop.f32.mrf.mxu0
      %v3749 = vadd.f32 0.0, %v3748
      %v3750 = vpop.f32.mrf.mxu0
      %3751 = vmatprep.mubr.bf16.mxu0 0
      %3752 = vmatmul.mubr.bf16.gmra.mxu0 %v2270
      %v3753 = vpop.f32.mrf.mxu0
      %v3754 = vadd.f32 0.0, %v3753
      %v3755 = vpop.f32.mrf.mxu0
      %v3756 = vpop.f32.mrf.mxu0
      %v3757 = vadd.f32 0.0, %v3756
      %v3758 = vpop.f32.mrf.mxu0
      %3759 = vmatprep.mubr.bf16.mxu0 0
      %3760 = vmatmul.mubr.bf16.gmra.mxu0 %v2273
      %v3761 = vpop.f32.mrf.mxu0
      %v3762 = vadd.f32 0.0, %v3761
      %v3763 = vpop.f32.mrf.mxu0
      %v3764 = vpop.f32.mrf.mxu0
      %v3765 = vadd.f32 0.0, %v3764
      %v3766 = vpop.f32.mrf.mxu0
      %3767 = vmatprep.mubr.bf16.mxu0 0
      %3768 = vmatmul.mubr.bf16.gmra.mxu0 %v2276
      %v3769 = vpop.f32.mrf.mxu0
      %v3770 = vadd.f32 0.0, %v3769
      %v3771 = vpop.f32.mrf.mxu0
      %v3772 = vpop.f32.mrf.mxu0
      %v3773 = vadd.f32 0.0, %v3772
      %v3774 = vpop.f32.mrf.mxu0
      %3775 = vmatprep.mubr.bf16.mxu0 0
      %3776 = vmatmul.mubr.bf16.gmra.mxu0 %v2955
      %v3777 = vpop.f32.mrf.mxu0
      %v3778 = vadd.f32 0.0, %v3777
      %v3779 = vpop.f32.mrf.mxu0
      %v3780 = vpop.f32.mrf.mxu0
      %v3781 = vadd.f32 0.0, %v3780
      %v3782 = vpop.f32.mrf.mxu0
      %3783 = vmatprep.mubr.bf16.mxu0 0
      %3784 = vmatmul.mubr.bf16.gmra.mxu0 %v3634
      %v3785 = vpop.f32.mrf.mxu0
      %v3786 = vadd.f32 0.0, %v3785
      %v3787 = vpop.f32.mrf.mxu0
      %v3788 = vpop.f32.mrf.mxu0
      %v3789 = vadd.f32 0.0, %v3788
      %v3790 = vpop.f32.mrf.mxu0
      %3791 = vmatprep.mubr.bf16.mxu0 0
      %3792 = vmatmul.mubr.bf16.gmra.mxu0 %v3637
      %v3793 = vpop.f32.mrf.mxu0
      %v3794 = vadd.f32 0.0, %v3793
      %v3795 = vpop.f32.mrf.mxu0
      %v3796 = vpop.f32.mrf.mxu0
      %v3797 = vadd.f32 0.0, %v3796
      %v3798 = vpop.f32.mrf.mxu0
      %3799 = vdwg.mxu0
      %v3800 = vadd.f32 %v3574, %v3674
      %v3801 = vadd.f32 %v3575, %v3677
      %v3802 = vadd.f32 %v3576, %v3682
      %v3803 = vadd.f32 %v3577, %v3685
      %v3804 = vadd.f32 %v3578, %v3690
      %v3805 = vadd.f32 %v3579, %v3693
      %v3806 = vadd.f32 %v3580, %v3698
      %v3807 = vadd.f32 %v3581, %v3701
      %v3808 = vadd.f32 %v3582, %v3706
      %v3809 = vadd.f32 %v3583, %v3709
      %v3810 = vadd.f32 %v3584, %v3714
      %v3811 = vadd.f32 %v3585, %v3717
      %v3812 = vadd.f32 %v3586, %v3722
      %v3813 = vadd.f32 %v3587, %v3725
      %v3814 = vadd.f32 %v3588, %v3730
      %v3815 = vadd.f32 %v3589, %v3733
      %v3816 = vadd.f32 %v3590, %v3738
      %v3817 = vadd.f32 %v3591, %v3741
      %v3818 = vadd.f32 %v3592, %v3746
      %v3819 = vadd.f32 %v3593, %v3749
      %v3820 = vadd.f32 %v3594, %v3754
      %v3821 = vadd.f32 %v3595, %v3757
      %v3822 = vadd.f32 %v3596, %v3762
      %v3823 = vadd.f32 %v3597, %v3765
      %v3824 = vadd.f32 %v3598, %v3770
      %v3825 = vadd.f32 %v3599, %v3773
      %v3826 = vadd.f32 %v3600, %v3778
      %v3827 = vadd.f32 %v3601, %v3781
      %v3828 = vadd.f32 %v3602, %v3786
      %v3829 = vadd.f32 %v3603, %v3789
      %v3830 = vadd.f32 %v3604, %v3794
      %v3831 = vadd.f32 %v3605, %v3797
      %v3832 = vld [vmem:[%s278] sm:$0x1]
      %v3834 = vlaneseq
      %v3835 = vshrl.u32 %v3834, 7
      %v3836 = vsub.s32 0, %v3835
      %v3837 = vrot.slane %v3832, %v3836
      %v3839 = vmul.f32 %v3800, %v3837
      %v3840 = vmul.f32 %v3801, %v3837
      %v3841 = vmul.f32 %v3802, %v3837
      %v3842 = vmul.f32 %v3803, %v3837
      %v3843 = vmul.f32 %v3804, %v3837
      %v3844 = vmul.f32 %v3805, %v3837
      %v3845 = vmul.f32 %v3806, %v3837
      %v3846 = vmul.f32 %v3807, %v3837
      %v3847 = vmul.f32 %v3808, %v3837
      %v3848 = vmul.f32 %v3809, %v3837
      %v3849 = vmul.f32 %v3810, %v3837
      %v3850 = vmul.f32 %v3811, %v3837
      %v3851 = vmul.f32 %v3812, %v3837
      %v3852 = vmul.f32 %v3813, %v3837
      %v3853 = vmul.f32 %v3814, %v3837
      %v3854 = vmul.f32 %v3815, %v3837
      %v3855 = vmul.f32 %v3816, %v3837
      %v3856 = vmul.f32 %v3817, %v3837
      %v3857 = vmul.f32 %v3818, %v3837
      %v3858 = vmul.f32 %v3819, %v3837
      %v3859 = vmul.f32 %v3820, %v3837
      %v3860 = vmul.f32 %v3821, %v3837
      %v3861 = vmul.f32 %v3822, %v3837
      %v3862 = vmul.f32 %v3823, %v3837
      %v3863 = vmul.f32 %v3824, %v3837
      %v3864 = vmul.f32 %v3825, %v3837
      %v3865 = vmul.f32 %v3826, %v3837
      %v3866 = vmul.f32 %v3827, %v3837
      %v3867 = vmul.f32 %v3828, %v3837
      %v3868 = vmul.f32 %v3829, %v3837
      %v3869 = vmul.f32 %v3830, %v3837
      %v3870 = vmul.f32 %v3831, %v3837
      %v3871 = vld [vmem:[%s281] sm:$0x1]
      %v3873 = vlaneseq
      %v3874 = vshrl.u32 %v3873, 7
      %v3875 = vsub.s32 0, %v3874
      %v3876 = vrot.slane %v3871, %v3875
      %v3878 = vadd.f32 %v3839, %v3876
      %v3879 = vadd.f32 %v3840, %v3876
      %v3880 = vadd.f32 %v3841, %v3876
      %v3881 = vadd.f32 %v3842, %v3876
      %v3882 = vadd.f32 %v3843, %v3876
      %v3883 = vadd.f32 %v3844, %v3876
      %v3884 = vadd.f32 %v3845, %v3876
      %v3885 = vadd.f32 %v3846, %v3876
      %v3886 = vadd.f32 %v3847, %v3876
      %v3887 = vadd.f32 %v3848, %v3876
      %v3888 = vadd.f32 %v3849, %v3876
      %v3889 = vadd.f32 %v3850, %v3876
      %v3890 = vadd.f32 %v3851, %v3876
      %v3891 = vadd.f32 %v3852, %v3876
      %v3892 = vadd.f32 %v3853, %v3876
      %v3893 = vadd.f32 %v3854, %v3876
      %v3894 = vadd.f32 %v3855, %v3876
      %v3895 = vadd.f32 %v3856, %v3876
      %v3896 = vadd.f32 %v3857, %v3876
      %v3897 = vadd.f32 %v3858, %v3876
      %v3898 = vadd.f32 %v3859, %v3876
      %v3899 = vadd.f32 %v3860, %v3876
      %v3900 = vadd.f32 %v3861, %v3876
      %v3901 = vadd.f32 %v3862, %v3876
      %v3902 = vadd.f32 %v3863, %v3876
      %v3903 = vadd.f32 %v3864, %v3876
      %v3904 = vadd.f32 %v3865, %v3876
      %v3905 = vadd.f32 %v3866, %v3876
      %v3906 = vadd.f32 %v3867, %v3876
      %v3907 = vadd.f32 %v3868, %v3876
      %v3908 = vadd.f32 %v3869, %v3876
      %v3909 = vadd.f32 %v3870, %v3876
      %v3910 = vmul.f32 %v3878, 0.1
      %v3911 = vmul.f32 %v3879, 0.1
      %v3912 = vmul.f32 %v3880, 0.1
      %v3913 = vmul.f32 %v3881, 0.1
      %v3914 = vmul.f32 %v3882, 0.1
      %v3915 = vmul.f32 %v3883, 0.1
      %v3916 = vmul.f32 %v3884, 0.1
      %v3917 = vmul.f32 %v3885, 0.1
      %v3918 = vmul.f32 %v3886, 0.1
      %v3919 = vmul.f32 %v3887, 0.1
      %v3920 = vmul.f32 %v3888, 0.1
      %v3921 = vmul.f32 %v3889, 0.1
      %v3922 = vmul.f32 %v3890, 0.1
      %v3923 = vmul.f32 %v3891, 0.1
      %v3924 = vmul.f32 %v3892, 0.1
      %v3925 = vmul.f32 %v3893, 0.1
      %v3926 = vmul.f32 %v3894, 0.1
      %v3927 = vmul.f32 %v3895, 0.1
      %v3928 = vmul.f32 %v3896, 0.1
      %v3929 = vmul.f32 %v3897, 0.1
      %v3930 = vmul.f32 %v3898, 0.1
      %v3931 = vmul.f32 %v3899, 0.1
      %v3932 = vmul.f32 %v3900, 0.1
      %v3933 = vmul.f32 %v3901, 0.1
      %v3934 = vmul.f32 %v3902, 0.1
      %v3935 = vmul.f32 %v3903, 0.1
      %v3936 = vmul.f32 %v3904, 0.1
      %v3937 = vmul.f32 %v3905, 0.1
      %v3938 = vmul.f32 %v3906, 0.1
      %v3939 = vmul.f32 %v3907, 0.1
      %v3940 = vmul.f32 %v3908, 0.1
      %v3941 = vmul.f32 %v3909, 0.1
      %v3942 = vmax.f32 %v3878, %v3910
      %v3943 = vmax.f32 %v3879, %v3911
      %v3944 = vmax.f32 %v3880, %v3912
      %v3945 = vmax.f32 %v3881, %v3913
      %v3946 = vmax.f32 %v3882, %v3914
      %v3947 = vmax.f32 %v3883, %v3915
      %v3948 = vmax.f32 %v3884, %v3916
      %v3949 = vmax.f32 %v3885, %v3917
      %v3950 = vmax.f32 %v3886, %v3918
      %v3951 = vmax.f32 %v3887, %v3919
      %v3952 = vmax.f32 %v3888, %v3920
      %v3953 = vmax.f32 %v3889, %v3921
      %v3954 = vmax.f32 %v3890, %v3922
      %v3955 = vmax.f32 %v3891, %v3923
      %v3956 = vmax.f32 %v3892, %v3924
      %v3957 = vmax.f32 %v3893, %v3925
      %v3958 = vmax.f32 %v3894, %v3926
      %v3959 = vmax.f32 %v3895, %v3927
      %v3960 = vmax.f32 %v3896, %v3928
      %v3961 = vmax.f32 %v3897, %v3929
      %v3962 = vmax.f32 %v3898, %v3930
      %v3963 = vmax.f32 %v3899, %v3931
      %v3964 = vmax.f32 %v3900, %v3932
      %v3965 = vmax.f32 %v3901, %v3933
      %v3966 = vmax.f32 %v3902, %v3934
      %v3967 = vmax.f32 %v3903, %v3935
      %v3968 = vmax.f32 %v3904, %v3936
      %v3969 = vmax.f32 %v3905, %v3937
      %v3970 = vmax.f32 %v3906, %v3938
      %v3971 = vmax.f32 %v3907, %v3939
      %v3972 = vmax.f32 %v3908, %v3940
      %v3973 = vmax.f32 %v3909, %v3941
      %v3974 = vpack.c.bf16 %v3943, %v3942
      %v3975 = vpack.c.bf16 %v3945, %v3944
      %v3976 = vpack.c.bf16 %v3947, %v3946
      %v3977 = vpack.c.bf16 %v3949, %v3948
      %v3978 = vpack.c.bf16 %v3951, %v3950
      %v3979 = vpack.c.bf16 %v3953, %v3952
      %v3980 = vpack.c.bf16 %v3955, %v3954
      %v3981 = vpack.c.bf16 %v3957, %v3956
      %v3982 = vpack.c.bf16 %v3959, %v3958
      %v3983 = vpack.c.bf16 %v3961, %v3960
      %v3984 = vpack.c.bf16 %v3963, %v3962
      %v3985 = vpack.c.bf16 %v3965, %v3964
      %v3986 = vpack.c.bf16 %v3967, %v3966
      %v3987 = vpack.c.bf16 %v3969, %v3968
      %v3988 = vpack.c.bf16 %v3971, %v3970
      %v3989 = vpack.c.bf16 %v3973, %v3972
      %v4006 = vunpack.c.l.b16 %v3974
      %v4007 = vunpack.c.h.b16 %v3974
      %v4008 = vunpack.c.l.b16 %v3975
      %v4009 = vunpack.c.h.b16 %v3975
      %v4010 = vunpack.c.l.b16 %v3976
      %v4011 = vunpack.c.h.b16 %v3976
      %v4012 = vunpack.c.l.b16 %v3977
      %v4013 = vunpack.c.h.b16 %v3977
      %v4014 = vunpack.c.l.b16 %v3978
      %v4015 = vunpack.c.h.b16 %v3978
      %v4016 = vunpack.c.l.b16 %v3979
      %v4017 = vunpack.c.h.b16 %v3979
      %v4018 = vunpack.c.l.b16 %v3980
      %v4019 = vunpack.c.h.b16 %v3980
      %v4020 = vunpack.c.l.b16 %v3981
      %v4021 = vunpack.c.h.b16 %v3981
      %v4022 = vunpack.c.l.b16 %v3982
      %v4023 = vunpack.c.h.b16 %v3982
      %v4024 = vunpack.c.l.b16 %v3983
      %v4025 = vunpack.c.h.b16 %v3983
      %v4026 = vunpack.c.l.b16 %v3984
      %v4027 = vunpack.c.h.b16 %v3984
      %v4028 = vunpack.c.l.b16 %v3985
      %v4029 = vunpack.c.h.b16 %v3985
      %v4030 = vunpack.c.l.b16 %v3986
      %v4031 = vunpack.c.h.b16 %v3986
      %v4032 = vunpack.c.l.b16 %v3987
      %v4033 = vunpack.c.h.b16 %v3987
      %v4034 = vunpack.c.l.b16 %v3988
      %v4035 = vunpack.c.h.b16 %v3988
      %v4036 = vunpack.c.l.b16 %v3989
      %v4037 = vunpack.c.h.b16 %v3989
      %v4038 = vpack.c.b16 %v4006, %v4006
      %v4039 = vpack.c.b16 %v4007, %v4007
      %v4040 = vpack.c.b16 %v4008, %v4008
      %v4041 = vpack.c.b16 %v4009, %v4009
      %v4042 = vpack.c.b16 %v4010, %v4010
      %v4043 = vpack.c.b16 %v4011, %v4011
      %v4044 = vpack.c.b16 %v4012, %v4012
      %v4045 = vpack.c.b16 %v4013, %v4013
      %v4046 = vpack.c.b16 %v4014, %v4014
      %v4047 = vpack.c.b16 %v4015, %v4015
      %v4048 = vpack.c.b16 %v4016, %v4016
      %v4049 = vpack.c.b16 %v4017, %v4017
      %v4050 = vpack.c.b16 %v4018, %v4018
      %v4051 = vpack.c.b16 %v4019, %v4019
      %v4052 = vpack.c.b16 %v4020, %v4020
      %v4053 = vpack.c.b16 %v4021, %v4021
      %v4054 = vpack.c.b16 %v4022, %v4022
      %v4055 = vpack.c.b16 %v4023, %v4023
      %v4056 = vpack.c.b16 %v4024, %v4024
      %v4057 = vpack.c.b16 %v4025, %v4025
      %v4058 = vpack.c.b16 %v4026, %v4026
      %v4059 = vpack.c.b16 %v4027, %v4027
      %v4060 = vpack.c.b16 %v4028, %v4028
      %v4061 = vpack.c.b16 %v4029, %v4029
      %v4062 = vpack.c.b16 %v4030, %v4030
      %v4063 = vpack.c.b16 %v4031, %v4031
      %v4064 = vpack.c.b16 %v4032, %v4032
      %v4065 = vpack.c.b16 %v4033, %v4033
      %v4066 = vpack.c.b16 %v4034, %v4034
      %v4067 = vpack.c.b16 %v4035, %v4035
      %v4068 = vpack.c.b16 %v4036, %v4036
      %v4069 = vpack.c.b16 %v4037, %v4037
      %vm4102 = vcmask 519168
      %4103 = vst.msk [vmem:[%s289] sm:$0xf] %vm4102, %v4038
      %4104 = vst.msk [vmem:[%s289 + $0x4] sm:$0xf] %vm4102, %v4039
      %4105 = vst.msk [vmem:[%s289 + $0x8] sm:$0xf] %vm4102, %v4040
      %4106 = vst.msk [vmem:[%s289 + $0xc] sm:$0xf] %vm4102, %v4041
      %4107 = vst.msk [vmem:[%s289 + $0x10] sm:$0xf] %vm4102, %v4042
      %4108 = vst.msk [vmem:[%s289 + $0x14] sm:$0xf] %vm4102, %v4043
      %4109 = vst.msk [vmem:[%s289 + $0x18] sm:$0xf] %vm4102, %v4044
      %4110 = vst.msk [vmem:[%s289 + $0x1c] sm:$0xf] %vm4102, %v4045
      %4111 = vst.msk [vmem:[%s289 + $0x20] sm:$0xf] %vm4102, %v4046
      %4112 = vst.msk [vmem:[%s289 + $0x24] sm:$0xf] %vm4102, %v4047
      %4113 = vst.msk [vmem:[%s289 + $0x28] sm:$0xf] %vm4102, %v4048
      %4114 = vst.msk [vmem:[%s289 + $0x2c] sm:$0xf] %vm4102, %v4049
      %4115 = vst.msk [vmem:[%s289 + $0x30] sm:$0xf] %vm4102, %v4050
      %4116 = vst.msk [vmem:[%s289 + $0x34] sm:$0xf] %vm4102, %v4051
      %4117 = vst.msk [vmem:[%s289 + $0x38] sm:$0xf] %vm4102, %v4052
      %4118 = vst.msk [vmem:[%s289 + $0x3c] sm:$0xf] %vm4102, %v4053
      %4119 = vst.msk [vmem:[%s289 + $0x40] sm:$0xf] %vm4102, %v4054
      %4120 = vst.msk [vmem:[%s289 + $0x44] sm:$0xf] %vm4102, %v4055
      %4121 = vst.msk [vmem:[%s289 + $0x48] sm:$0xf] %vm4102, %v4056
      %4122 = vst.msk [vmem:[%s289 + $0x4c] sm:$0xf] %vm4102, %v4057
      %4123 = vst.msk [vmem:[%s289 + $0x50] sm:$0xf] %vm4102, %v4058
      %4124 = vst.msk [vmem:[%s289 + $0x54] sm:$0xf] %vm4102, %v4059
      %4125 = vst.msk [vmem:[%s289 + $0x58] sm:$0xf] %vm4102, %v4060
      %4126 = vst.msk [vmem:[%s289 + $0x5c] sm:$0xf] %vm4102, %v4061
      %4127 = vst.msk [vmem:[%s289 + $0x60] sm:$0xf] %vm4102, %v4062
      %4128 = vst.msk [vmem:[%s289 + $0x64] sm:$0xf] %vm4102, %v4063
      %4129 = vst.msk [vmem:[%s289 + $0x68] sm:$0xf] %vm4102, %v4064
      %4130 = vst.msk [vmem:[%s289 + $0x6c] sm:$0xf] %vm4102, %v4065
      %4131 = vst.msk [vmem:[%s289 + $0x70] sm:$0xf] %vm4102, %v4066
      %4132 = vst.msk [vmem:[%s289 + $0x74] sm:$0xf] %vm4102, %v4067
      %4133 = vst.msk [vmem:[%s289 + $0x78] sm:$0xf] %vm4102, %v4068
      %4134 = vst.msk [vmem:[%s289 + $0x7c] sm:$0xf] %vm4102, %v4069
      %p4135 = scmp.lt.s32.totalorder %s20, 1
      %s4136 = scalar_select %p4135, %s20, 1
      %p4137 = scmp.lt.s32.totalorder %s21, 0
      %s4138 = scalar_select %p4137, %s21, 0
      %s4139 = smul.addr %s4136, 32
      %s4140 = sadd.s32 %s4138, %s4139
      %s4141 = smul.addr %s4140, 4
      %s4142 = scalar_lea.vmem %s5, %s4141
      // Predicated region
      $region41: #{tpu_custom_call.1} parent=39 // pred_check
        %p4143 = pneg %p173
      $region42: #{tpu_custom_call.1} parent=39 // pred_check_branch
        %4145 = sbr.rel (%p4143) target = $region44
      $region43: #{tpu_custom_call.1} parent=39 // pred_region
        _
      $region44: #{tpu_custom_call.1} parent=39 // pred_fallthru
        _
    $region40: #{tpu_custom_call.1} parent=5 // pred_fallthru
      _
    %p4146 = scmp.le.s32.totalorder 2, %s11
    // Predicated region
    $region45: #{tpu_custom_call.1} parent=5 // pred_check
      %p4147 = pneg %p4146
    $region46: #{tpu_custom_call.1} parent=5 // pred_check_branch
      %4149 = sbr.rel (%p4147) target = $region48
    $region47: #{tpu_custom_call.1} parent=5 // pred_region
      %s4150 = ssub.s32 %s11, 2
      // Predicated region
      $region49: #{tpu_custom_call.1} parent=47 // pred_check
        %p4151 = pneg %p179
      $region50: #{tpu_custom_call.1} parent=47 // pred_check_branch
        %4153 = sbr.rel (%p4151) target = $region52
      $region51: #{tpu_custom_call.1} parent=47 // pred_region
        %p4154 = scmp.lt.s32.totalorder %s22, 1
        %s4155 = scalar_select %p4154, %s22, 1
        %p4156 = scmp.lt.s32.totalorder %s23, 0
        %s4157 = scalar_select %p4156, %s23, 0
        %s4158 = smul.addr %s4155, 32
        %s4159 = sadd.s32 %s4157, %s4158
        %s4160 = smul.addr %s4159, 4
        %s4161 = scalar_lea.vmem %s5, %s4160
      $region52: #{tpu_custom_call.1} parent=47 // pred_fallthru
        _
    $region48: #{tpu_custom_call.1} parent=5 // pred_fallthru
      _
  $region6: #{tpu_custom_call.1} parent=0 // loop_footer
    %s15 = sadd.s32 1, %s11
  $region7: #{tpu_custom_call.1} parent=0 // loop_footer_branch
    %10 = sbr.rel target = $region3
  $region8: #{tpu_custom_call.1} parent=0 // loop_exit
    _

</llo_original>
